<compile_context>
chip_gen: v7x
topology: tpu7x:2x2x1
jax: 0.10.0
libtpu: 0.0.40
codegen_flags: <defaults>
</compile_context>

<pallas_src>
import math

import jax
import jax.numpy as jnp
from jax.experimental import pallas as pl
from jax.experimental.pallas import tpu as pltpu


def _layer_norm(x, gamma, beta, eps=1e-5):
    """LayerNorm over the last axis, computed in f32.  x: (n, C); gamma/beta: (1, C)."""
    mean = jnp.mean(x, axis=-1, keepdims=True)
    xc = x - mean
    var = jnp.mean(xc * xc, axis=-1, keepdims=True)
    return xc * jax.lax.rsqrt(var + eps) * gamma + beta


def _gelu(x):
    # TODO(synk): PyTorch nn.GELU() defaults to exact erf-GELU; tanh approximation used
    # here (max divergence ~1e-3, inside this kernel's bf16-matmul tolerance).
    c = math.sqrt(2.0 / math.pi)
    return 0.5 * x * (1.0 + jnp.tanh(c * (x + 0.044715 * x * x * x)))


def _make_kernel(num_heads, head_dim, channels):
    H, d, C = num_heads, head_dim, channels
    bf16, f32 = jnp.bfloat16, jnp.float32

    def kernel(x_q_ref, x_kv_ref,
               ln1_g_ref, ln1_b_ref,
               w_qkv_ref, b_qkv_ref,
               wo_ref, bo_ref,
               ln2_g_ref, ln2_b_ref,
               w1_ref, b1_ref, w2_ref, b2_ref,
               o_ref,
               q_cache, kT_cache, v_cache, m_sc, l_sc, acc_sc, attn_sc):
        qi = pl.program_id(1)
        ki = pl.program_id(2)

        # ---- qi == 0 sweep: project this token tile ONCE per batch.
        # Fused LN + single (t,C)x(C,3C) QKV matmul (scale pre-folded into Q columns),
        # then cache per-head Q / K^T / V in VMEM for every later query tile.
        @pl.when(qi == 0)
        def _fill_cache():
            x_kv = x_kv_ref[0].astype(f32)                                # (t, C)
            ln = _layer_norm(x_kv, ln1_g_ref[...], ln1_b_ref[...])
            qkv = jnp.dot(ln.astype(bf16), w_qkv_ref[...],
                          preferred_element_type=f32) + b_qkv_ref[...]    # (t, 3C)
            base = ki * H
            for h in range(H):
                q_cache[base + h] = qkv[:, h * d:(h + 1) * d].astype(bf16)
                # K stored pre-transposed -> hot loop does plain A@B, no XLU transpose.
                kT_cache[base + h] = jnp.transpose(
                    qkv[:, C + h * d:C + (h + 1) * d]).astype(bf16)        # (d, t)
                v_cache[base + h] = qkv[:, 2 * C + h * d:
                                        2 * C + (h + 1) * d].astype(bf16)  # (t, d)

        # ---- ki == 0: reset online-softmax state for this query tile.
        @pl.when(ki == 0)
        def _init_state():
            m_sc[...] = jnp.full(m_sc.shape, -jnp.inf, f32)
            l_sc[...] = jnp.zeros(l_sc.shape, f32)
            acc_sc[...] = jnp.zeros(acc_sc.shape, f32)

        # ---- every step: online-softmax update from the VMEM caches.
        # fori_loop (not unrolled) bounds the per-head (t, t) f32 s/p live ranges.
        q_base = qi * H
        k_base = ki * H

        def head_body(h, carry):
            s = jnp.dot(q_cache[q_base + h], kT_cache[k_base + h],
                        preferred_element_type=f32)                        # (t, t)
            m_prev = m_sc[h]                                               # (t, 1)
            m_new = jnp.maximum(m_prev, jnp.max(s, axis=-1, keepdims=True))
            alpha = jnp.exp(m_prev - m_new)
            p = jnp.exp(s - m_new)
            l_sc[h] = alpha * l_sc[h] + jnp.sum(p, axis=-1, keepdims=True)
            acc_sc[h] = alpha * acc_sc[h] + jnp.dot(
                p.astype(bf16), v_cache[k_base + h], preferred_element_type=f32)
            m_sc[h] = m_new
            return carry

        jax.lax.fori_loop(0, H, head_body, 0)

        # ---- last KV step: normalize heads, single fused out-proj, residual, LN,
        #      MLP (Linear -> GELU -> Linear), residual, store.
        @pl.when(ki == pl.num_programs(2) - 1)
        def _epilogue():
            x_q = x_q_ref[0].astype(f32)                                   # (t, C)
            for h in range(H):
                inv_l = pl.reciprocal(l_sc[h], approx=False)               # (t, 1)
                attn_sc[:, h * d:(h + 1) * d] = acc_sc[h] * inv_l
            # One contraction-128 MXU op instead of 4 quarter-contraction dots.
            attn = jnp.dot(attn_sc[...].astype(bf16), wo_ref[...],
                           preferred_element_type=f32) + bo_ref[...]
            res1 = attn + x_q
            ln2 = _layer_norm(res1, ln2_g_ref[...], ln2_b_ref[...])
            h1 = jnp.dot(ln2.astype(bf16), w1_ref[...],
                         preferred_element_type=f32) + b1_ref[...]
            h2 = jnp.dot(_gelu(h1).astype(bf16), w2_ref[...],
                         preferred_element_type=f32) + b2_ref[...]
            o_ref[0, :, :] = (h2 + res1).astype(o_ref.dtype)

    return kernel


def self_attention_forward(x, params, *, block_size=128, vmem_limit_bytes=None):
    """Forward pass of the PyTorch SelfAttention(channels, size) module.

    x:      (B, C, size, size) float32
    params: dict of PyTorch-layout parameters (see make_params).
    Returns (B, C, size, size) float32.
    """
    B, C, hs, ws = x.shape
    S = hs * ws
    H = 4
    assert C % H == 0, "channels must be divisible by the 4 attention heads"
    d = C // H

    # NOTE(perf): block_size=256 is worth sweeping on v6e/v7x (256-wide MXU) as long
    # as B*(S//t) >= 2 so both v7x TensorCores receive parallel work; 128 is the safe
    # default (keeps per-head (t, t) f32 score/p tiles well inside the 64-vreg file).
    t = min(block_size, S)
    assert S % t == 0, "size*size must be divisible by the block size"
    nq = S // t
    nk = S // t

    f32, bf16 = jnp.float32, jnp.bfloat16

    # (B, C, size, size) -> (B, S, C): channels on the lane axis.  bf16 input halves
    # the HBM read bytes; LN / softmax statistics stay f32 inside the kernel.
    x_seq = jnp.transpose(x.reshape(B, C, S), (0, 2, 1)).astype(bf16)

    scale = 1.0 / math.sqrt(d)

    # Fused QKV projection: ln(x) @ in_proj_weight.T -> (t, 3C) = [q | k | v].
    # The 1/sqrt(head_dim) attention scale is folded into the Q columns (free, host-side).
    col_scale = jnp.concatenate([jnp.full((C,), scale, f32), jnp.ones((2 * C,), f32)])
    w_qkv = (jnp.transpose(params["in_proj_weight"]).astype(f32)
             * col_scale[None, :]).astype(bf16)                            # (C, 3C)
    b_qkv = (params["in_proj_bias"].astype(f32) * col_scale).reshape(1, 3 * C)

    wo = jnp.transpose(params["out_proj_weight"]).astype(bf16)             # (C, C)
    bo = params["out_proj_bias"].reshape(1, C).astype(f32)

    ln1_g = params["ln1_gamma"].reshape(1, C).astype(f32)
    ln1_b = params["ln1_beta"].reshape(1, C).astype(f32)
    ln2_g = params["ln2_gamma"].reshape(1, C).astype(f32)
    ln2_b = params["ln2_beta"].reshape(1, C).astype(f32)

    w1 = jnp.transpose(params["fc1_weight"]).astype(bf16)                  # (C, C)
    b1 = params["fc1_bias"].reshape(1, C).astype(f32)
    w2 = jnp.transpose(params["fc2_weight"]).astype(bf16)                  # (C, C)
    b2 = params["fc2_bias"].reshape(1, C).astype(f32)

    # ---- VMEM limit: actual buffer bytes + headroom (don't over-reserve on v7x's 64 MiB).
    if vmem_limit_bytes is None:
        pad_lane = lambda n: ((n + 127) // 128) * 128
        cache_bytes = (nq * H * t * pad_lane(d) * 2         # Q cache (bf16)
                       + nk * H * t * pad_lane(d) * 2       # V cache (bf16)
                       + nk * H * d * pad_lane(t) * 2)      # K^T cache (bf16)
        state_bytes = (2 * H * t * pad_lane(1) + H * t * pad_lane(d) + t * C) * 4
        weight_bytes = 2 * 2 * (3 * C * C + 3 * C * C)      # bf16 weights, double-buffered
        io_bytes = 2 * (2 * t * C * 2 + t * C * 4)          # x tiles (bf16) + out tile (f32)
        vmem_limit_bytes = min(cache_bytes + state_bytes + weight_bytes
                               + io_bytes + (8 << 20), 64 << 20)

    kernel = _make_kernel(H, d, C)
    grid = (B, nq, nk)

    def _const(shape):
        # Constant block index -> weight stays resident in VMEM across the grid.
        return pl.BlockSpec(shape, lambda b, qi, ki: (0,) * len(shape))

    def _kv_index(b, qi, ki):
        # KV tiles are only consumed during the qi == 0 cache-fill sweep; afterwards
        # pin block 0 so Pallas stops re-DMA-ing the KV tiles for every query tile.
        return (b, jnp.where(qi == 0, ki, 0), 0)

    in_specs = [
        pl.BlockSpec((1, t, C), lambda b, qi, ki: (b, qi, 0)),    # x (query / residual tile)
        pl.BlockSpec((1, t, C), _kv_index),                       # x (KV tile, fill only)
        _const((1, C)), _const((1, C)),                           # ln1 gamma / beta
        _const((C, 3 * C)), _const((1, 3 * C)),                   # fused W_qkv / b_qkv
        _const((C, C)), _const((1, C)),                           # Wo / bo
        _const((1, C)), _const((1, C)),                           # ln2 gamma / beta
        _const((C, C)), _const((1, C)),                           # W1 / b1
        _const((C, C)), _const((1, C)),                           # W2 / b2
    ]
    out_spec = pl.BlockSpec((1, t, C), lambda b, qi, ki: (b, qi, 0))

    out_seq = pl.pallas_call(
        kernel,
        out_shape=jax.ShapeDtypeStruct((B, S, C), f32),
        grid_spec=pltpu.PrefetchScalarGridSpec(
            num_scalar_prefetch=0,
            grid=grid,
            in_specs=in_specs,
            out_specs=out_spec,
            scratch_shapes=[
                pltpu.VMEM((nq * H, t, d), bf16),     # cached Q (scale pre-folded)
                pltpu.VMEM((nk * H, d, t), bf16),     # cached K^T (pre-transposed)
                pltpu.VMEM((nk * H, t, d), bf16),     # cached V
                pltpu.VMEM((H, t, 1), jnp.float32),   # online-softmax running max m
                pltpu.VMEM((H, t, 1), jnp.float32),   # online-softmax running sum l
                pltpu.VMEM((H, t, d), jnp.float32),   # running P@V accumulator
                pltpu.VMEM((t, C), jnp.float32),      # assembled normalized heads
            ]),
        compiler_params=pltpu.CompilerParams(
            # Batch is megacore-parallel; qi/ki must be "arbitrary" because the K/V
            # cache filled on the qi == 0 sweep is reused by later query tiles.
            dimension_semantics=("parallel", "arbitrary", "arbitrary"),
            vmem_limit_bytes=int(vmem_limit_bytes)),
    )(x_seq, x_seq,
      ln1_g, ln1_b, w_qkv, b_qkv, wo, bo,
      ln2_g, ln2_b, w1, b1, w2, b2)

    # (B, S, C) -> (B, C, size, size)
    return jnp.transpose(out_seq, (0, 2, 1)).reshape(B, C, hs, ws).astype(x.dtype)


def make_params(key, channels):
    """Deterministic parameters in PyTorch layout (nn.MultiheadAttention / nn.Linear)."""
    C = channels
    ks = jax.random.split(key, 8)
    w = lambda k, shape: 0.05 * jax.random.normal(k, shape, jnp.float32)
    return dict(
        ln1_gamma=jnp.ones((C,), jnp.float32),
        ln1_beta=jnp.zeros((C,), jnp.float32),
        in_proj_weight=w(ks[0], (3 * C, C)),
        in_proj_bias=w(ks[1], (3 * C,)),
        out_proj_weight=w(ks[2], (C, C)),
        out_proj_bias=w(ks[3], (C,)),
        ln2_gamma=jnp.ones((C,), jnp.float32),
        ln2_beta=jnp.zeros((C,), jnp.float32),
        fc1_weight=w(ks[4], (C, C)),
        fc1_bias=w(ks[5], (C,)),
        fc2_weight=w(ks[6], (C, C)),
        fc2_bias=w(ks[7], (C,)),
    )


if __name__ == "__main__":
    B, C, size = 2, 128, 16           # S = 256, 4 heads, head_dim = 32
    key = jax.random.PRNGKey(0)
    kx, kp = jax.random.split(key)
    x = jax.random.normal(kx, (B, C, size, size), jnp.float32)
    params = make_params(kp, C)

    y = self_attention_forward(x, params)
    jax.block_until_ready(y)

    assert y.shape == (B, C, size, size)
    assert bool(jnp.all(jnp.isfinite(y)))
    print("KERNEL_OK")
</pallas_src>

<mosaic_0001>
module attributes {stable_mosaic.version = 11 : i64} {
  func.func @kernel(%arg0: i32, %arg1: i32, %arg2: i32, %arg3: memref<1x128x128xbf16, #tpu.memory_space<vmem>>, %arg4: memref<1x128x128xbf16, #tpu.memory_space<vmem>>, %arg5: memref<1x128xf32, #tpu.memory_space<vmem>>, %arg6: memref<1x128xf32, #tpu.memory_space<vmem>>, %arg7: memref<128x384xbf16, #tpu.memory_space<vmem>>, %arg8: memref<1x384xf32, #tpu.memory_space<vmem>>, %arg9: memref<128x128xbf16, #tpu.memory_space<vmem>>, %arg10: memref<1x128xf32, #tpu.memory_space<vmem>>, %arg11: memref<1x128xf32, #tpu.memory_space<vmem>>, %arg12: memref<1x128xf32, #tpu.memory_space<vmem>>, %arg13: memref<128x128xbf16, #tpu.memory_space<vmem>>, %arg14: memref<1x128xf32, #tpu.memory_space<vmem>>, %arg15: memref<128x128xbf16, #tpu.memory_space<vmem>>, %arg16: memref<1x128xf32, #tpu.memory_space<vmem>>, %arg17: memref<1x128x128xf32, #tpu.memory_space<vmem>>, %arg18: memref<8x128x32xbf16, #tpu.memory_space<vmem>>, %arg19: memref<8x32x128xbf16, #tpu.memory_space<vmem>>, %arg20: memref<8x128x32xbf16, #tpu.memory_space<vmem>>, %arg21: memref<4x128x1xf32, #tpu.memory_space<vmem>>, %arg22: memref<4x128x1xf32, #tpu.memory_space<vmem>>, %arg23: memref<4x128x32xf32, #tpu.memory_space<vmem>>, %arg24: memref<128x128xf32, #tpu.memory_space<vmem>>) attributes {dimension_semantics = [#tpu.dimension_semantics<parallel>, #tpu.dimension_semantics<arbitrary>, #tpu.dimension_semantics<arbitrary>], iteration_bounds = array<i64: 2, 2, 2>, scalar_prefetch = 0 : i64, scratch_operands = 7 : i64, tpu.core_type = #tpu.core_type<tc>, window_params = [{transform_indices = @transform_0, window_bounds = array<i64: 1, 128, 128>}, {transform_indices = @transform_1, window_bounds = array<i64: 1, 128, 128>}, {pipeline_mode = #tpu.pipeline_mode<synchronous>, transform_indices = @transform_2, window_bounds = array<i64: 1, 128>}, {pipeline_mode = #tpu.pipeline_mode<synchronous>, transform_indices = @transform_3, window_bounds = array<i64: 1, 128>}, {pipeline_mode = #tpu.pipeline_mode<synchronous>, transform_indices = @transform_4, window_bounds = array<i64: 128, 384>}, {pipeline_mode = #tpu.pipeline_mode<synchronous>, transform_indices = @transform_5, window_bounds = array<i64: 1, 384>}, {pipeline_mode = #tpu.pipeline_mode<synchronous>, transform_indices = @transform_6, window_bounds = array<i64: 128, 128>}, {pipeline_mode = #tpu.pipeline_mode<synchronous>, transform_indices = @transform_7, window_bounds = array<i64: 1, 128>}, {pipeline_mode = #tpu.pipeline_mode<synchronous>, transform_indices = @transform_8, window_bounds = array<i64: 1, 128>}, {pipeline_mode = #tpu.pipeline_mode<synchronous>, transform_indices = @transform_9, window_bounds = array<i64: 1, 128>}, {pipeline_mode = #tpu.pipeline_mode<synchronous>, transform_indices = @transform_10, window_bounds = array<i64: 128, 128>}, {pipeline_mode = #tpu.pipeline_mode<synchronous>, transform_indices = @transform_11, window_bounds = array<i64: 1, 128>}, {pipeline_mode = #tpu.pipeline_mode<synchronous>, transform_indices = @transform_12, window_bounds = array<i64: 128, 128>}, {pipeline_mode = #tpu.pipeline_mode<synchronous>, transform_indices = @transform_13, window_bounds = array<i64: 1, 128>}, {transform_indices = @transform_14, window_bounds = array<i64: 1, 128, 128>}]} {
    %c0_i32 = arith.constant 0 : i32
    %0 = arith.cmpi eq, %arg1, %c0_i32 : i32
    %1 = arith.extui %0 : i1 to i32
    %c0_i32_0 = arith.constant 0 : i32
    %2 = arith.cmpi ne, %1, %c0_i32_0 : i32
    scf.if %2 {
      %c0 = arith.constant 0 : index
      %c0_9 = arith.constant 0 : index
      %c0_10 = arith.constant 0 : index
      %12 = vector.load %arg4[%c0, %c0_9, %c0_10] : memref<1x128x128xbf16, #tpu.memory_space<vmem>>, vector<1x128x128xbf16>
      %13 = vector.shape_cast %12 : vector<1x128x128xbf16> to vector<128x128xbf16>
      %14 = arith.extf %13 : vector<128x128xbf16> to vector<128x128xf32>
      %c0_11 = arith.constant 0 : index
      %c0_12 = arith.constant 0 : index
      %15 = vector.load %arg5[%c0_11, %c0_12] : memref<1x128xf32, #tpu.memory_space<vmem>>, vector<1x128xf32>
      %c0_13 = arith.constant 0 : index
      %c0_14 = arith.constant 0 : index
      %16 = vector.load %arg6[%c0_13, %c0_14] : memref<1x128xf32, #tpu.memory_space<vmem>>, vector<1x128xf32>
      %cst = arith.constant dense<0.000000e+00> : vector<128xf32>
      %17 = vector.multi_reduction <add>, %14, %cst [1] : vector<128x128xf32> to vector<128xf32>
      %18 = vector.shape_cast %17 : vector<128xf32> to vector<128x1xf32>
      %cst_15 = arith.constant 1.280000e+02 : f32
      %19 = vector.broadcast %cst_15 : f32 to vector<128x1xf32>
      %20 = arith.divf %18, %19 : vector<128x1xf32>
      %21 = vector.broadcast %20 : vector<128x1xf32> to vector<128x128xf32>
      %22 = arith.subf %14, %21 : vector<128x128xf32>
      %23 = arith.mulf %22, %22 : vector<128x128xf32>
      %cst_16 = arith.constant dense<0.000000e+00> : vector<128xf32>
      %24 = vector.multi_reduction <add>, %23, %cst_16 [1] : vector<128x128xf32> to vector<128xf32>
      %25 = vector.shape_cast %24 : vector<128xf32> to vector<128x1xf32>
      %cst_17 = arith.constant 1.280000e+02 : f32
      %26 = vector.broadcast %cst_17 : f32 to vector<128x1xf32>
      %27 = arith.divf %25, %26 : vector<128x1xf32>
      %cst_18 = arith.constant 9.99999974E-6 : f32
      %28 = vector.broadcast %cst_18 : f32 to vector<128x1xf32>
      %29 = arith.addf %27, %28 : vector<128x1xf32>
      %30 = math.rsqrt %29 : vector<128x1xf32>
      %31 = vector.broadcast %30 : vector<128x1xf32> to vector<128x128xf32>
      %32 = arith.mulf %22, %31 : vector<128x128xf32>
      %33 = vector.broadcast %15 : vector<1x128xf32> to vector<128x128xf32>
      %34 = arith.mulf %32, %33 : vector<128x128xf32>
      %35 = vector.broadcast %16 : vector<1x128xf32> to vector<128x128xf32>
      %36 = arith.addf %34, %35 : vector<128x128xf32>
      %37 = arith.truncf %36 : vector<128x128xf32> to vector<128x128xbf16>
      %c0_19 = arith.constant 0 : index
      %c0_20 = arith.constant 0 : index
      %38 = vector.load %arg7[%c0_19, %c0_20] : memref<128x384xbf16, #tpu.memory_space<vmem>>, vector<128x384xbf16>
      %cst_21 = arith.constant dense<0.000000e+00> : vector<128x384xf32>
      %39 = tpu.matmul %37, %38, %cst_21 {dimension_numbers = #tpu.dot_dimension_numbers<[1], [0], [0], [1], [0, 0, 1, 1], [], []>} : vector<128x128xbf16>, vector<128x384xbf16>, vector<128x384xf32> -> vector<128x384xf32>
      %c0_22 = arith.constant 0 : index
      %c0_23 = arith.constant 0 : index
      %40 = vector.load %arg8[%c0_22, %c0_23] : memref<1x384xf32, #tpu.memory_space<vmem>>, vector<1x384xf32>
      %41 = vector.broadcast %40 : vector<1x384xf32> to vector<128x384xf32>
      %42 = arith.addf %39, %41 : vector<128x384xf32>
      %c4_i32_24 = arith.constant 4 : i32
      %43 = arith.muli %arg2, %c4_i32_24 : i32
      %44 = vector.extract_strided_slice %42 {offsets = [0, 0], sizes = [128, 32], strides = [1, 1]} : vector<128x384xf32> to vector<128x32xf32>
      %45 = arith.truncf %44 : vector<128x32xf32> to vector<128x32xbf16>
      %c0_i32_25 = arith.constant 0 : i32
      %46 = arith.addi %43, %c0_i32_25 : i32
      %47 = arith.index_cast %46 : i32 to index
      %c0_26 = arith.constant 0 : index
      %c0_27 = arith.constant 0 : index
      %48 = vector.load %arg18[%47, %c0_26, %c0_27] : memref<8x128x32xbf16, #tpu.memory_space<vmem>>, vector<1x128x32xbf16>
      %49 = vector.shape_cast %48 : vector<1x128x32xbf16> to vector<128x32xbf16>
      %50 = vector.shape_cast %45 : vector<128x32xbf16> to vector<1x128x32xbf16>
      tpu.vector_store %arg18[%47, %c0_26, %c0_27], %50 {strides = array<i32>} : memref<8x128x32xbf16, #tpu.memory_space<vmem>>, vector<1x128x32xbf16>,
      %51 = vector.extract_strided_slice %42 {offsets = [0, 128], sizes = [128, 32], strides = [1, 1]} : vector<128x384xf32> to vector<128x32xf32>
      %52 = tpu.transpose %51, [1, 0] : vector<128x32xf32> -> vector<32x128xf32>
      %53 = arith.truncf %52 : vector<32x128xf32> to vector<32x128xbf16>
      %c0_i32_28 = arith.constant 0 : i32
      %54 = arith.addi %43, %c0_i32_28 : i32
      %55 = arith.index_cast %54 : i32 to index
      %c0_29 = arith.constant 0 : index
      %c0_30 = arith.constant 0 : index
      %56 = vector.load %arg19[%55, %c0_29, %c0_30] : memref<8x32x128xbf16, #tpu.memory_space<vmem>>, vector<1x32x128xbf16>
      %57 = vector.shape_cast %56 : vector<1x32x128xbf16> to vector<32x128xbf16>
      %58 = vector.shape_cast %53 : vector<32x128xbf16> to vector<1x32x128xbf16>
      tpu.vector_store %arg19[%55, %c0_29, %c0_30], %58 {strides = array<i32>} : memref<8x32x128xbf16, #tpu.memory_space<vmem>>, vector<1x32x128xbf16>,
      %59 = vector.extract_strided_slice %42 {offsets = [0, 256], sizes = [128, 32], strides = [1, 1]} : vector<128x384xf32> to vector<128x32xf32>
      %60 = arith.truncf %59 : vector<128x32xf32> to vector<128x32xbf16>
      %c0_i32_31 = arith.constant 0 : i32
      %61 = arith.addi %43, %c0_i32_31 : i32
      %62 = arith.index_cast %61 : i32 to index
      %c0_32 = arith.constant 0 : index
      %c0_33 = arith.constant 0 : index
      %63 = vector.load %arg20[%62, %c0_32, %c0_33] : memref<8x128x32xbf16, #tpu.memory_space<vmem>>, vector<1x128x32xbf16>
      %64 = vector.shape_cast %63 : vector<1x128x32xbf16> to vector<128x32xbf16>
      %65 = vector.shape_cast %60 : vector<128x32xbf16> to vector<1x128x32xbf16>
      tpu.vector_store %arg20[%62, %c0_32, %c0_33], %65 {strides = array<i32>} : memref<8x128x32xbf16, #tpu.memory_space<vmem>>, vector<1x128x32xbf16>,
      %66 = vector.extract_strided_slice %42 {offsets = [0, 32], sizes = [128, 32], strides = [1, 1]} : vector<128x384xf32> to vector<128x32xf32>
      %67 = arith.truncf %66 : vector<128x32xf32> to vector<128x32xbf16>
      %c1_i32_34 = arith.constant 1 : i32
      %68 = arith.addi %43, %c1_i32_34 : i32
      %69 = arith.index_cast %68 : i32 to index
      %c0_35 = arith.constant 0 : index
      %c0_36 = arith.constant 0 : index
      %70 = vector.load %arg18[%69, %c0_35, %c0_36] : memref<8x128x32xbf16, #tpu.memory_space<vmem>>, vector<1x128x32xbf16>
      %71 = vector.shape_cast %70 : vector<1x128x32xbf16> to vector<128x32xbf16>
      %72 = vector.shape_cast %67 : vector<128x32xbf16> to vector<1x128x32xbf16>
      tpu.vector_store %arg18[%69, %c0_35, %c0_36], %72 {strides = array<i32>} : memref<8x128x32xbf16, #tpu.memory_space<vmem>>, vector<1x128x32xbf16>,
      %73 = vector.extract_strided_slice %42 {offsets = [0, 160], sizes = [128, 32], strides = [1, 1]} : vector<128x384xf32> to vector<128x32xf32>
      %74 = tpu.transpose %73, [1, 0] : vector<128x32xf32> -> vector<32x128xf32>
      %75 = arith.truncf %74 : vector<32x128xf32> to vector<32x128xbf16>
      %c1_i32_37 = arith.constant 1 : i32
      %76 = arith.addi %43, %c1_i32_37 : i32
      %77 = arith.index_cast %76 : i32 to index
      %c0_38 = arith.constant 0 : index
      %c0_39 = arith.constant 0 : index
      %78 = vector.load %arg19[%77, %c0_38, %c0_39] : memref<8x32x128xbf16, #tpu.memory_space<vmem>>, vector<1x32x128xbf16>
      %79 = vector.shape_cast %78 : vector<1x32x128xbf16> to vector<32x128xbf16>
      %80 = vector.shape_cast %75 : vector<32x128xbf16> to vector<1x32x128xbf16>
      tpu.vector_store %arg19[%77, %c0_38, %c0_39], %80 {strides = array<i32>} : memref<8x32x128xbf16, #tpu.memory_space<vmem>>, vector<1x32x128xbf16>,
      %81 = vector.extract_strided_slice %42 {offsets = [0, 288], sizes = [128, 32], strides = [1, 1]} : vector<128x384xf32> to vector<128x32xf32>
      %82 = arith.truncf %81 : vector<128x32xf32> to vector<128x32xbf16>
      %c1_i32_40 = arith.constant 1 : i32
      %83 = arith.addi %43, %c1_i32_40 : i32
      %84 = arith.index_cast %83 : i32 to index
      %c0_41 = arith.constant 0 : index
      %c0_42 = arith.constant 0 : index
      %85 = vector.load %arg20[%84, %c0_41, %c0_42] : memref<8x128x32xbf16, #tpu.memory_space<vmem>>, vector<1x128x32xbf16>
      %86 = vector.shape_cast %85 : vector<1x128x32xbf16> to vector<128x32xbf16>
      %87 = vector.shape_cast %82 : vector<128x32xbf16> to vector<1x128x32xbf16>
      tpu.vector_store %arg20[%84, %c0_41, %c0_42], %87 {strides = array<i32>} : memref<8x128x32xbf16, #tpu.memory_space<vmem>>, vector<1x128x32xbf16>,
      %88 = vector.extract_strided_slice %42 {offsets = [0, 64], sizes = [128, 32], strides = [1, 1]} : vector<128x384xf32> to vector<128x32xf32>
      %89 = arith.truncf %88 : vector<128x32xf32> to vector<128x32xbf16>
      %c2_i32 = arith.constant 2 : i32
      %90 = arith.addi %43, %c2_i32 : i32
      %91 = arith.index_cast %90 : i32 to index
      %c0_43 = arith.constant 0 : index
      %c0_44 = arith.constant 0 : index
      %92 = vector.load %arg18[%91, %c0_43, %c0_44] : memref<8x128x32xbf16, #tpu.memory_space<vmem>>, vector<1x128x32xbf16>
      %93 = vector.shape_cast %92 : vector<1x128x32xbf16> to vector<128x32xbf16>
      %94 = vector.shape_cast %89 : vector<128x32xbf16> to vector<1x128x32xbf16>
      tpu.vector_store %arg18[%91, %c0_43, %c0_44], %94 {strides = array<i32>} : memref<8x128x32xbf16, #tpu.memory_space<vmem>>, vector<1x128x32xbf16>,
      %95 = vector.extract_strided_slice %42 {offsets = [0, 192], sizes = [128, 32], strides = [1, 1]} : vector<128x384xf32> to vector<128x32xf32>
      %96 = tpu.transpose %95, [1, 0] : vector<128x32xf32> -> vector<32x128xf32>
      %97 = arith.truncf %96 : vector<32x128xf32> to vector<32x128xbf16>
      %c2_i32_45 = arith.constant 2 : i32
      %98 = arith.addi %43, %c2_i32_45 : i32
      %99 = arith.index_cast %98 : i32 to index
      %c0_46 = arith.constant 0 : index
      %c0_47 = arith.constant 0 : index
      %100 = vector.load %arg19[%99, %c0_46, %c0_47] : memref<8x32x128xbf16, #tpu.memory_space<vmem>>, vector<1x32x128xbf16>
      %101 = vector.shape_cast %100 : vector<1x32x128xbf16> to vector<32x128xbf16>
      %102 = vector.shape_cast %97 : vector<32x128xbf16> to vector<1x32x128xbf16>
      tpu.vector_store %arg19[%99, %c0_46, %c0_47], %102 {strides = array<i32>} : memref<8x32x128xbf16, #tpu.memory_space<vmem>>, vector<1x32x128xbf16>,
      %103 = vector.extract_strided_slice %42 {offsets = [0, 320], sizes = [128, 32], strides = [1, 1]} : vector<128x384xf32> to vector<128x32xf32>
      %104 = arith.truncf %103 : vector<128x32xf32> to vector<128x32xbf16>
      %c2_i32_48 = arith.constant 2 : i32
      %105 = arith.addi %43, %c2_i32_48 : i32
      %106 = arith.index_cast %105 : i32 to index
      %c0_49 = arith.constant 0 : index
      %c0_50 = arith.constant 0 : index
      %107 = vector.load %arg20[%106, %c0_49, %c0_50] : memref<8x128x32xbf16, #tpu.memory_space<vmem>>, vector<1x128x32xbf16>
      %108 = vector.shape_cast %107 : vector<1x128x32xbf16> to vector<128x32xbf16>
      %109 = vector.shape_cast %104 : vector<128x32xbf16> to vector<1x128x32xbf16>
      tpu.vector_store %arg20[%106, %c0_49, %c0_50], %109 {strides = array<i32>} : memref<8x128x32xbf16, #tpu.memory_space<vmem>>, vector<1x128x32xbf16>,
      %110 = vector.extract_strided_slice %42 {offsets = [0, 96], sizes = [128, 32], strides = [1, 1]} : vector<128x384xf32> to vector<128x32xf32>
      %111 = arith.truncf %110 : vector<128x32xf32> to vector<128x32xbf16>
      %c3_i32 = arith.constant 3 : i32
      %112 = arith.addi %43, %c3_i32 : i32
      %113 = arith.index_cast %112 : i32 to index
      %c0_51 = arith.constant 0 : index
      %c0_52 = arith.constant 0 : index
      %114 = vector.load %arg18[%113, %c0_51, %c0_52] : memref<8x128x32xbf16, #tpu.memory_space<vmem>>, vector<1x128x32xbf16>
      %115 = vector.shape_cast %114 : vector<1x128x32xbf16> to vector<128x32xbf16>
      %116 = vector.shape_cast %111 : vector<128x32xbf16> to vector<1x128x32xbf16>
      tpu.vector_store %arg18[%113, %c0_51, %c0_52], %116 {strides = array<i32>} : memref<8x128x32xbf16, #tpu.memory_space<vmem>>, vector<1x128x32xbf16>,
      %117 = vector.extract_strided_slice %42 {offsets = [0, 224], sizes = [128, 32], strides = [1, 1]} : vector<128x384xf32> to vector<128x32xf32>
      %118 = tpu.transpose %117, [1, 0] : vector<128x32xf32> -> vector<32x128xf32>
      %119 = arith.truncf %118 : vector<32x128xf32> to vector<32x128xbf16>
      %c3_i32_53 = arith.constant 3 : i32
      %120 = arith.addi %43, %c3_i32_53 : i32
      %121 = arith.index_cast %120 : i32 to index
      %c0_54 = arith.constant 0 : index
      %c0_55 = arith.constant 0 : index
      %122 = vector.load %arg19[%121, %c0_54, %c0_55] : memref<8x32x128xbf16, #tpu.memory_space<vmem>>, vector<1x32x128xbf16>
      %123 = vector.shape_cast %122 : vector<1x32x128xbf16> to vector<32x128xbf16>
      %124 = vector.shape_cast %119 : vector<32x128xbf16> to vector<1x32x128xbf16>
      tpu.vector_store %arg19[%121, %c0_54, %c0_55], %124 {strides = array<i32>} : memref<8x32x128xbf16, #tpu.memory_space<vmem>>, vector<1x32x128xbf16>,
      %125 = vector.extract_strided_slice %42 {offsets = [0, 352], sizes = [128, 32], strides = [1, 1]} : vector<128x384xf32> to vector<128x32xf32>
      %126 = arith.truncf %125 : vector<128x32xf32> to vector<128x32xbf16>
      %c3_i32_56 = arith.constant 3 : i32
      %127 = arith.addi %43, %c3_i32_56 : i32
      %128 = arith.index_cast %127 : i32 to index
      %c0_57 = arith.constant 0 : index
      %c0_58 = arith.constant 0 : index
      %129 = vector.load %arg20[%128, %c0_57, %c0_58] : memref<8x128x32xbf16, #tpu.memory_space<vmem>>, vector<1x128x32xbf16>
      %130 = vector.shape_cast %129 : vector<1x128x32xbf16> to vector<128x32xbf16>
      %131 = vector.shape_cast %126 : vector<128x32xbf16> to vector<1x128x32xbf16>
      tpu.vector_store %arg20[%128, %c0_57, %c0_58], %131 {strides = array<i32>} : memref<8x128x32xbf16, #tpu.memory_space<vmem>>, vector<1x128x32xbf16>,
    } else {
    }
    %c0_i32_1 = arith.constant 0 : i32
    %3 = arith.cmpi eq, %arg2, %c0_i32_1 : i32
    %4 = arith.extui %3 : i1 to i32
    %c0_i32_2 = arith.constant 0 : i32
    %5 = arith.cmpi ne, %4, %c0_i32_2 : i32
    scf.if %5 {
      %cst = arith.constant 0xFF800000 : f32
      %12 = vector.broadcast %cst : f32 to vector<4x128x1xf32>
      %c0 = arith.constant 0 : index
      %c0_9 = arith.constant 0 : index
      %c0_10 = arith.constant 0 : index
      %13 = vector.load %arg21[%c0, %c0_9, %c0_10] : memref<4x128x1xf32, #tpu.memory_space<vmem>>, vector<4x128x1xf32>
      tpu.vector_store %arg21[%c0, %c0_9, %c0_10], %12 {strides = array<i32>} : memref<4x128x1xf32, #tpu.memory_space<vmem>>, vector<4x128x1xf32>,
      %cst_11 = arith.constant 0.000000e+00 : f32
      %14 = vector.broadcast %cst_11 : f32 to vector<4x128x1xf32>
      %c0_12 = arith.constant 0 : index
      %c0_13 = arith.constant 0 : index
      %c0_14 = arith.constant 0 : index
      %15 = vector.load %arg22[%c0_12, %c0_13, %c0_14] : memref<4x128x1xf32, #tpu.memory_space<vmem>>, vector<4x128x1xf32>
      tpu.vector_store %arg22[%c0_12, %c0_13, %c0_14], %14 {strides = array<i32>} : memref<4x128x1xf32, #tpu.memory_space<vmem>>, vector<4x128x1xf32>,
      %cst_15 = arith.constant 0.000000e+00 : f32
      %16 = vector.broadcast %cst_15 : f32 to vector<4x128x32xf32>
      %c0_16 = arith.constant 0 : index
      %c0_17 = arith.constant 0 : index
      %c0_18 = arith.constant 0 : index
      %17 = vector.load %arg23[%c0_16, %c0_17, %c0_18] : memref<4x128x32xf32, #tpu.memory_space<vmem>>, vector<4x128x32xf32>
      tpu.vector_store %arg23[%c0_16, %c0_17, %c0_18], %16 {strides = array<i32>} : memref<4x128x32xf32, #tpu.memory_space<vmem>>, vector<4x128x32xf32>,
    } else {
    }
    %c4_i32 = arith.constant 4 : i32
    %6 = arith.muli %arg1, %c4_i32 : i32
    %c4_i32_3 = arith.constant 4 : i32
    %7 = arith.muli %arg2, %c4_i32_3 : i32
    %c0_i32_4 = arith.constant 0 : i32
    %c4_i32_5 = arith.constant 4 : i32
    %8 = arith.addi %c0_i32_4, %c4_i32_5 : i32
    %c1_i32 = arith.constant 1 : i32
    scf.for %arg25 = %c0_i32_4 to %8 step %c1_i32  : i32 {
      %12 = arith.addi %6, %arg25 : i32
      %13 = arith.index_cast %12 : i32 to index
      %c0 = arith.constant 0 : index
      %c0_9 = arith.constant 0 : index
      %14 = vector.load %arg18[%13, %c0, %c0_9] : memref<8x128x32xbf16, #tpu.memory_space<vmem>>, vector<1x128x32xbf16>
      %15 = vector.shape_cast %14 : vector<1x128x32xbf16> to vector<128x32xbf16>
      %16 = arith.addi %7, %arg25 : i32
      %17 = arith.index_cast %16 : i32 to index
      %c0_10 = arith.constant 0 : index
      %c0_11 = arith.constant 0 : index
      %18 = vector.load %arg19[%17, %c0_10, %c0_11] : memref<8x32x128xbf16, #tpu.memory_space<vmem>>, vector<1x32x128xbf16>
      %19 = vector.shape_cast %18 : vector<1x32x128xbf16> to vector<32x128xbf16>
      %cst = arith.constant dense<0.000000e+00> : vector<128x128xf32>
      %20 = tpu.matmul %15, %19, %cst {dimension_numbers = #tpu.dot_dimension_numbers<[1], [0], [0], [1], [0, 0, 1, 1], [], []>} : vector<128x32xbf16>, vector<32x128xbf16>, vector<128x128xf32> -> vector<128x128xf32>
      %21 = arith.index_cast %arg25 : i32 to index
      %c0_12 = arith.constant 0 : index
      %c0_13 = arith.constant 0 : index
      %22 = vector.load %arg21[%21, %c0_12, %c0_13] : memref<4x128x1xf32, #tpu.memory_space<vmem>>, vector<1x128x1xf32>
      %23 = vector.shape_cast %22 : vector<1x128x1xf32> to vector<128x1xf32>
      %cst_14 = arith.constant dense<0xFF800000> : vector<128xf32>
      %24 = vector.multi_reduction <maximumf>, %20, %cst_14 [1] : vector<128x128xf32> to vector<128xf32>
      %25 = vector.shape_cast %24 : vector<128xf32> to vector<128x1xf32>
      %26 = arith.maximumf %23, %25 : vector<128x1xf32>
      %27 = arith.subf %23, %26 : vector<128x1xf32>
      %28 = math.exp %27 : vector<128x1xf32>
      %29 = vector.broadcast %26 : vector<128x1xf32> to vector<128x128xf32>
      %30 = arith.subf %20, %29 : vector<128x128xf32>
      %31 = math.exp %30 : vector<128x128xf32>
      %32 = arith.index_cast %arg25 : i32 to index
      %c0_15 = arith.constant 0 : index
      %c0_16 = arith.constant 0 : index
      %33 = vector.load %arg22[%32, %c0_15, %c0_16] : memref<4x128x1xf32, #tpu.memory_space<vmem>>, vector<1x128x1xf32>
      %34 = vector.shape_cast %33 : vector<1x128x1xf32> to vector<128x1xf32>
      %35 = arith.mulf %28, %34 : vector<128x1xf32>
      %cst_17 = arith.constant dense<0.000000e+00> : vector<128xf32>
      %36 = vector.multi_reduction <add>, %31, %cst_17 [1] : vector<128x128xf32> to vector<128xf32>
      %37 = vector.shape_cast %36 : vector<128xf32> to vector<128x1xf32>
      %38 = arith.addf %35, %37 : vector<128x1xf32>
      %39 = arith.index_cast %arg25 : i32 to index
      %c0_18 = arith.constant 0 : index
      %c0_19 = arith.constant 0 : index
      %40 = vector.load %arg22[%39, %c0_18, %c0_19] : memref<4x128x1xf32, #tpu.memory_space<vmem>>, vector<1x128x1xf32>
      %41 = vector.shape_cast %40 : vector<1x128x1xf32> to vector<128x1xf32>
      %42 = vector.shape_cast %38 : vector<128x1xf32> to vector<1x128x1xf32>
      tpu.vector_store %arg22[%39, %c0_18, %c0_19], %42 {strides = array<i32>} : memref<4x128x1xf32, #tpu.memory_space<vmem>>, vector<1x128x1xf32>,
      %43 = arith.index_cast %arg25 : i32 to index
      %c0_20 = arith.constant 0 : index
      %c0_21 = arith.constant 0 : index
      %44 = vector.load %arg23[%43, %c0_20, %c0_21] : memref<4x128x32xf32, #tpu.memory_space<vmem>>, vector<1x128x32xf32>
      %45 = vector.shape_cast %44 : vector<1x128x32xf32> to vector<128x32xf32>
      %46 = vector.broadcast %28 : vector<128x1xf32> to vector<128x32xf32>
      %47 = arith.mulf %46, %45 : vector<128x32xf32>
      %48 = arith.truncf %31 : vector<128x128xf32> to vector<128x128xbf16>
      %49 = arith.addi %7, %arg25 : i32
      %50 = arith.index_cast %49 : i32 to index
      %c0_22 = arith.constant 0 : index
      %c0_23 = arith.constant 0 : index
      %51 = vector.load %arg20[%50, %c0_22, %c0_23] : memref<8x128x32xbf16, #tpu.memory_space<vmem>>, vector<1x128x32xbf16>
      %52 = vector.shape_cast %51 : vector<1x128x32xbf16> to vector<128x32xbf16>
      %cst_24 = arith.constant dense<0.000000e+00> : vector<128x32xf32>
      %53 = tpu.matmul %48, %52, %cst_24 {dimension_numbers = #tpu.dot_dimension_numbers<[1], [0], [0], [1], [0, 0, 1, 1], [], []>} : vector<128x128xbf16>, vector<128x32xbf16>, vector<128x32xf32> -> vector<128x32xf32>
      %54 = arith.addf %47, %53 : vector<128x32xf32>
      %55 = arith.index_cast %arg25 : i32 to index
      %c0_25 = arith.constant 0 : index
      %c0_26 = arith.constant 0 : index
      %56 = vector.load %arg23[%55, %c0_25, %c0_26] : memref<4x128x32xf32, #tpu.memory_space<vmem>>, vector<1x128x32xf32>
      %57 = vector.shape_cast %56 : vector<1x128x32xf32> to vector<128x32xf32>
      %58 = vector.shape_cast %54 : vector<128x32xf32> to vector<1x128x32xf32>
      tpu.vector_store %arg23[%55, %c0_25, %c0_26], %58 {strides = array<i32>} : memref<4x128x32xf32, #tpu.memory_space<vmem>>, vector<1x128x32xf32>,
      %59 = arith.index_cast %arg25 : i32 to index
      %c0_27 = arith.constant 0 : index
      %c0_28 = arith.constant 0 : index
      %60 = vector.load %arg21[%59, %c0_27, %c0_28] : memref<4x128x1xf32, #tpu.memory_space<vmem>>, vector<1x128x1xf32>
      %61 = vector.shape_cast %60 : vector<1x128x1xf32> to vector<128x1xf32>
      %62 = vector.shape_cast %26 : vector<128x1xf32> to vector<1x128x1xf32>
      tpu.vector_store %arg21[%59, %c0_27, %c0_28], %62 {strides = array<i32>} : memref<4x128x1xf32, #tpu.memory_space<vmem>>, vector<1x128x1xf32>,
    }
    %c4_i32_6 = arith.constant 4 : i32
    %c1_i32_7 = arith.constant 1 : i32
    %9 = arith.cmpi eq, %arg2, %c1_i32_7 : i32
    %10 = arith.extui %9 : i1 to i32
    %c0_i32_8 = arith.constant 0 : i32
    %11 = arith.cmpi ne, %10, %c0_i32_8 : i32
    scf.if %11 {
      %c0 = arith.constant 0 : index
      %c0_9 = arith.constant 0 : index
      %c0_10 = arith.constant 0 : index
      %12 = vector.load %arg3[%c0, %c0_9, %c0_10] : memref<1x128x128xbf16, #tpu.memory_space<vmem>>, vector<1x128x128xbf16>
      %13 = vector.shape_cast %12 : vector<1x128x128xbf16> to vector<128x128xbf16>
      %14 = arith.extf %13 : vector<128x128xbf16> to vector<128x128xf32>
      %c0_11 = arith.constant 0 : index
      %c0_12 = arith.constant 0 : index
      %c0_13 = arith.constant 0 : index
      %15 = vector.load %arg22[%c0_11, %c0_12, %c0_13] : memref<4x128x1xf32, #tpu.memory_space<vmem>>, vector<1x128x1xf32>
      %16 = vector.shape_cast %15 : vector<1x128x1xf32> to vector<128x1xf32>
      %17 = tpu.reciprocal %16 : vector<128x1xf32> -> vector<128x1xf32>
      %c0_14 = arith.constant 0 : index
      %c0_15 = arith.constant 0 : index
      %c0_16 = arith.constant 0 : index
      %18 = vector.load %arg23[%c0_14, %c0_15, %c0_16] : memref<4x128x32xf32, #tpu.memory_space<vmem>>, vector<1x128x32xf32>
      %19 = vector.shape_cast %18 : vector<1x128x32xf32> to vector<128x32xf32>
      %20 = vector.broadcast %17 : vector<128x1xf32> to vector<128x32xf32>
      %21 = arith.mulf %19, %20 : vector<128x32xf32>
      %c0_17 = arith.constant 0 : index
      %c0_18 = arith.constant 0 : index
      %22 = vector.load %arg24[%c0_17, %c0_18] : memref<128x128xf32, #tpu.memory_space<vmem>>, vector<128x32xf32>
      tpu.vector_store %arg24[%c0_17, %c0_18], %21 {strides = array<i32>} : memref<128x128xf32, #tpu.memory_space<vmem>>, vector<128x32xf32>,
      %c1 = arith.constant 1 : index
      %c0_19 = arith.constant 0 : index
      %c0_20 = arith.constant 0 : index
      %23 = vector.load %arg22[%c1, %c0_19, %c0_20] : memref<4x128x1xf32, #tpu.memory_space<vmem>>, vector<1x128x1xf32>
      %24 = vector.shape_cast %23 : vector<1x128x1xf32> to vector<128x1xf32>
      %25 = tpu.reciprocal %24 : vector<128x1xf32> -> vector<128x1xf32>
      %c1_21 = arith.constant 1 : index
      %c0_22 = arith.constant 0 : index
      %c0_23 = arith.constant 0 : index
      %26 = vector.load %arg23[%c1_21, %c0_22, %c0_23] : memref<4x128x32xf32, #tpu.memory_space<vmem>>, vector<1x128x32xf32>
      %27 = vector.shape_cast %26 : vector<1x128x32xf32> to vector<128x32xf32>
      %28 = vector.broadcast %25 : vector<128x1xf32> to vector<128x32xf32>
      %29 = arith.mulf %27, %28 : vector<128x32xf32>
      %c0_24 = arith.constant 0 : index
      %c32 = arith.constant 32 : index
      %30 = vector.load %arg24[%c0_24, %c32] : memref<128x128xf32, #tpu.memory_space<vmem>>, vector<128x32xf32>
      tpu.vector_store %arg24[%c0_24, %c32], %29 {strides = array<i32>} : memref<128x128xf32, #tpu.memory_space<vmem>>, vector<128x32xf32>,
      %c2 = arith.constant 2 : index
      %c0_25 = arith.constant 0 : index
      %c0_26 = arith.constant 0 : index
      %31 = vector.load %arg22[%c2, %c0_25, %c0_26] : memref<4x128x1xf32, #tpu.memory_space<vmem>>, vector<1x128x1xf32>
      %32 = vector.shape_cast %31 : vector<1x128x1xf32> to vector<128x1xf32>
      %33 = tpu.reciprocal %32 : vector<128x1xf32> -> vector<128x1xf32>
      %c2_27 = arith.constant 2 : index
      %c0_28 = arith.constant 0 : index
      %c0_29 = arith.constant 0 : index
      %34 = vector.load %arg23[%c2_27, %c0_28, %c0_29] : memref<4x128x32xf32, #tpu.memory_space<vmem>>, vector<1x128x32xf32>
      %35 = vector.shape_cast %34 : vector<1x128x32xf32> to vector<128x32xf32>
      %36 = vector.broadcast %33 : vector<128x1xf32> to vector<128x32xf32>
      %37 = arith.mulf %35, %36 : vector<128x32xf32>
      %c0_30 = arith.constant 0 : index
      %c64 = arith.constant 64 : index
      %38 = vector.load %arg24[%c0_30, %c64] : memref<128x128xf32, #tpu.memory_space<vmem>>, vector<128x32xf32>
      tpu.vector_store %arg24[%c0_30, %c64], %37 {strides = array<i32>} : memref<128x128xf32, #tpu.memory_space<vmem>>, vector<128x32xf32>,
      %c3 = arith.constant 3 : index
      %c0_31 = arith.constant 0 : index
      %c0_32 = arith.constant 0 : index
      %39 = vector.load %arg22[%c3, %c0_31, %c0_32] : memref<4x128x1xf32, #tpu.memory_space<vmem>>, vector<1x128x1xf32>
      %40 = vector.shape_cast %39 : vector<1x128x1xf32> to vector<128x1xf32>
      %41 = tpu.reciprocal %40 : vector<128x1xf32> -> vector<128x1xf32>
      %c3_33 = arith.constant 3 : index
      %c0_34 = arith.constant 0 : index
      %c0_35 = arith.constant 0 : index
      %42 = vector.load %arg23[%c3_33, %c0_34, %c0_35] : memref<4x128x32xf32, #tpu.memory_space<vmem>>, vector<1x128x32xf32>
      %43 = vector.shape_cast %42 : vector<1x128x32xf32> to vector<128x32xf32>
      %44 = vector.broadcast %41 : vector<128x1xf32> to vector<128x32xf32>
      %45 = arith.mulf %43, %44 : vector<128x32xf32>
      %c0_36 = arith.constant 0 : index
      %c96 = arith.constant 96 : index
      %46 = vector.load %arg24[%c0_36, %c96] : memref<128x128xf32, #tpu.memory_space<vmem>>, vector<128x32xf32>
      tpu.vector_store %arg24[%c0_36, %c96], %45 {strides = array<i32>} : memref<128x128xf32, #tpu.memory_space<vmem>>, vector<128x32xf32>,
      %c0_37 = arith.constant 0 : index
      %c0_38 = arith.constant 0 : index
      %47 = vector.load %arg24[%c0_37, %c0_38] : memref<128x128xf32, #tpu.memory_space<vmem>>, vector<128x128xf32>
      %48 = arith.truncf %47 : vector<128x128xf32> to vector<128x128xbf16>
      %c0_39 = arith.constant 0 : index
      %c0_40 = arith.constant 0 : index
      %49 = vector.load %arg9[%c0_39, %c0_40] : memref<128x128xbf16, #tpu.memory_space<vmem>>, vector<128x128xbf16>
      %cst = arith.constant dense<0.000000e+00> : vector<128x128xf32>
      %50 = tpu.matmul %48, %49, %cst {dimension_numbers = #tpu.dot_dimension_numbers<[1], [0], [0], [1], [0, 0, 1, 1], [], []>} : vector<128x128xbf16>, vector<128x128xbf16>, vector<128x128xf32> -> vector<128x128xf32>
      %c0_41 = arith.constant 0 : index
      %c0_42 = arith.constant 0 : index
      %51 = vector.load %arg10[%c0_41, %c0_42] : memref<1x128xf32, #tpu.memory_space<vmem>>, vector<1x128xf32>
      %52 = vector.broadcast %51 : vector<1x128xf32> to vector<128x128xf32>
      %53 = arith.addf %50, %52 : vector<128x128xf32>
      %54 = arith.addf %53, %14 : vector<128x128xf32>
      %c0_43 = arith.constant 0 : index
      %c0_44 = arith.constant 0 : index
      %55 = vector.load %arg11[%c0_43, %c0_44] : memref<1x128xf32, #tpu.memory_space<vmem>>, vector<1x128xf32>
      %c0_45 = arith.constant 0 : index
      %c0_46 = arith.constant 0 : index
      %56 = vector.load %arg12[%c0_45, %c0_46] : memref<1x128xf32, #tpu.memory_space<vmem>>, vector<1x128xf32>
      %cst_47 = arith.constant dense<0.000000e+00> : vector<128xf32>
      %57 = vector.multi_reduction <add>, %54, %cst_47 [1] : vector<128x128xf32> to vector<128xf32>
      %58 = vector.shape_cast %57 : vector<128xf32> to vector<128x1xf32>
      %cst_48 = arith.constant 1.280000e+02 : f32
      %59 = vector.broadcast %cst_48 : f32 to vector<128x1xf32>
      %60 = arith.divf %58, %59 : vector<128x1xf32>
      %61 = vector.broadcast %60 : vector<128x1xf32> to vector<128x128xf32>
      %62 = arith.subf %54, %61 : vector<128x128xf32>
      %63 = arith.mulf %62, %62 : vector<128x128xf32>
      %cst_49 = arith.constant dense<0.000000e+00> : vector<128xf32>
      %64 = vector.multi_reduction <add>, %63, %cst_49 [1] : vector<128x128xf32> to vector<128xf32>
      %65 = vector.shape_cast %64 : vector<128xf32> to vector<128x1xf32>
      %cst_50 = arith.constant 1.280000e+02 : f32
      %66 = vector.broadcast %cst_50 : f32 to vector<128x1xf32>
      %67 = arith.divf %65, %66 : vector<128x1xf32>
      %cst_51 = arith.constant 9.99999974E-6 : f32
      %68 = vector.broadcast %cst_51 : f32 to vector<128x1xf32>
      %69 = arith.addf %67, %68 : vector<128x1xf32>
      %70 = math.rsqrt %69 : vector<128x1xf32>
      %71 = vector.broadcast %70 : vector<128x1xf32> to vector<128x128xf32>
      %72 = arith.mulf %62, %71 : vector<128x128xf32>
      %73 = vector.broadcast %55 : vector<1x128xf32> to vector<128x128xf32>
      %74 = arith.mulf %72, %73 : vector<128x128xf32>
      %75 = vector.broadcast %56 : vector<1x128xf32> to vector<128x128xf32>
      %76 = arith.addf %74, %75 : vector<128x128xf32>
      %77 = arith.truncf %76 : vector<128x128xf32> to vector<128x128xbf16>
      %c0_52 = arith.constant 0 : index
      %c0_53 = arith.constant 0 : index
      %78 = vector.load %arg13[%c0_52, %c0_53] : memref<128x128xbf16, #tpu.memory_space<vmem>>, vector<128x128xbf16>
      %cst_54 = arith.constant dense<0.000000e+00> : vector<128x128xf32>
      %79 = tpu.matmul %77, %78, %cst_54 {dimension_numbers = #tpu.dot_dimension_numbers<[1], [0], [0], [1], [0, 0, 1, 1], [], []>} : vector<128x128xbf16>, vector<128x128xbf16>, vector<128x128xf32> -> vector<128x128xf32>
      %c0_55 = arith.constant 0 : index
      %c0_56 = arith.constant 0 : index
      %80 = vector.load %arg14[%c0_55, %c0_56] : memref<1x128xf32, #tpu.memory_space<vmem>>, vector<1x128xf32>
      %81 = vector.broadcast %80 : vector<1x128xf32> to vector<128x128xf32>
      %82 = arith.addf %79, %81 : vector<128x128xf32>
      %cst_57 = arith.constant 5.000000e-01 : f32
      %83 = vector.broadcast %cst_57 : f32 to vector<128x128xf32>
      %84 = arith.mulf %83, %82 : vector<128x128xf32>
      %cst_58 = arith.constant 4.471500e-02 : f32
      %85 = vector.broadcast %cst_58 : f32 to vector<128x128xf32>
      %86 = arith.mulf %85, %82 : vector<128x128xf32>
      %87 = arith.mulf %86, %82 : vector<128x128xf32>
      %88 = arith.mulf %87, %82 : vector<128x128xf32>
      %89 = arith.addf %82, %88 : vector<128x128xf32>
      %cst_59 = arith.constant 0.797884583 : f32
      %90 = vector.broadcast %cst_59 : f32 to vector<128x128xf32>
      %91 = arith.mulf %90, %89 : vector<128x128xf32>
      %92 = math.tanh %91 : vector<128x128xf32>
      %cst_60 = arith.constant 1.000000e+00 : f32
      %93 = vector.broadcast %cst_60 : f32 to vector<128x128xf32>
      %94 = arith.addf %93, %92 : vector<128x128xf32>
      %95 = arith.mulf %84, %94 : vector<128x128xf32>
      %96 = arith.truncf %95 : vector<128x128xf32> to vector<128x128xbf16>
      %c0_61 = arith.constant 0 : index
      %c0_62 = arith.constant 0 : index
      %97 = vector.load %arg15[%c0_61, %c0_62] : memref<128x128xbf16, #tpu.memory_space<vmem>>, vector<128x128xbf16>
      %cst_63 = arith.constant dense<0.000000e+00> : vector<128x128xf32>
      %98 = tpu.matmul %96, %97, %cst_63 {dimension_numbers = #tpu.dot_dimension_numbers<[1], [0], [0], [1], [0, 0, 1, 1], [], []>} : vector<128x128xbf16>, vector<128x128xbf16>, vector<128x128xf32> -> vector<128x128xf32>
      %c0_64 = arith.constant 0 : index
      %c0_65 = arith.constant 0 : index
      %99 = vector.load %arg16[%c0_64, %c0_65] : memref<1x128xf32, #tpu.memory_space<vmem>>, vector<1x128xf32>
      %100 = vector.broadcast %99 : vector<1x128xf32> to vector<128x128xf32>
      %101 = arith.addf %98, %100 : vector<128x128xf32>
      %102 = arith.addf %101, %54 : vector<128x128xf32>
      %c0_66 = arith.constant 0 : index
      %c0_67 = arith.constant 0 : index
      %c0_68 = arith.constant 0 : index
      %103 = vector.load %arg17[%c0_66, %c0_67, %c0_68] : memref<1x128x128xf32, #tpu.memory_space<vmem>>, vector<1x128x128xf32>
      %104 = vector.shape_cast %103 : vector<1x128x128xf32> to vector<128x128xf32>
      %105 = vector.shape_cast %102 : vector<128x128xf32> to vector<1x128x128xf32>
      tpu.vector_store %arg17[%c0_66, %c0_67, %c0_68], %105 {strides = array<i32>} : memref<1x128x128xf32, #tpu.memory_space<vmem>>, vector<1x128x128xf32>,
    } else {
    }
    return
  }
  func.func @transform_0(%arg0: i32, %arg1: i32, %arg2: i32) -> (i32, i32, i32) {
    %c0_i32 = arith.constant 0 : i32
    %c0_i32_0 = arith.constant 0 : i32
    return %arg0, %arg1, %c0_i32 : i32, i32, i32
  }
  func.func @transform_1(%arg0: i32, %arg1: i32, %arg2: i32) -> (i32, i32, i32) {
    %c0_i32 = arith.constant 0 : i32
    %0 = arith.cmpi eq, %arg1, %c0_i32 : i32
    %c0_i32_0 = arith.constant 0 : i32
    %1 = arith.select %0, %arg2, %c0_i32_0 : i32
    %c0_i32_1 = arith.constant 0 : i32
    %c0_i32_2 = arith.constant 0 : i32
    return %arg0, %1, %c0_i32_1 : i32, i32, i32
  }
  func.func @transform_2(%arg0: i32, %arg1: i32, %arg2: i32) -> (i32, i32) {
    %c0_i32 = arith.constant 0 : i32
    %c0_i32_0 = arith.constant 0 : i32
    %c0_i32_1 = arith.constant 0 : i32
    return %c0_i32, %c0_i32_0 : i32, i32
  }
  func.func @transform_3(%arg0: i32, %arg1: i32, %arg2: i32) -> (i32, i32) {
    %c0_i32 = arith.constant 0 : i32
    %c0_i32_0 = arith.constant 0 : i32
    %c0_i32_1 = arith.constant 0 : i32
    return %c0_i32, %c0_i32_0 : i32, i32
  }
  func.func @transform_4(%arg0: i32, %arg1: i32, %arg2: i32) -> (i32, i32) {
    %c0_i32 = arith.constant 0 : i32
    %c0_i32_0 = arith.constant 0 : i32
    %c0_i32_1 = arith.constant 0 : i32
    return %c0_i32, %c0_i32_0 : i32, i32
  }
  func.func @transform_5(%arg0: i32, %arg1: i32, %arg2: i32) -> (i32, i32) {
    %c0_i32 = arith.constant 0 : i32
    %c0_i32_0 = arith.constant 0 : i32
    %c0_i32_1 = arith.constant 0 : i32
    return %c0_i32, %c0_i32_0 : i32, i32
  }
  func.func @transform_6(%arg0: i32, %arg1: i32, %arg2: i32) -> (i32, i32) {
    %c0_i32 = arith.constant 0 : i32
    %c0_i32_0 = arith.constant 0 : i32
    %c0_i32_1 = arith.constant 0 : i32
    return %c0_i32, %c0_i32_0 : i32, i32
  }
  func.func @transform_7(%arg0: i32, %arg1: i32, %arg2: i32) -> (i32, i32) {
    %c0_i32 = arith.constant 0 : i32
    %c0_i32_0 = arith.constant 0 : i32
    %c0_i32_1 = arith.constant 0 : i32
    return %c0_i32, %c0_i32_0 : i32, i32
  }
  func.func @transform_8(%arg0: i32, %arg1: i32, %arg2: i32) -> (i32, i32) {
    %c0_i32 = arith.constant 0 : i32
    %c0_i32_0 = arith.constant 0 : i32
    %c0_i32_1 = arith.constant 0 : i32
    return %c0_i32, %c0_i32_0 : i32, i32
  }
  func.func @transform_9(%arg0: i32, %arg1: i32, %arg2: i32) -> (i32, i32) {
    %c0_i32 = arith.constant 0 : i32
    %c0_i32_0 = arith.constant 0 : i32
    %c0_i32_1 = arith.constant 0 : i32
    return %c0_i32, %c0_i32_0 : i32, i32
  }
  func.func @transform_10(%arg0: i32, %arg1: i32, %arg2: i32) -> (i32, i32) {
    %c0_i32 = arith.constant 0 : i32
    %c0_i32_0 = arith.constant 0 : i32
    %c0_i32_1 = arith.constant 0 : i32
    return %c0_i32, %c0_i32_0 : i32, i32
  }
  func.func @transform_11(%arg0: i32, %arg1: i32, %arg2: i32) -> (i32, i32) {
    %c0_i32 = arith.constant 0 : i32
    %c0_i32_0 = arith.constant 0 : i32
    %c0_i32_1 = arith.constant 0 : i32
    return %c0_i32, %c0_i32_0 : i32, i32
  }
  func.func @transform_12(%arg0: i32, %arg1: i32, %arg2: i32) -> (i32, i32) {
    %c0_i32 = arith.constant 0 : i32
    %c0_i32_0 = arith.constant 0 : i32
    %c0_i32_1 = arith.constant 0 : i32
    return %c0_i32, %c0_i32_0 : i32, i32
  }
  func.func @transform_13(%arg0: i32, %arg1: i32, %arg2: i32) -> (i32, i32) {
    %c0_i32 = arith.constant 0 : i32
    %c0_i32_0 = arith.constant 0 : i32
    %c0_i32_1 = arith.constant 0 : i32
    return %c0_i32, %c0_i32_0 : i32, i32
  }
  func.func @transform_14(%arg0: i32, %arg1: i32, %arg2: i32) -> (i32, i32, i32) {
    %c0_i32 = arith.constant 0 : i32
    %c0_i32_0 = arith.constant 0 : i32
    return %arg0, %arg1, %c0_i32 : i32, i32, i32
  }
}

</mosaic_0001>

<llo_original>
// kernel: tpu_custom_call.1
$region0: #{tpu_custom_call.1}
  #allocation0 [shape = 'u32[]', space=smem, size = 0x4, offset = 0x4, fixed_abs, tag = 'smem constant byte address 0x4 - core index']
  #allocation1 [shape = 'u32[144,128]{1,0:T(1,128)}', space=vmem, size = 0x12000, scoped, tag = 'internal scratch']
  #allocation2 [shape = 'bf16[8,128,32]{2,1,0:T(16,128)(2,1)}', space=vmem, size = 0x40000, scoped, tag = 'scratch operand']
  #allocation3 [shape = 'bf16[8,32,128]{2,1,0:T(16,128)(2,1)}', space=vmem, size = 0x10000, scoped, tag = 'scratch operand']
  #allocation4 [shape = 'bf16[8,128,32]{2,1,0:T(16,128)(2,1)}', space=vmem, size = 0x40000, scoped, tag = 'scratch operand']
  #allocation5 [shape = 'f32[4,128,1]{2,1,0:T(8,128)}', space=vmem, size = 0x40000, scoped, tag = 'scratch operand']
  #allocation6 [shape = 'f32[4,128,1]{2,1,0:T(8,128)}', space=vmem, size = 0x40000, scoped, tag = 'scratch operand']
  #allocation7 [shape = 'f32[4,128,32]{2,1,0:T(8,128)}', space=vmem, size = 0x40000, scoped, tag = 'scratch operand']
  #allocation8 [shape = 'f32[128,128]{1,0:T(8,128)}', space=vmem, size = 0x10000, scoped, tag = 'scratch operand']
  %s0 = inlined_call_operand.hbm [shape: bf16[2,256,128], index: 0, kind: input, shape index: {}]
  %s1 = inlined_call_operand.hbm [shape: bf16[2,256,128], index: 1, kind: input, shape index: {}]
  %s2 = inlined_call_operand.vmem [shape: f32[1,128], index: 2, kind: input, shape index: {}]
  %s3 = inlined_call_operand.vmem [shape: f32[1,128], index: 3, kind: input, shape index: {}]
  %s4 = inlined_call_operand.hbm [shape: bf16[128,384], index: 4, kind: input, shape index: {}]
  %s5 = inlined_call_operand.vmem [shape: f32[1,384], index: 5, kind: input, shape index: {}]
  %s6 = inlined_call_operand.hbm [shape: bf16[128,128], index: 6, kind: input, shape index: {}]
  %s7 = inlined_call_operand.vmem [shape: f32[1,128], index: 7, kind: input, shape index: {}]
  %s8 = inlined_call_operand.vmem [shape: f32[1,128], index: 8, kind: input, shape index: {}]
  %s9 = inlined_call_operand.vmem [shape: f32[1,128], index: 9, kind: input, shape index: {}]
  %s10 = inlined_call_operand.hbm [shape: bf16[128,128], index: 10, kind: input, shape index: {}]
  %s11 = inlined_call_operand.vmem [shape: f32[1,128], index: 11, kind: input, shape index: {}]
  %s12 = inlined_call_operand.hbm [shape: bf16[128,128], index: 12, kind: input, shape index: {}]
  %s13 = inlined_call_operand.vmem [shape: f32[1,128], index: 13, kind: input, shape index: {}]
  %s14 = inlined_call_operand.hbm [shape: f32[2,256,128], index: 14, kind: output, shape index: {}]
  %s15 = sld [smem:[#allocation0]]
  $region132: #{tpu_custom_call.1} parent=0
    _
  %s17 = ssub.s32 1, %s15
  %s18 = scalar_select 0, %s17, %s15
  $region1: #{tpu_custom_call.1} parent=0
    #allocation9 [shape = 'u8[65536]{0}', space=vmem, size = 0x10000, scoped, tag = 'input window, operand 0']
    #allocation10 [shape = 's32[2]{0}', space=sflag, size = 0x8, scoped, tag = 'scoped memory for tpu_custom_call.1']
    #allocation11 [shape = 's32[2]{0}', space=sflag, size = 0x8, scoped, tag = 'scoped memory for tpu_custom_call.1']
    #allocation12 [shape = 'u8[65536]{0}', space=vmem, size = 0x10000, scoped, tag = 'input window, operand 1']
    #allocation13 [shape = 's32[2]{0}', space=sflag, size = 0x8, scoped, tag = 'scoped memory for tpu_custom_call.1']
    #allocation14 [shape = 'u8[98304]{0}', space=vmem, size = 0x18000, scoped, tag = 'input window, operand 4, single buffered']
    #allocation15 [shape = 'u8[32768]{0}', space=vmem, size = 0x8000, scoped, tag = 'input window, operand 6, single buffered']
    #allocation16 [shape = 's32[1]{0}', space=sflag, size = 0x4, scoped, tag = 'scoped memory for tpu_custom_call.1']
    #allocation17 [shape = 'u8[32768]{0}', space=vmem, size = 0x8000, scoped, tag = 'input window, operand 10, single buffered']
    #allocation18 [shape = 'u8[32768]{0}', space=vmem, size = 0x8000, scoped, tag = 'input window, operand 12, single buffered']
    #allocation19 [shape = 's32[1]{0}', space=sflag, size = 0x4, scoped, tag = 'scoped memory for tpu_custom_call.1']
    #allocation20 [shape = 'u8[131072]{0}', space=vmem, size = 0x20000, scoped, tag = 'output window, operand 0']
    %19 = vsyncpa [#allocation10], 0
    %s20 = scalar_lea.sflag [#allocation10], 1
    %21 = vsyncpa %s20, 0
    %22 = vsyncpa [#allocation13], 0
    %s23 = scalar_lea.sflag [#allocation13], 1
    %24 = vsyncpa %s23, 0
    %25 = vsyncpa [#allocation16], 0
    %26 = vsyncpa [#allocation19], 0
    %27 = vsyncpa [#allocation11], 0
    %s28 = scalar_lea.sflag [#allocation11], 1
    %29 = vsyncpa %s28, 0
    loop: start=0, step=1, limit=10
    $region2: #{tpu_custom_call.1} parent=1 // loop_pre_header
      _
    $region3: #{tpu_custom_call.1} parent=1 // loop_header
      %s31 = sphi 0, %s35
      %p32 = scmp.ge.s32.totalorder %s31, 10
      %s38 = sphi 0, %s57
      %s39 = sphi 0, %s53
      %s40 = sphi 0, %s49
      %s41 = sphi 0, %s38
      %s42 = sphi 0, %s39
      %s43 = sphi 0, %s40
      %s44 = sphi 0, %s41
      %s45 = sphi 0, %s42
      %s46 = sphi 0, %s43
      %s62 = sphi 0, %s64
      %s65 = sphi 0, %s62
      %s66 = sphi 0, %s65
      %s82 = sphi 0, %s66
      %s94 = sphi 0, %s96
      %s97 = sphi 0, %s94
      %s98 = sphi 0, %s97
      %s114 = sphi 0, %s98
      %s118 = sphi 0, %s118
      %s120 = sphi 0, %s118
      %s121 = sphi 0, %s120
      %s135 = sphi 0, %s121
      %s139 = sphi 0, %s139
      %s141 = sphi 0, %s139
      %s142 = sphi 0, %s141
      %s156 = sphi 0, %s142
      %s160 = sphi 0, %s160
      %s162 = sphi 0, %s160
      %s163 = sphi 0, %s162
      %s177 = sphi 0, %s163
      %s181 = sphi 0, %s181
      %s183 = sphi 0, %s181
      %s184 = sphi 0, %s183
      %s198 = sphi 0, %s184
      %s202 = sphi 0, %s202
      %s204 = sphi 0, %s202
      %s205 = sphi 0, %s204
      %s219 = sphi 0, %s205
      %s223 = sphi 0, %s223
      %s225 = sphi 0, %s223
      %s226 = sphi 0, %s225
      %s240 = sphi 0, %s226
      %s244 = sphi 0, %s244
      %s246 = sphi 0, %s244
      %s247 = sphi 0, %s246
      %s261 = sphi 0, %s247
      %s265 = sphi 0, %s265
      %s267 = sphi 0, %s265
      %s268 = sphi 0, %s267
      %s282 = sphi 0, %s268
      %s286 = sphi 0, %s286
      %s288 = sphi 0, %s286
      %s289 = sphi 0, %s288
      %s303 = sphi 0, %s289
      %s307 = sphi 0, %s307
      %s309 = sphi 0, %s307
      %s310 = sphi 0, %s309
      %s324 = sphi 0, %s310
      %s328 = sphi 0, %s328
      %s330 = sphi 0, %s328
      %s331 = sphi 0, %s330
      %s345 = sphi 0, %s331
      %s349 = sphi 0, %s349
      %s351 = sphi 0, %s349
      %s352 = sphi 0, %s351
      %s366 = sphi 0, %s352
      %s374 = sphi 0, %s376
      %s377 = sphi 0, %s374
      %s378 = sphi 0, %s377
      %s394 = sphi 0, %s378
    $region4: #{tpu_custom_call.1} parent=1 // loop_header_branch
      %34 = sbr.rel (%p32) target = $region8
    $region5: #{tpu_custom_call.1} parent=1 // loop_body
      %s36 = ssub.s32 %s31, 1
      %s37 = ssub.s32 %s31, 2
      %s47 = sadd.s32 1, %s40
      %p48 = scmp.ge.s32.totalorder %s47, 2
      %s49 = scalar_select %p48, 0, %s47
      %s50 = sadd.s32 1, %s39
      %s51 = scalar_select %p48, %s50, %s39
      %p52 = scmp.ge.s32.totalorder %s51, 2
      %s53 = scalar_select %p52, 0, %s51
      %s54 = sadd.s32 1, %s38
      %s55 = scalar_select %p52, %s54, %s38
      %p56 = scmp.ge.s32.totalorder %s55, 2
      %s57 = scalar_select %p56, 0, %s55
      %s58 = ssub.s32 %s38, %s57
      %s59 = ssub.s32 %s39, %s53
      %s60 = sor.u32 %s58, %s59
      %p61 = scmp.eq.s32.totalorder %s60, 0
      %s63 = sadd.s32 %s62, 1
      %s64 = scalar_select %p61, %s62, %s63
      %p67 = pneg %p61
      %p68 = scmp.eq.s32.totalorder %s31, 7
      %p69 = por %p67, %p68
      %p70 = scmp.ne.s32.totalorder %s62, %s65
      %p71 = scmp.eq.s32.totalorder %s31, 0
      %p72 = por %p70, %p71
      %p73 = scmp.ne.s32.totalorder %s62, %s65
      %p74 = scmp.eq.s32.totalorder %s36, 7
      %p75 = por %p73, %p74
      %p76 = scmp.ne.s32.totalorder %s65, %s66
      %p77 = scmp.eq.s32.totalorder %s36, 0
      %p78 = por %p76, %p77
      %p79 = scmp.ne.s32.totalorder %s65, %s66
      %p80 = scmp.eq.s32.totalorder %s37, 7
      %p81 = por %p79, %p80
      %p83 = scmp.ne.s32.totalorder %s66, %s82
      %p84 = scmp.eq.s32.totalorder %s37, 0
      %p85 = por %p83, %p84
      %p86 = scmp.eq.s32.totalorder %s39, 0
      %s87 = scalar_select %p86, %s40, 0
      %p88 = scmp.eq.s32.totalorder %s53, 0
      %s89 = scalar_select %p88, %s49, 0
      %s90 = ssub.s32 %s38, %s57
      %s91 = ssub.s32 %s87, %s89
      %s92 = sor.u32 %s90, %s91
      %p93 = scmp.eq.s32.totalorder %s92, 0
      %s95 = sadd.s32 %s94, 1
      %s96 = scalar_select %p93, %s94, %s95
      %p99 = pneg %p93
      %p100 = scmp.eq.s32.totalorder %s31, 7
      %p101 = por %p99, %p100
      %p102 = scmp.ne.s32.totalorder %s94, %s97
      %p103 = scmp.eq.s32.totalorder %s31, 0
      %p104 = por %p102, %p103
      %p105 = scmp.ne.s32.totalorder %s94, %s97
      %p106 = scmp.eq.s32.totalorder %s36, 7
      %p107 = por %p105, %p106
      %p108 = scmp.ne.s32.totalorder %s97, %s98
      %p109 = scmp.eq.s32.totalorder %s36, 0
      %p110 = por %p108, %p109
      %p111 = scmp.ne.s32.totalorder %s97, %s98
      %p112 = scmp.eq.s32.totalorder %s37, 7
      %p113 = por %p111, %p112
      %p115 = scmp.ne.s32.totalorder %s98, %s114
      %p116 = scmp.eq.s32.totalorder %s37, 0
      %p117 = por %p115, %p116
      %s119 = sadd.s32 %s118, 1
      %p122 = scmp.eq.s32.totalorder %s31, 7
      %p123 = scmp.ne.s32.totalorder %s118, %s120
      %p124 = scmp.eq.s32.totalorder %s31, 0
      %p125 = por %p123, %p124
      %p126 = scmp.ne.s32.totalorder %s118, %s120
      %p127 = scmp.eq.s32.totalorder %s36, 7
      %p128 = por %p126, %p127
      %p129 = scmp.ne.s32.totalorder %s120, %s121
      %p130 = scmp.eq.s32.totalorder %s36, 0
      %p131 = por %p129, %p130
      %p132 = scmp.ne.s32.totalorder %s120, %s121
      %p133 = scmp.eq.s32.totalorder %s37, 7
      %p134 = por %p132, %p133
      %p136 = scmp.ne.s32.totalorder %s121, %s135
      %p137 = scmp.eq.s32.totalorder %s37, 0
      %p138 = por %p136, %p137
      %s140 = sadd.s32 %s139, 1
      %p143 = scmp.eq.s32.totalorder %s31, 7
      %p144 = scmp.ne.s32.totalorder %s139, %s141
      %p145 = scmp.eq.s32.totalorder %s31, 0
      %p146 = por %p144, %p145
      %p147 = scmp.ne.s32.totalorder %s139, %s141
      %p148 = scmp.eq.s32.totalorder %s36, 7
      %p149 = por %p147, %p148
      %p150 = scmp.ne.s32.totalorder %s141, %s142
      %p151 = scmp.eq.s32.totalorder %s36, 0
      %p152 = por %p150, %p151
      %p153 = scmp.ne.s32.totalorder %s141, %s142
      %p154 = scmp.eq.s32.totalorder %s37, 7
      %p155 = por %p153, %p154
      %p157 = scmp.ne.s32.totalorder %s142, %s156
      %p158 = scmp.eq.s32.totalorder %s37, 0
      %p159 = por %p157, %p158
      %s161 = sadd.s32 %s160, 1
      %p164 = scmp.eq.s32.totalorder %s31, 7
      %p165 = scmp.ne.s32.totalorder %s160, %s162
      %p166 = scmp.eq.s32.totalorder %s31, 0
      %p167 = por %p165, %p166
      %p168 = scmp.ne.s32.totalorder %s160, %s162
      %p169 = scmp.eq.s32.totalorder %s36, 7
      %p170 = por %p168, %p169
      %p171 = scmp.ne.s32.totalorder %s162, %s163
      %p172 = scmp.eq.s32.totalorder %s36, 0
      %p173 = por %p171, %p172
      %p174 = scmp.ne.s32.totalorder %s162, %s163
      %p175 = scmp.eq.s32.totalorder %s37, 7
      %p176 = por %p174, %p175
      %p178 = scmp.ne.s32.totalorder %s163, %s177
      %p179 = scmp.eq.s32.totalorder %s37, 0
      %p180 = por %p178, %p179
      %s182 = sadd.s32 %s181, 1
      %p185 = scmp.eq.s32.totalorder %s31, 7
      %p186 = scmp.ne.s32.totalorder %s181, %s183
      %p187 = scmp.eq.s32.totalorder %s31, 0
      %p188 = por %p186, %p187
      %p189 = scmp.ne.s32.totalorder %s181, %s183
      %p190 = scmp.eq.s32.totalorder %s36, 7
      %p191 = por %p189, %p190
      %p192 = scmp.ne.s32.totalorder %s183, %s184
      %p193 = scmp.eq.s32.totalorder %s36, 0
      %p194 = por %p192, %p193
      %p195 = scmp.ne.s32.totalorder %s183, %s184
      %p196 = scmp.eq.s32.totalorder %s37, 7
      %p197 = por %p195, %p196
      %p199 = scmp.ne.s32.totalorder %s184, %s198
      %p200 = scmp.eq.s32.totalorder %s37, 0
      %p201 = por %p199, %p200
      %s203 = sadd.s32 %s202, 1
      %p206 = scmp.eq.s32.totalorder %s31, 7
      %p207 = scmp.ne.s32.totalorder %s202, %s204
      %p208 = scmp.eq.s32.totalorder %s31, 0
      %p209 = por %p207, %p208
      %p210 = scmp.ne.s32.totalorder %s202, %s204
      %p211 = scmp.eq.s32.totalorder %s36, 7
      %p212 = por %p210, %p211
      %p213 = scmp.ne.s32.totalorder %s204, %s205
      %p214 = scmp.eq.s32.totalorder %s36, 0
      %p215 = por %p213, %p214
      %p216 = scmp.ne.s32.totalorder %s204, %s205
      %p217 = scmp.eq.s32.totalorder %s37, 7
      %p218 = por %p216, %p217
      %p220 = scmp.ne.s32.totalorder %s205, %s219
      %p221 = scmp.eq.s32.totalorder %s37, 0
      %p222 = por %p220, %p221
      %s224 = sadd.s32 %s223, 1
      %p227 = scmp.eq.s32.totalorder %s31, 7
      %p228 = scmp.ne.s32.totalorder %s223, %s225
      %p229 = scmp.eq.s32.totalorder %s31, 0
      %p230 = por %p228, %p229
      %p231 = scmp.ne.s32.totalorder %s223, %s225
      %p232 = scmp.eq.s32.totalorder %s36, 7
      %p233 = por %p231, %p232
      %p234 = scmp.ne.s32.totalorder %s225, %s226
      %p235 = scmp.eq.s32.totalorder %s36, 0
      %p236 = por %p234, %p235
      %p237 = scmp.ne.s32.totalorder %s225, %s226
      %p238 = scmp.eq.s32.totalorder %s37, 7
      %p239 = por %p237, %p238
      %p241 = scmp.ne.s32.totalorder %s226, %s240
      %p242 = scmp.eq.s32.totalorder %s37, 0
      %p243 = por %p241, %p242
      %s245 = sadd.s32 %s244, 1
      %p248 = scmp.eq.s32.totalorder %s31, 7
      %p249 = scmp.ne.s32.totalorder %s244, %s246
      %p250 = scmp.eq.s32.totalorder %s31, 0
      %p251 = por %p249, %p250
      %p252 = scmp.ne.s32.totalorder %s244, %s246
      %p253 = scmp.eq.s32.totalorder %s36, 7
      %p254 = por %p252, %p253
      %p255 = scmp.ne.s32.totalorder %s246, %s247
      %p256 = scmp.eq.s32.totalorder %s36, 0
      %p257 = por %p255, %p256
      %p258 = scmp.ne.s32.totalorder %s246, %s247
      %p259 = scmp.eq.s32.totalorder %s37, 7
      %p260 = por %p258, %p259
      %p262 = scmp.ne.s32.totalorder %s247, %s261
      %p263 = scmp.eq.s32.totalorder %s37, 0
      %p264 = por %p262, %p263
      %s266 = sadd.s32 %s265, 1
      %p269 = scmp.eq.s32.totalorder %s31, 7
      %p270 = scmp.ne.s32.totalorder %s265, %s267
      %p271 = scmp.eq.s32.totalorder %s31, 0
      %p272 = por %p270, %p271
      %p273 = scmp.ne.s32.totalorder %s265, %s267
      %p274 = scmp.eq.s32.totalorder %s36, 7
      %p275 = por %p273, %p274
      %p276 = scmp.ne.s32.totalorder %s267, %s268
      %p277 = scmp.eq.s32.totalorder %s36, 0
      %p278 = por %p276, %p277
      %p279 = scmp.ne.s32.totalorder %s267, %s268
      %p280 = scmp.eq.s32.totalorder %s37, 7
      %p281 = por %p279, %p280
      %p283 = scmp.ne.s32.totalorder %s268, %s282
      %p284 = scmp.eq.s32.totalorder %s37, 0
      %p285 = por %p283, %p284
      %s287 = sadd.s32 %s286, 1
      %p290 = scmp.eq.s32.totalorder %s31, 7
      %p291 = scmp.ne.s32.totalorder %s286, %s288
      %p292 = scmp.eq.s32.totalorder %s31, 0
      %p293 = por %p291, %p292
      %p294 = scmp.ne.s32.totalorder %s286, %s288
      %p295 = scmp.eq.s32.totalorder %s36, 7
      %p296 = por %p294, %p295
      %p297 = scmp.ne.s32.totalorder %s288, %s289
      %p298 = scmp.eq.s32.totalorder %s36, 0
      %p299 = por %p297, %p298
      %p300 = scmp.ne.s32.totalorder %s288, %s289
      %p301 = scmp.eq.s32.totalorder %s37, 7
      %p302 = por %p300, %p301
      %p304 = scmp.ne.s32.totalorder %s289, %s303
      %p305 = scmp.eq.s32.totalorder %s37, 0
      %p306 = por %p304, %p305
      %s308 = sadd.s32 %s307, 1
      %p311 = scmp.eq.s32.totalorder %s31, 7
      %p312 = scmp.ne.s32.totalorder %s307, %s309
      %p313 = scmp.eq.s32.totalorder %s31, 0
      %p314 = por %p312, %p313
      %p315 = scmp.ne.s32.totalorder %s307, %s309
      %p316 = scmp.eq.s32.totalorder %s36, 7
      %p317 = por %p315, %p316
      %p318 = scmp.ne.s32.totalorder %s309, %s310
      %p319 = scmp.eq.s32.totalorder %s36, 0
      %p320 = por %p318, %p319
      %p321 = scmp.ne.s32.totalorder %s309, %s310
      %p322 = scmp.eq.s32.totalorder %s37, 7
      %p323 = por %p321, %p322
      %p325 = scmp.ne.s32.totalorder %s310, %s324
      %p326 = scmp.eq.s32.totalorder %s37, 0
      %p327 = por %p325, %p326
      %s329 = sadd.s32 %s328, 1
      %p332 = scmp.eq.s32.totalorder %s31, 7
      %p333 = scmp.ne.s32.totalorder %s328, %s330
      %p334 = scmp.eq.s32.totalorder %s31, 0
      %p335 = por %p333, %p334
      %p336 = scmp.ne.s32.totalorder %s328, %s330
      %p337 = scmp.eq.s32.totalorder %s36, 7
      %p338 = por %p336, %p337
      %p339 = scmp.ne.s32.totalorder %s330, %s331
      %p340 = scmp.eq.s32.totalorder %s36, 0
      %p341 = por %p339, %p340
      %p342 = scmp.ne.s32.totalorder %s330, %s331
      %p343 = scmp.eq.s32.totalorder %s37, 7
      %p344 = por %p342, %p343
      %p346 = scmp.ne.s32.totalorder %s331, %s345
      %p347 = scmp.eq.s32.totalorder %s37, 0
      %p348 = por %p346, %p347
      %s350 = sadd.s32 %s349, 1
      %p353 = scmp.eq.s32.totalorder %s31, 7
      %p354 = scmp.ne.s32.totalorder %s349, %s351
      %p355 = scmp.eq.s32.totalorder %s31, 0
      %p356 = por %p354, %p355
      %p357 = scmp.ne.s32.totalorder %s349, %s351
      %p358 = scmp.eq.s32.totalorder %s36, 7
      %p359 = por %p357, %p358
      %p360 = scmp.ne.s32.totalorder %s351, %s352
      %p361 = scmp.eq.s32.totalorder %s36, 0
      %p362 = por %p360, %p361
      %p363 = scmp.ne.s32.totalorder %s351, %s352
      %p364 = scmp.eq.s32.totalorder %s37, 7
      %p365 = por %p363, %p364
      %p367 = scmp.ne.s32.totalorder %s352, %s366
      %p368 = scmp.eq.s32.totalorder %s37, 0
      %p369 = por %p367, %p368
      %s370 = ssub.s32 %s38, %s57
      %s371 = ssub.s32 %s39, %s53
      %s372 = sor.u32 %s370, %s371
      %p373 = scmp.eq.s32.totalorder %s372, 0
      %s375 = sadd.s32 %s374, 1
      %s376 = scalar_select %p373, %s374, %s375
      %p379 = pneg %p373
      %p380 = scmp.eq.s32.totalorder %s31, 7
      %p381 = por %p379, %p380
      %p382 = scmp.ne.s32.totalorder %s374, %s377
      %p383 = scmp.eq.s32.totalorder %s31, 0
      %p384 = por %p382, %p383
      %p385 = scmp.ne.s32.totalorder %s374, %s377
      %p386 = scmp.eq.s32.totalorder %s36, 7
      %p387 = por %p385, %p386
      %p388 = scmp.ne.s32.totalorder %s377, %s378
      %p389 = scmp.eq.s32.totalorder %s36, 0
      %p390 = por %p388, %p389
      %p391 = scmp.ne.s32.totalorder %s377, %s378
      %p392 = scmp.eq.s32.totalorder %s37, 7
      %p393 = por %p391, %p392
      %p395 = scmp.ne.s32.totalorder %s378, %s394
      %p396 = scmp.eq.s32.totalorder %s37, 0
      %p397 = por %p395, %p396
      %p398 = scmp.le.s32.totalorder 1, %s31
      %p399 = scmp.lt.s32.totalorder %s31, 9
      %p400 = pnand %p398, %p399
      %p401 = pneg %p400
      // Predicated region
      $region9: #{tpu_custom_call.1} parent=5 // pred_check
        _
      $region10: #{tpu_custom_call.1} parent=5 // pred_check_branch
        %403 = sbr.rel (%p400) target = $region12
      $region11: #{tpu_custom_call.1} parent=5 // pred_region
        %s404 = ssub.s32 %s31, 1
        // Predicated region
        $region13: #{tpu_custom_call.1} parent=11 // pred_check
          %p405 = pneg %p131
        $region14: #{tpu_custom_call.1} parent=11 // pred_check_branch
          %407 = sbr.rel (%p405) target = $region16
        $region15: #{tpu_custom_call.1} parent=11 // pred_region
          _
        $region16: #{tpu_custom_call.1} parent=11 // pred_fallthru
          _
        // Predicated region
        $region17: #{tpu_custom_call.1} parent=11 // pred_check
          %p408 = pneg %p152
        $region18: #{tpu_custom_call.1} parent=11 // pred_check_branch
          %410 = sbr.rel (%p408) target = $region20
        $region19: #{tpu_custom_call.1} parent=11 // pred_region
          _
        $region20: #{tpu_custom_call.1} parent=11 // pred_fallthru
          _
        // Predicated region
        $region21: #{tpu_custom_call.1} parent=11 // pred_check
          %p411 = pneg %p173
        $region22: #{tpu_custom_call.1} parent=11 // pred_check_branch
          %413 = sbr.rel (%p411) target = $region24
        $region23: #{tpu_custom_call.1} parent=11 // pred_region
          %s415 = ssub.s32 3072, 3072
          %416 = vsyncadd [#allocation13], %s415
          %s417 = sshll.u32 [#allocation14], 4
          %s418 = int_to_ptr.vmem [resolvable:$true] %s417
          %423 = dma.hbm_to_vmem [thread:$0]  %s4, 3072, %s418, [#allocation13], 192, 192, 12
        $region24: #{tpu_custom_call.1} parent=11 // pred_fallthru
          _
        // Predicated region
        $region25: #{tpu_custom_call.1} parent=11 // pred_check
          %p424 = pneg %p194
        $region26: #{tpu_custom_call.1} parent=11 // pred_check_branch
          %426 = sbr.rel (%p424) target = $region28
        $region27: #{tpu_custom_call.1} parent=11 // pred_region
          _
        $region28: #{tpu_custom_call.1} parent=11 // pred_fallthru
          _
        // Predicated region
        $region29: #{tpu_custom_call.1} parent=11 // pred_check
          %p427 = pneg %p215
        $region30: #{tpu_custom_call.1} parent=11 // pred_check_branch
          %429 = sbr.rel (%p427) target = $region32
        $region31: #{tpu_custom_call.1} parent=11 // pred_region
          %s431 = ssub.s32 1024, 1024
          %432 = vsyncadd [#allocation16], %s431
          %s433 = sshll.u32 [#allocation15], 4
          %s434 = int_to_ptr.vmem [resolvable:$true] %s433
          %439 = dma.hbm_to_vmem [thread:$0]  %s6, 1024, %s434, [#allocation16], 64, 64, 4
        $region32: #{tpu_custom_call.1} parent=11 // pred_fallthru
          _
        // Predicated region
        $region33: #{tpu_custom_call.1} parent=11 // pred_check
          %p440 = pneg %p236
        $region34: #{tpu_custom_call.1} parent=11 // pred_check_branch
          %442 = sbr.rel (%p440) target = $region36
        $region35: #{tpu_custom_call.1} parent=11 // pred_region
          _
        $region36: #{tpu_custom_call.1} parent=11 // pred_fallthru
          _
        // Predicated region
        $region37: #{tpu_custom_call.1} parent=11 // pred_check
          %p443 = pneg %p257
        $region38: #{tpu_custom_call.1} parent=11 // pred_check_branch
          %445 = sbr.rel (%p443) target = $region40
        $region39: #{tpu_custom_call.1} parent=11 // pred_region
          _
        $region40: #{tpu_custom_call.1} parent=11 // pred_fallthru
          _
        // Predicated region
        $region41: #{tpu_custom_call.1} parent=11 // pred_check
          %p446 = pneg %p278
        $region42: #{tpu_custom_call.1} parent=11 // pred_check_branch
          %448 = sbr.rel (%p446) target = $region44
        $region43: #{tpu_custom_call.1} parent=11 // pred_region
          _
        $region44: #{tpu_custom_call.1} parent=11 // pred_fallthru
          _
        // Predicated region
        $region45: #{tpu_custom_call.1} parent=11 // pred_check
          %p449 = pneg %p299
        $region46: #{tpu_custom_call.1} parent=11 // pred_check_branch
          %451 = sbr.rel (%p449) target = $region48
        $region47: #{tpu_custom_call.1} parent=11 // pred_region
          %s453 = ssub.s32 1024, 1024
          %454 = vsyncadd [#allocation16], %s453
          %s455 = sshll.u32 [#allocation17], 4
          %s456 = int_to_ptr.vmem [resolvable:$true] %s455
          %461 = dma.hbm_to_vmem [thread:$0]  %s10, 1024, %s456, [#allocation16], 64, 64, 4
        $region48: #{tpu_custom_call.1} parent=11 // pred_fallthru
          _
        // Predicated region
        $region49: #{tpu_custom_call.1} parent=11 // pred_check
          %p462 = pneg %p320
        $region50: #{tpu_custom_call.1} parent=11 // pred_check_branch
          %464 = sbr.rel (%p462) target = $region52
        $region51: #{tpu_custom_call.1} parent=11 // pred_region
          _
        $region52: #{tpu_custom_call.1} parent=11 // pred_fallthru
          _
        // Predicated region
        $region53: #{tpu_custom_call.1} parent=11 // pred_check
          %p465 = pneg %p341
        $region54: #{tpu_custom_call.1} parent=11 // pred_check_branch
          %467 = sbr.rel (%p465) target = $region56
        $region55: #{tpu_custom_call.1} parent=11 // pred_region
          %s469 = ssub.s32 1024, 1024
          %470 = vsyncadd [#allocation19], %s469
          %s471 = sshll.u32 [#allocation18], 4
          %s472 = int_to_ptr.vmem [resolvable:$true] %s471
          %477 = dma.hbm_to_vmem [thread:$0]  %s12, 1024, %s472, [#allocation19], 64, 64, 4
        $region56: #{tpu_custom_call.1} parent=11 // pred_fallthru
          _
        // Predicated region
        $region57: #{tpu_custom_call.1} parent=11 // pred_check
          %p478 = pneg %p362
        $region58: #{tpu_custom_call.1} parent=11 // pred_check_branch
          %480 = sbr.rel (%p478) target = $region60
        $region59: #{tpu_custom_call.1} parent=11 // pred_region
          _
        $region60: #{tpu_custom_call.1} parent=11 // pred_fallthru
          _
      $region12: #{tpu_custom_call.1} parent=5 // pred_fallthru
        _
      %p481 = scmp.lt.s32.totalorder %s31, 8
      // Predicated region
      $region61: #{tpu_custom_call.1} parent=5 // pred_check
        %p482 = pneg %p481
      $region62: #{tpu_custom_call.1} parent=5 // pred_check_branch
        %484 = sbr.rel (%p482) target = $region64
      $region63: #{tpu_custom_call.1} parent=5 // pred_region
        // Predicated region
        $region65: #{tpu_custom_call.1} parent=63 // pred_check
          %p485 = pneg %p72
        $region66: #{tpu_custom_call.1} parent=63 // pred_check_branch
          %487 = sbr.rel (%p485) target = $region68
        $region67: #{tpu_custom_call.1} parent=63 // pred_region
          %s488 = sand.u32 %s62, 1
          %s489 = scalar_lea.sflag [#allocation10], %s488
          %s490 = sand.u32 %s62, 1
          %s491 = smul.addr %s490, 64
          %s492 = scalar_lea.vmem [#allocation9], %s491
          %s493 = smul.u32 16, %s39
          %s495 = ssub.s32 1024, 1024
          %496 = vsyncadd %s489, %s495
          %s497 = smul.addr %s38, 32
          %s498 = sadd.s32 %s493, %s497
          %s499 = smul.addr %s498, 64
          %s500 = scalar_lea.hbm %s0, %s499
          %s501 = sshll.u32 %s492, 4
          %s502 = int_to_ptr.vmem [resolvable:$true] %s501
          %507 = dma.hbm_to_vmem [thread:$0]  %s500, 1024, %s502, %s489, 64, 64, 4
        $region68: #{tpu_custom_call.1} parent=63 // pred_fallthru
          _
        // Predicated region
        $region69: #{tpu_custom_call.1} parent=63 // pred_check
          %p508 = pneg %p104
        $region70: #{tpu_custom_call.1} parent=63 // pred_check_branch
          %510 = sbr.rel (%p508) target = $region72
        $region71: #{tpu_custom_call.1} parent=63 // pred_region
          %s511 = sand.u32 %s31, 1
          %s512 = scalar_lea.sflag [#allocation13], %s511
          %s513 = sand.u32 %s94, 1
          %s514 = smul.addr %s513, 64
          %s515 = scalar_lea.vmem [#allocation12], %s514
          %p516 = scmp.eq.s32.totalorder %s39, 0
          %s517 = scalar_select %p516, %s40, 0
          %s518 = smul.u32 16, %s517
          %s520 = ssub.s32 1024, 1024
          %521 = vsyncadd %s512, %s520
          %s522 = smul.addr %s38, 32
          %s523 = sadd.s32 %s518, %s522
          %s524 = smul.addr %s523, 64
          %s525 = scalar_lea.hbm %s1, %s524
          %s526 = sshll.u32 %s515, 4
          %s527 = int_to_ptr.vmem [resolvable:$true] %s526
          %532 = dma.hbm_to_vmem [thread:$0]  %s525, 1024, %s527, %s512, 64, 64, 4
        $region72: #{tpu_custom_call.1} parent=63 // pred_fallthru
          _
      $region64: #{tpu_custom_call.1} parent=5 // pred_fallthru
        _
      %p533 = scmp.le.s32.totalorder 1, %s31
      %p534 = scmp.lt.s32.totalorder %s31, 9
      %p535 = pnand %p533, %p534
      %p536 = pneg %p535
      // Predicated region
      $region73: #{tpu_custom_call.1} parent=5 // pred_check
        _
      $region74: #{tpu_custom_call.1} parent=5 // pred_check_branch
        %538 = sbr.rel (%p535) target = $region76
      $region75: #{tpu_custom_call.1} parent=5 // pred_region
        %s539 = ssub.s32 %s31, 1
        %s540 = sand.u32 %s65, 1
        %s541 = scalar_lea.sflag [#allocation10], %s540
        %s542 = sand.u32 %s65, 1
        %s543 = smul.addr %s542, 64
        %s544 = scalar_lea.vmem [#allocation9], %s543
        // Predicated region
        $region77: #{tpu_custom_call.1} parent=75 // pred_check
          %p545 = pneg %p78
        $region78: #{tpu_custom_call.1} parent=75 // pred_check_branch
          %547 = sbr.rel (%p545) target = $region80
        $region79: #{tpu_custom_call.1} parent=75 // pred_region
          %548 = dma.done %s541, 1024
        $region80: #{tpu_custom_call.1} parent=75 // pred_fallthru
          _
        %s549 = sand.u32 %s36, 1
        %s550 = scalar_lea.sflag [#allocation13], %s549
        %s551 = sand.u32 %s97, 1
        %s552 = smul.addr %s551, 64
        %s553 = scalar_lea.vmem [#allocation12], %s552
        // Predicated region
        $region81: #{tpu_custom_call.1} parent=75 // pred_check
          %p554 = pneg %p110
        $region82: #{tpu_custom_call.1} parent=75 // pred_check_branch
          %556 = sbr.rel (%p554) target = $region84
        $region83: #{tpu_custom_call.1} parent=75 // pred_region
          %557 = dma.done %s550, 1024
        $region84: #{tpu_custom_call.1} parent=75 // pred_fallthru
          _
        // Predicated region
        $region85: #{tpu_custom_call.1} parent=75 // pred_check
          %p558 = pneg %p173
        $region86: #{tpu_custom_call.1} parent=75 // pred_check_branch
          %560 = sbr.rel (%p558) target = $region88
        $region87: #{tpu_custom_call.1} parent=75 // pred_region
          %561 = dma.done [#allocation13], 3072
        $region88: #{tpu_custom_call.1} parent=75 // pred_fallthru
          _
        // Predicated region
        $region89: #{tpu_custom_call.1} parent=75 // pred_check
          %p562 = pneg %p215
        $region90: #{tpu_custom_call.1} parent=75 // pred_check_branch
          %564 = sbr.rel (%p562) target = $region92
        $region91: #{tpu_custom_call.1} parent=75 // pred_region
          %565 = dma.done [#allocation16], 1024
        $region92: #{tpu_custom_call.1} parent=75 // pred_fallthru
          _
        // Predicated region
        $region93: #{tpu_custom_call.1} parent=75 // pred_check
          %p566 = pneg %p299
        $region94: #{tpu_custom_call.1} parent=75 // pred_check_branch
          %568 = sbr.rel (%p566) target = $region96
        $region95: #{tpu_custom_call.1} parent=75 // pred_region
          %569 = dma.done [#allocation16], 1024
        $region96: #{tpu_custom_call.1} parent=75 // pred_fallthru
          _
        // Predicated region
        $region97: #{tpu_custom_call.1} parent=75 // pred_check
          %p570 = pneg %p341
        $region98: #{tpu_custom_call.1} parent=75 // pred_check_branch
          %572 = sbr.rel (%p570) target = $region100
        $region99: #{tpu_custom_call.1} parent=75 // pred_region
          %573 = dma.done [#allocation19], 1024
        $region100: #{tpu_custom_call.1} parent=75 // pred_fallthru
          _
        %s574 = sand.u32 %s65, 1
        %s575 = scalar_lea.sflag [#allocation10], %s574
        %s576 = sand.u32 %s65, 1
        %s577 = smul.addr %s576, 64
        %s578 = scalar_lea.vmem [#allocation9], %s577
        %p579 = pneg %p78
        %p580 = pneg %p75
        %s581 = sand.u32 %s36, 1
        %s582 = scalar_lea.sflag [#allocation13], %s581
        %s583 = sand.u32 %s97, 1
        %s584 = smul.addr %s583, 64
        %s585 = scalar_lea.vmem [#allocation12], %s584
        %p586 = pneg %p110
        %p587 = pneg %p107
        %p588 = pneg %p131
        %p589 = pneg %p128
        %p590 = pneg %p152
        %p591 = pneg %p149
        %p592 = pneg %p173
        %p593 = pneg %p170
        %p594 = pneg %p194
        %p595 = pneg %p191
        %p596 = pneg %p215
        %p597 = pneg %p212
        %p598 = pneg %p236
        %p599 = pneg %p233
        %p600 = pneg %p257
        %p601 = pneg %p254
        %p602 = pneg %p278
        %p603 = pneg %p275
        %p604 = pneg %p299
        %p605 = pneg %p296
        %p606 = pneg %p320
        %p607 = pneg %p317
        %p608 = pneg %p341
        %p609 = pneg %p338
        %p610 = pneg %p362
        %p611 = pneg %p359
        %p612 = pneg %p390
        %p613 = pneg %p387
        %s614 = sand.u32 %s377, 1
        %s615 = scalar_lea.sflag [#allocation11], %s614
        %s616 = sand.u32 %s377, 1
        %s617 = smul.addr %s616, 128
        %s618 = scalar_lea.vmem [#allocation20], %s617
        %s619 = smul.u32 16, %s42
        %p620 = scmp.eq.s32.totalorder %s42, 0
        %s621 = scalar_select %p620, %s43, 0
        %s622 = smul.u32 16, %s621
        %s623 = smul.u32 16, %s42
        %p625 = scmp.eq.s32.totalorder %s42, 0
        // Predicated region
        $region101: #{tpu_custom_call.1} parent=75 // pred_check
          %p626 = pneg %p625
        $region102: #{tpu_custom_call.1} parent=75 // pred_check_branch
          %628 = sbr.rel (%p626) target = $region104
        $region103: #{tpu_custom_call.1} parent=75 // pred_region
          %v629 = vld [vmem:[%s553] sm:$0xf]
          %v630 = vld [vmem:[%s553 + $0x4] sm:$0xf]
          %v631 = vld [vmem:[%s553 + $0x8] sm:$0xf]
          %v632 = vld [vmem:[%s553 + $0xc] sm:$0xf]
          %v633 = vld [vmem:[%s553 + $0x10] sm:$0xf]
          %v634 = vld [vmem:[%s553 + $0x14] sm:$0xf]
          %v635 = vld [vmem:[%s553 + $0x18] sm:$0xf]
          %v636 = vld [vmem:[%s553 + $0x1c] sm:$0xf]
          %v637 = vld [vmem:[%s553 + $0x20] sm:$0xf]
          %v638 = vld [vmem:[%s553 + $0x24] sm:$0xf]
          %v639 = vld [vmem:[%s553 + $0x28] sm:$0xf]
          %v640 = vld [vmem:[%s553 + $0x2c] sm:$0xf]
          %v641 = vld [vmem:[%s553 + $0x30] sm:$0xf]
          %v642 = vld [vmem:[%s553 + $0x34] sm:$0xf]
          %v643 = vld [vmem:[%s553 + $0x38] sm:$0xf]
          %v644 = vld [vmem:[%s553 + $0x3c] sm:$0xf]
          %v645 = vunpack.c.l.bf16 %v629
          %v646 = vunpack.c.l.bf16 %v630
          %v647 = vunpack.c.l.bf16 %v631
          %v648 = vunpack.c.l.bf16 %v632
          %v649 = vunpack.c.l.bf16 %v633
          %v650 = vunpack.c.l.bf16 %v634
          %v651 = vunpack.c.l.bf16 %v635
          %v652 = vunpack.c.l.bf16 %v636
          %v653 = vunpack.c.l.bf16 %v637
          %v654 = vunpack.c.l.bf16 %v638
          %v655 = vunpack.c.l.bf16 %v639
          %v656 = vunpack.c.l.bf16 %v640
          %v657 = vunpack.c.l.bf16 %v641
          %v658 = vunpack.c.l.bf16 %v642
          %v659 = vunpack.c.l.bf16 %v643
          %v660 = vunpack.c.l.bf16 %v644
          %v661 = vld [vmem:[%s2] sm:$0x1]
          %v662 = vld [vmem:[%s3] sm:$0x1]
          %663 = vadd.xlane.f32.xlu0 %v645
          %v664 = vpop.xlane.xlu0 %663
          %665 = vadd.xlane.f32.xlu0 %v646
          %v666 = vpop.xlane.xlu0 %665
          %667 = vadd.xlane.f32.xlu0 %v647
          %v668 = vpop.xlane.xlu0 %667
          %669 = vadd.xlane.f32.xlu0 %v648
          %v670 = vpop.xlane.xlu0 %669
          %671 = vadd.xlane.f32.xlu0 %v649
          %v672 = vpop.xlane.xlu0 %671
          %673 = vadd.xlane.f32.xlu0 %v650
          %v674 = vpop.xlane.xlu0 %673
          %675 = vadd.xlane.f32.xlu0 %v651
          %v676 = vpop.xlane.xlu0 %675
          %677 = vadd.xlane.f32.xlu0 %v652
          %v678 = vpop.xlane.xlu0 %677
          %679 = vadd.xlane.f32.xlu0 %v653
          %v680 = vpop.xlane.xlu0 %679
          %681 = vadd.xlane.f32.xlu0 %v654
          %v682 = vpop.xlane.xlu0 %681
          %683 = vadd.xlane.f32.xlu0 %v655
          %v684 = vpop.xlane.xlu0 %683
          %685 = vadd.xlane.f32.xlu0 %v656
          %v686 = vpop.xlane.xlu0 %685
          %687 = vadd.xlane.f32.xlu0 %v657
          %v688 = vpop.xlane.xlu0 %687
          %689 = vadd.xlane.f32.xlu0 %v658
          %v690 = vpop.xlane.xlu0 %689
          %691 = vadd.xlane.f32.xlu0 %v659
          %v692 = vpop.xlane.xlu0 %691
          %693 = vadd.xlane.f32.xlu0 %v660
          %v694 = vpop.xlane.xlu0 %693
          %v695 = vrcp.pop 128.0
          %v696 = vmul.f32 %v664, %v695
          %v697 = vmul.f32 %v666, %v695
          %v698 = vmul.f32 %v668, %v695
          %v699 = vmul.f32 %v670, %v695
          %v700 = vmul.f32 %v672, %v695
          %v701 = vmul.f32 %v674, %v695
          %v702 = vmul.f32 %v676, %v695
          %v703 = vmul.f32 %v678, %v695
          %v704 = vmul.f32 %v680, %v695
          %v705 = vmul.f32 %v682, %v695
          %v706 = vmul.f32 %v684, %v695
          %v707 = vmul.f32 %v686, %v695
          %v708 = vmul.f32 %v688, %v695
          %v709 = vmul.f32 %v690, %v695
          %v710 = vmul.f32 %v692, %v695
          %v711 = vmul.f32 %v694, %v695
          %v712 = vsub.f32 %v645, %v696
          %v713 = vsub.f32 %v646, %v697
          %v714 = vsub.f32 %v647, %v698
          %v715 = vsub.f32 %v648, %v699
          %v716 = vsub.f32 %v649, %v700
          %v717 = vsub.f32 %v650, %v701
          %v718 = vsub.f32 %v651, %v702
          %v719 = vsub.f32 %v652, %v703
          %v720 = vsub.f32 %v653, %v704
          %v721 = vsub.f32 %v654, %v705
          %v722 = vsub.f32 %v655, %v706
          %v723 = vsub.f32 %v656, %v707
          %v724 = vsub.f32 %v657, %v708
          %v725 = vsub.f32 %v658, %v709
          %v726 = vsub.f32 %v659, %v710
          %v727 = vsub.f32 %v660, %v711
          %v728 = vmul.f32 %v712, %v712
          %v729 = vmul.f32 %v713, %v713
          %v730 = vmul.f32 %v714, %v714
          %v731 = vmul.f32 %v715, %v715
          %v732 = vmul.f32 %v716, %v716
          %v733 = vmul.f32 %v717, %v717
          %v734 = vmul.f32 %v718, %v718
          %v735 = vmul.f32 %v719, %v719
          %v736 = vmul.f32 %v720, %v720
          %v737 = vmul.f32 %v721, %v721
          %v738 = vmul.f32 %v722, %v722
          %v739 = vmul.f32 %v723, %v723
          %v740 = vmul.f32 %v724, %v724
          %v741 = vmul.f32 %v725, %v725
          %v742 = vmul.f32 %v726, %v726
          %v743 = vmul.f32 %v727, %v727
          %744 = vadd.xlane.f32.xlu0 %v728
          %v745 = vpop.xlane.xlu0 %744
          %746 = vadd.xlane.f32.xlu0 %v729
          %v747 = vpop.xlane.xlu0 %746
          %748 = vadd.xlane.f32.xlu0 %v730
          %v749 = vpop.xlane.xlu0 %748
          %750 = vadd.xlane.f32.xlu0 %v731
          %v751 = vpop.xlane.xlu0 %750
          %752 = vadd.xlane.f32.xlu0 %v732
          %v753 = vpop.xlane.xlu0 %752
          %754 = vadd.xlane.f32.xlu0 %v733
          %v755 = vpop.xlane.xlu0 %754
          %756 = vadd.xlane.f32.xlu0 %v734
          %v757 = vpop.xlane.xlu0 %756
          %758 = vadd.xlane.f32.xlu0 %v735
          %v759 = vpop.xlane.xlu0 %758
          %760 = vadd.xlane.f32.xlu0 %v736
          %v761 = vpop.xlane.xlu0 %760
          %762 = vadd.xlane.f32.xlu0 %v737
          %v763 = vpop.xlane.xlu0 %762
          %764 = vadd.xlane.f32.xlu0 %v738
          %v765 = vpop.xlane.xlu0 %764
          %766 = vadd.xlane.f32.xlu0 %v739
          %v767 = vpop.xlane.xlu0 %766
          %768 = vadd.xlane.f32.xlu0 %v740
          %v769 = vpop.xlane.xlu0 %768
          %770 = vadd.xlane.f32.xlu0 %v741
          %v771 = vpop.xlane.xlu0 %770
          %772 = vadd.xlane.f32.xlu0 %v742
          %v773 = vpop.xlane.xlu0 %772
          %774 = vadd.xlane.f32.xlu0 %v743
          %v775 = vpop.xlane.xlu0 %774
          %v776 = vmul.f32 %v745, %v695
          %v777 = vmul.f32 %v747, %v695
          %v778 = vmul.f32 %v749, %v695
          %v779 = vmul.f32 %v751, %v695
          %v780 = vmul.f32 %v753, %v695
          %v781 = vmul.f32 %v755, %v695
          %v782 = vmul.f32 %v757, %v695
          %v783 = vmul.f32 %v759, %v695
          %v784 = vmul.f32 %v761, %v695
          %v785 = vmul.f32 %v763, %v695
          %v786 = vmul.f32 %v765, %v695
          %v787 = vmul.f32 %v767, %v695
          %v788 = vmul.f32 %v769, %v695
          %v789 = vmul.f32 %v771, %v695
          %v790 = vmul.f32 %v773, %v695
          %v791 = vmul.f32 %v775, %v695
          %v792 = vadd.f32 %v776, 1e-05
          %v793 = vadd.f32 %v777, 1e-05
          %v794 = vadd.f32 %v778, 1e-05
          %v795 = vadd.f32 %v779, 1e-05
          %v796 = vadd.f32 %v780, 1e-05
          %v797 = vadd.f32 %v781, 1e-05
          %v798 = vadd.f32 %v782, 1e-05
          %v799 = vadd.f32 %v783, 1e-05
          %v800 = vadd.f32 %v784, 1e-05
          %v801 = vadd.f32 %v785, 1e-05
          %v802 = vadd.f32 %v786, 1e-05
          %v803 = vadd.f32 %v787, 1e-05
          %v804 = vadd.f32 %v788, 1e-05
          %v805 = vadd.f32 %v789, 1e-05
          %v806 = vadd.f32 %v790, 1e-05
          %v807 = vadd.f32 %v791, 1e-05
          %v808 = vrsqrt.pop %v792
          %v809 = vrsqrt.pop %v793
          %v810 = vrsqrt.pop %v794
          %v811 = vrsqrt.pop %v795
          %v812 = vrsqrt.pop %v796
          %v813 = vrsqrt.pop %v797
          %v814 = vrsqrt.pop %v798
          %v815 = vrsqrt.pop %v799
          %v816 = vrsqrt.pop %v800
          %v817 = vrsqrt.pop %v801
          %v818 = vrsqrt.pop %v802
          %v819 = vrsqrt.pop %v803
          %v820 = vrsqrt.pop %v804
          %v821 = vrsqrt.pop %v805
          %v822 = vrsqrt.pop %v806
          %v823 = vrsqrt.pop %v807
          %v824 = vmul.f32 %v712, %v808
          %v825 = vmul.f32 %v713, %v809
          %v826 = vmul.f32 %v714, %v810
          %v827 = vmul.f32 %v715, %v811
          %v828 = vmul.f32 %v716, %v812
          %v829 = vmul.f32 %v717, %v813
          %v830 = vmul.f32 %v718, %v814
          %v831 = vmul.f32 %v719, %v815
          %v832 = vmul.f32 %v720, %v816
          %v833 = vmul.f32 %v721, %v817
          %v834 = vmul.f32 %v722, %v818
          %v835 = vmul.f32 %v723, %v819
          %v836 = vmul.f32 %v724, %v820
          %v837 = vmul.f32 %v725, %v821
          %v838 = vmul.f32 %v726, %v822
          %v839 = vmul.f32 %v727, %v823
          %v841 = vlaneseq
          %v842 = vshrl.u32 %v841, 7
          %v843 = vsub.s32 0, %v842
          %v844 = vrot.slane %v661, %v843
          %v846 = vmul.f32 %v824, %v844
          %v847 = vmul.f32 %v825, %v844
          %v848 = vmul.f32 %v826, %v844
          %v849 = vmul.f32 %v827, %v844
          %v850 = vmul.f32 %v828, %v844
          %v851 = vmul.f32 %v829, %v844
          %v852 = vmul.f32 %v830, %v844
          %v853 = vmul.f32 %v831, %v844
          %v854 = vmul.f32 %v832, %v844
          %v855 = vmul.f32 %v833, %v844
          %v856 = vmul.f32 %v834, %v844
          %v857 = vmul.f32 %v835, %v844
          %v858 = vmul.f32 %v836, %v844
          %v859 = vmul.f32 %v837, %v844
          %v860 = vmul.f32 %v838, %v844
          %v861 = vmul.f32 %v839, %v844
          %v863 = vlaneseq
          %v864 = vshrl.u32 %v863, 7
          %v865 = vsub.s32 0, %v864
          %v866 = vrot.slane %v662, %v865
          %v868 = vadd.f32 %v846, %v866
          %v869 = vadd.f32 %v847, %v866
          %v870 = vadd.f32 %v848, %v866
          %v871 = vadd.f32 %v849, %v866
          %v872 = vadd.f32 %v850, %v866
          %v873 = vadd.f32 %v851, %v866
          %v874 = vadd.f32 %v852, %v866
          %v875 = vadd.f32 %v853, %v866
          %v876 = vadd.f32 %v854, %v866
          %v877 = vadd.f32 %v855, %v866
          %v878 = vadd.f32 %v856, %v866
          %v879 = vadd.f32 %v857, %v866
          %v880 = vadd.f32 %v858, %v866
          %v881 = vadd.f32 %v859, %v866
          %v882 = vadd.f32 %v860, %v866
          %v883 = vadd.f32 %v861, %v866
          %v884 = vpack.c.bf16 %v869, %v868
          %v885 = vpack.c.bf16 %v871, %v870
          %v886 = vpack.c.bf16 %v873, %v872
          %v887 = vpack.c.bf16 %v875, %v874
          %v888 = vpack.c.bf16 %v877, %v876
          %v889 = vpack.c.bf16 %v879, %v878
          %v890 = vpack.c.bf16 %v881, %v880
          %v891 = vpack.c.bf16 %v883, %v882
          %v892 = vld [vmem:[#allocation14] sm:$0xff]
          %v893 = vld [vmem:[#allocation14 + $0x8] sm:$0xf]
          %v894 = vld [vmem:[#allocation14 + $0xc] sm:$0xff]
          %v895 = vld [vmem:[#allocation14 + $0x14] sm:$0xf]
          %v896 = vld [vmem:[#allocation14 + $0x18] sm:$0xff]
          %v897 = vld [vmem:[#allocation14 + $0x20] sm:$0xf]
          %v898 = vld [vmem:[#allocation14 + $0x24] sm:$0xff]
          %v899 = vld [vmem:[#allocation14 + $0x2c] sm:$0xf]
          %v900 = vld [vmem:[#allocation14 + $0x30] sm:$0xff]
          %v901 = vld [vmem:[#allocation14 + $0x38] sm:$0xf]
          %v902 = vld [vmem:[#allocation14 + $0x3c] sm:$0xff]
          %v903 = vld [vmem:[#allocation14 + $0x44] sm:$0xf]
          %v904 = vld [vmem:[#allocation14 + $0x48] sm:$0xff]
          %v905 = vld [vmem:[#allocation14 + $0x50] sm:$0xf]
          %v906 = vld [vmem:[#allocation14 + $0x54] sm:$0xff]
          %v907 = vld [vmem:[#allocation14 + $0x5c] sm:$0xf]
          %v908 = vld [vmem:[#allocation14 + $0x60] sm:$0xff]
          %v909 = vld [vmem:[#allocation14 + $0x68] sm:$0xf]
          %v910 = vld [vmem:[#allocation14 + $0x6c] sm:$0xff]
          %v911 = vld [vmem:[#allocation14 + $0x74] sm:$0xf]
          %v912 = vld [vmem:[#allocation14 + $0x78] sm:$0xff]
          %v913 = vld [vmem:[#allocation14 + $0x80] sm:$0xf]
          %v914 = vld [vmem:[#allocation14 + $0x84] sm:$0xff]
          %v915 = vld [vmem:[#allocation14 + $0x8c] sm:$0xf]
          %v916 = vld [vmem:[#allocation14 + $0x90] sm:$0xff]
          %v917 = vld [vmem:[#allocation14 + $0x98] sm:$0xf]
          %v918 = vld [vmem:[#allocation14 + $0x9c] sm:$0xff]
          %v919 = vld [vmem:[#allocation14 + $0xa4] sm:$0xf]
          %v920 = vld [vmem:[#allocation14 + $0xa8] sm:$0xff]
          %v921 = vld [vmem:[#allocation14 + $0xb0] sm:$0xf]
          %v922 = vld [vmem:[#allocation14 + $0xb4] sm:$0xff]
          %v923 = vld [vmem:[#allocation14 + $0xbc] sm:$0xf]
          %v924 = vld [vmem:[%s5] sm:$0x7]
          %v926 = vlaneseq
          %v927 = vshrl.u32 %v926, 7
          %v928 = vsub.s32 0, %v927
          %v929 = vrot.slane %v924, %v928
          %v930 = vlaneseq
          %v931 = vshrl.u32 %v930, 7
          %v932 = vsub.s32 1, %v931
          %v933 = vrot.slane %v924, %v932
          %v934 = vlaneseq
          %v935 = vshrl.u32 %v934, 7
          %v936 = vsub.s32 2, %v935
          %v937 = vrot.slane %v924, %v936
          %v973 = vunpack.c.l.b16 %v892
          %v974 = vunpack.c.h.b16 %v892
          %v975 = vunpack.c.l.b16 %v893
          %v976 = vunpack.c.l.b16 %v894
          %v977 = vunpack.c.h.b16 %v894
          %v978 = vunpack.c.l.b16 %v895
          %v979 = vunpack.c.l.b16 %v896
          %v980 = vunpack.c.h.b16 %v896
          %v981 = vunpack.c.l.b16 %v897
          %v982 = vunpack.c.l.b16 %v898
          %v983 = vunpack.c.h.b16 %v898
          %v984 = vunpack.c.l.b16 %v899
          %v985 = vunpack.c.l.b16 %v900
          %v986 = vunpack.c.h.b16 %v900
          %v987 = vunpack.c.l.b16 %v901
          %v988 = vunpack.c.l.b16 %v902
          %v989 = vunpack.c.h.b16 %v902
          %v990 = vunpack.c.l.b16 %v903
          %v991 = vunpack.c.l.b16 %v904
          %v992 = vunpack.c.h.b16 %v904
          %v993 = vunpack.c.l.b16 %v905
          %v994 = vunpack.c.l.b16 %v906
          %v995 = vunpack.c.h.b16 %v906
          %v996 = vunpack.c.l.b16 %v907
          %v997 = vunpack.c.l.b16 %v908
          %v998 = vunpack.c.h.b16 %v908
          %v999 = vunpack.c.l.b16 %v909
          %v1000 = vunpack.c.l.b16 %v910
          %v1001 = vunpack.c.h.b16 %v910
          %v1002 = vunpack.c.l.b16 %v911
          %v1003 = vunpack.c.l.b16 %v912
          %v1004 = vunpack.c.h.b16 %v912
          %v1005 = vunpack.c.l.b16 %v913
          %v1006 = vunpack.c.l.b16 %v914
          %v1007 = vunpack.c.h.b16 %v914
          %v1008 = vunpack.c.l.b16 %v915
          %v1009 = vunpack.c.l.b16 %v916
          %v1010 = vunpack.c.h.b16 %v916
          %v1011 = vunpack.c.l.b16 %v917
          %v1012 = vunpack.c.l.b16 %v918
          %v1013 = vunpack.c.h.b16 %v918
          %v1014 = vunpack.c.l.b16 %v919
          %v1015 = vunpack.c.l.b16 %v920
          %v1016 = vunpack.c.h.b16 %v920
          %v1017 = vunpack.c.l.b16 %v921
          %v1018 = vunpack.c.l.b16 %v922
          %v1019 = vunpack.c.h.b16 %v922
          %v1020 = vunpack.c.l.b16 %v923
          %v1021 = vpack.c.b16 %v976, %v973
          %v1022 = vpack.c.b16 %v977, %v974
          %v1023 = vpack.c.b16 %v978, %v975
          %v1024 = vpack.c.b16 %v982, %v979
          %v1025 = vpack.c.b16 %v983, %v980
          %v1026 = vpack.c.b16 %v984, %v981
          %v1027 = vpack.c.b16 %v988, %v985
          %v1028 = vpack.c.b16 %v989, %v986
          %v1029 = vpack.c.b16 %v990, %v987
          %v1030 = vpack.c.b16 %v994, %v991
          %v1031 = vpack.c.b16 %v995, %v992
          %v1032 = vpack.c.b16 %v996, %v993
          %v1033 = vpack.c.b16 %v1000, %v997
          %v1034 = vpack.c.b16 %v1001, %v998
          %v1035 = vpack.c.b16 %v1002, %v999
          %v1036 = vpack.c.b16 %v1006, %v1003
          %v1037 = vpack.c.b16 %v1007, %v1004
          %v1038 = vpack.c.b16 %v1008, %v1005
          %v1039 = vpack.c.b16 %v1012, %v1009
          %v1040 = vpack.c.b16 %v1013, %v1010
          %v1041 = vpack.c.b16 %v1014, %v1011
          %v1042 = vpack.c.b16 %v1018, %v1015
          %v1043 = vpack.c.b16 %v1019, %v1016
          %v1044 = vpack.c.b16 %v1020, %v1017
          %1069 = vmatprep.subr.bf16.mxu0 %v1022
          %1070 = vmatpush1.bf16.msra.mxu0 %v1021
          %1071 = vmatprep.subr.bf16.mxu0 %v1025
          %1072 = vmatpush1.bf16.msra.mxu0 %v1024
          %1073 = vmatprep.subr.bf16.mxu0 %v1028
          %1074 = vmatpush1.bf16.msra.mxu0 %v1027
          %1075 = vmatprep.subr.bf16.mxu0 %v1031
          %1076 = vmatpush1.bf16.msra.mxu0 %v1030
          %1077 = vmatprep.subr.bf16.mxu0 %v1034
          %1078 = vmatpush1.bf16.msra.mxu0 %v1033
          %1079 = vmatprep.subr.bf16.mxu0 %v1037
          %1080 = vmatpush1.bf16.msra.mxu0 %v1036
          %1081 = vmatprep.subr.bf16.mxu0 %v1040
          %1082 = vmatpush1.bf16.msra.mxu0 %v1039
          %1083 = vmatprep.subr.bf16.mxu0 %v1043
          %1084 = vmatpush1.bf16.msra.mxu0 %v1042
          %1085 = vmatprep.subr.bf16.mxu0 0
          %1086 = vmatpush1.bf16.msra.mxu0 0
          %1087 = vmatprep.subr.bf16.mxu0 0
          %1088 = vmatpush1.bf16.msra.mxu0 0
          %1089 = vmatprep.subr.bf16.mxu0 0
          %1090 = vmatpush1.bf16.msra.mxu0 0
          %1091 = vmatprep.subr.bf16.mxu0 0
          %1092 = vmatpush1.bf16.msra.mxu0 0
          %1093 = vmatprep.subr.bf16.mxu0 0
          %1094 = vmatpush1.bf16.msra.mxu0 0
          %1095 = vmatprep.subr.bf16.mxu0 0
          %1096 = vmatpush1.bf16.msra.mxu0 0
          %1097 = vmatprep.subr.bf16.mxu0 0
          %1098 = vmatpush1.bf16.msra.mxu0 0
          %1099 = vmatprep.subr.bf16.mxu0 0
          %1100 = vmatpush1.bf16.msra.mxu0 0
          %1101 = vmatprep.mubr.bf16.mxu0 0
          %1102 = vmatmul.mubr.bf16.gmra.mrb[0].mxu0 %v884
          %v1103 = vpop.f32.mrb[0].mxu0
          %v1104 = vadd.f32 %v929, %v1103
          %v1105 = vpop.f32.mrb[0].mxu0
          %v1106 = vadd.f32 %v933, %v1105
          %v1107 = vpop.f32.mrb[0].mxu0
          %v1108 = vadd.f32 %v929, %v1107
          %v1109 = vpop.f32.mrb[0].mxu0
          %v1110 = vadd.f32 %v933, %v1109
          %1111 = vmatprep.mubr.bf16.mxu0 0
          %1112 = vmatmul.mubr.bf16.gmra.mrb[0].mxu0 %v885
          %v1113 = vpop.f32.mrb[0].mxu0
          %v1114 = vadd.f32 %v929, %v1113
          %v1115 = vpop.f32.mrb[0].mxu0
          %v1116 = vadd.f32 %v933, %v1115
          %v1117 = vpop.f32.mrb[0].mxu0
          %v1118 = vadd.f32 %v929, %v1117
          %v1119 = vpop.f32.mrb[0].mxu0
          %v1120 = vadd.f32 %v933, %v1119
          %1121 = vmatprep.mubr.bf16.mxu0 0
          %1122 = vmatmul.mubr.bf16.gmra.mrb[0].mxu0 %v886
          %v1123 = vpop.f32.mrb[0].mxu0
          %v1124 = vadd.f32 %v929, %v1123
          %v1125 = vpop.f32.mrb[0].mxu0
          %v1126 = vadd.f32 %v933, %v1125
          %v1127 = vpop.f32.mrb[0].mxu0
          %v1128 = vadd.f32 %v929, %v1127
          %v1129 = vpop.f32.mrb[0].mxu0
          %v1130 = vadd.f32 %v933, %v1129
          %1131 = vmatprep.mubr.bf16.mxu0 0
          %1132 = vmatmul.mubr.bf16.gmra.mrb[0].mxu0 %v887
          %v1133 = vpop.f32.mrb[0].mxu0
          %v1134 = vadd.f32 %v929, %v1133
          %v1135 = vpop.f32.mrb[0].mxu0
          %v1136 = vadd.f32 %v933, %v1135
          %v1137 = vpop.f32.mrb[0].mxu0
          %v1138 = vadd.f32 %v929, %v1137
          %v1139 = vpop.f32.mrb[0].mxu0
          %v1140 = vadd.f32 %v933, %v1139
          %1141 = vmatprep.mubr.bf16.mxu0 0
          %1142 = vmatmul.mubr.bf16.gmra.mrb[0].mxu0 %v888
          %v1143 = vpop.f32.mrb[0].mxu0
          %v1144 = vadd.f32 %v929, %v1143
          %v1145 = vpop.f32.mrb[0].mxu0
          %v1146 = vadd.f32 %v933, %v1145
          %v1147 = vpop.f32.mrb[0].mxu0
          %v1148 = vadd.f32 %v929, %v1147
          %v1149 = vpop.f32.mrb[0].mxu0
          %v1150 = vadd.f32 %v933, %v1149
          %1151 = vmatprep.mubr.bf16.mxu0 0
          %1152 = vmatmul.mubr.bf16.gmra.mrb[0].mxu0 %v889
          %v1153 = vpop.f32.mrb[0].mxu0
          %v1154 = vadd.f32 %v929, %v1153
          %v1155 = vpop.f32.mrb[0].mxu0
          %v1156 = vadd.f32 %v933, %v1155
          %v1157 = vpop.f32.mrb[0].mxu0
          %v1158 = vadd.f32 %v929, %v1157
          %v1159 = vpop.f32.mrb[0].mxu0
          %v1160 = vadd.f32 %v933, %v1159
          %1161 = vmatprep.mubr.bf16.mxu0 0
          %1162 = vmatmul.mubr.bf16.gmra.mrb[0].mxu0 %v890
          %v1163 = vpop.f32.mrb[0].mxu0
          %v1164 = vadd.f32 %v929, %v1163
          %v1165 = vpop.f32.mrb[0].mxu0
          %v1166 = vadd.f32 %v933, %v1165
          %v1167 = vpop.f32.mrb[0].mxu0
          %v1168 = vadd.f32 %v929, %v1167
          %v1169 = vpop.f32.mrb[0].mxu0
          %v1170 = vadd.f32 %v933, %v1169
          %1171 = vmatprep.mubr.bf16.mxu0 0
          %1172 = vmatmul.mubr.bf16.gmra.mrb[0].mxu0 %v891
          %v1173 = vpop.f32.mrb[0].mxu0
          %v1174 = vadd.f32 %v929, %v1173
          %v1175 = vpop.f32.mrb[0].mxu0
          %v1176 = vadd.f32 %v933, %v1175
          %v1177 = vpop.f32.mrb[0].mxu0
          %v1178 = vadd.f32 %v929, %v1177
          %v1179 = vpop.f32.mrb[0].mxu0
          %v1180 = vadd.f32 %v933, %v1179
          %1181 = vdwg.mxu0
          %1182 = vmatprep.subr.bf16.mxu0 0
          %1183 = vmatpush1.bf16.msra.mxu0 %v1023
          %1184 = vmatprep.subr.bf16.mxu0 0
          %1185 = vmatpush1.bf16.msra.mxu0 %v1026
          %1186 = vmatprep.subr.bf16.mxu0 0
          %1187 = vmatpush1.bf16.msra.mxu0 %v1029
          %1188 = vmatprep.subr.bf16.mxu0 0
          %1189 = vmatpush1.bf16.msra.mxu0 %v1032
          %1190 = vmatprep.subr.bf16.mxu0 0
          %1191 = vmatpush1.bf16.msra.mxu0 %v1035
          %1192 = vmatprep.subr.bf16.mxu0 0
          %1193 = vmatpush1.bf16.msra.mxu0 %v1038
          %1194 = vmatprep.subr.bf16.mxu0 0
          %1195 = vmatpush1.bf16.msra.mxu0 %v1041
          %1196 = vmatprep.subr.bf16.mxu0 0
          %1197 = vmatpush1.bf16.msra.mxu0 %v1044
          %1198 = vmatprep.subr.bf16.mxu0 0
          %1199 = vmatpush1.bf16.msra.mxu0 0
          %1200 = vmatprep.subr.bf16.mxu0 0
          %1201 = vmatpush1.bf16.msra.mxu0 0
          %1202 = vmatprep.subr.bf16.mxu0 0
          %1203 = vmatpush1.bf16.msra.mxu0 0
          %1204 = vmatprep.subr.bf16.mxu0 0
          %1205 = vmatpush1.bf16.msra.mxu0 0
          %1206 = vmatprep.subr.bf16.mxu0 0
          %1207 = vmatpush1.bf16.msra.mxu0 0
          %1208 = vmatprep.subr.bf16.mxu0 0
          %1209 = vmatpush1.bf16.msra.mxu0 0
          %1210 = vmatprep.subr.bf16.mxu0 0
          %1211 = vmatpush1.bf16.msra.mxu0 0
          %1212 = vmatprep.subr.bf16.mxu0 0
          %1213 = vmatpush1.bf16.msra.mxu0 0
          %1214 = vmatprep.mubr.bf16.mxu0 0
          %1215 = vmatmul.mubr.bf16.gmra.mrb[0].mxu0 %v884
          %v1216 = vpop.f32.mrb[0].mxu0
          %v1217 = vadd.f32 %v937, %v1216
          %v1218 = vpop.f32.mrb[0].mxu0
          %v1219 = vpop.f32.mrb[0].mxu0
          %v1220 = vadd.f32 %v937, %v1219
          %v1221 = vpop.f32.mrb[0].mxu0
          %1222 = vmatprep.mubr.bf16.mxu0 0
          %1223 = vmatmul.mubr.bf16.gmra.mrb[0].mxu0 %v885
          %v1224 = vpop.f32.mrb[0].mxu0
          %v1225 = vadd.f32 %v937, %v1224
          %v1226 = vpop.f32.mrb[0].mxu0
          %v1227 = vpop.f32.mrb[0].mxu0
          %v1228 = vadd.f32 %v937, %v1227
          %v1229 = vpop.f32.mrb[0].mxu0
          %1230 = vmatprep.mubr.bf16.mxu0 0
          %1231 = vmatmul.mubr.bf16.gmra.mrb[0].mxu0 %v886
          %v1232 = vpop.f32.mrb[0].mxu0
          %v1233 = vadd.f32 %v937, %v1232
          %v1234 = vpop.f32.mrb[0].mxu0
          %v1235 = vpop.f32.mrb[0].mxu0
          %v1236 = vadd.f32 %v937, %v1235
          %v1237 = vpop.f32.mrb[0].mxu0
          %1238 = vmatprep.mubr.bf16.mxu0 0
          %1239 = vmatmul.mubr.bf16.gmra.mrb[0].mxu0 %v887
          %v1240 = vpop.f32.mrb[0].mxu0
          %v1241 = vadd.f32 %v937, %v1240
          %v1242 = vpop.f32.mrb[0].mxu0
          %v1243 = vpop.f32.mrb[0].mxu0
          %v1244 = vadd.f32 %v937, %v1243
          %v1245 = vpop.f32.mrb[0].mxu0
          %1246 = vmatprep.mubr.bf16.mxu0 0
          %1247 = vmatmul.mubr.bf16.gmra.mrb[0].mxu0 %v888
          %v1248 = vpop.f32.mrb[0].mxu0
          %v1249 = vadd.f32 %v937, %v1248
          %v1250 = vpop.f32.mrb[0].mxu0
          %v1251 = vpop.f32.mrb[0].mxu0
          %v1252 = vadd.f32 %v937, %v1251
          %v1253 = vpop.f32.mrb[0].mxu0
          %1254 = vmatprep.mubr.bf16.mxu0 0
          %1255 = vmatmul.mubr.bf16.gmra.mrb[0].mxu0 %v889
          %v1256 = vpop.f32.mrb[0].mxu0
          %v1257 = vadd.f32 %v937, %v1256
          %v1258 = vpop.f32.mrb[0].mxu0
          %v1259 = vpop.f32.mrb[0].mxu0
          %v1260 = vadd.f32 %v937, %v1259
          %v1261 = vpop.f32.mrb[0].mxu0
          %1262 = vmatprep.mubr.bf16.mxu0 0
          %1263 = vmatmul.mubr.bf16.gmra.mrb[0].mxu0 %v890
          %v1264 = vpop.f32.mrb[0].mxu0
          %v1265 = vadd.f32 %v937, %v1264
          %v1266 = vpop.f32.mrb[0].mxu0
          %v1267 = vpop.f32.mrb[0].mxu0
          %v1268 = vadd.f32 %v937, %v1267
          %v1269 = vpop.f32.mrb[0].mxu0
          %1270 = vmatprep.mubr.bf16.mxu0 0
          %1271 = vmatmul.mubr.bf16.gmra.mrb[0].mxu0 %v891
          %v1272 = vpop.f32.mrb[0].mxu0
          %v1273 = vadd.f32 %v937, %v1272
          %v1274 = vpop.f32.mrb[0].mxu0
          %v1275 = vpop.f32.mrb[0].mxu0
          %v1276 = vadd.f32 %v937, %v1275
          %v1277 = vpop.f32.mrb[0].mxu0
          %1278 = vdwg.mxu0
          %s1279 = smul.u32 %s43, 4
          %v1280 = vpack.c.bf16 %v1108, %v1104
          %v1281 = vpack.c.bf16 %v1118, %v1114
          %v1282 = vpack.c.bf16 %v1128, %v1124
          %v1283 = vpack.c.bf16 %v1138, %v1134
          %v1284 = vpack.c.bf16 %v1148, %v1144
          %v1285 = vpack.c.bf16 %v1158, %v1154
          %v1286 = vpack.c.bf16 %v1168, %v1164
          %v1287 = vpack.c.bf16 %v1178, %v1174
          %s1288 = smul.u32 %s1279, 8
          %s1289 = smul.addr %s1288, 8
          %s1290 = scalar_lea.vmem [#allocation2], %s1289
          %vm1291 = vcmask 261120
          %1292 = vst.msk [vmem:[%s1290] sm:$0xff] %vm1291, %v1280
          %1293 = vst.msk [vmem:[%s1290 + $0x8] sm:$0xff] %vm1291, %v1281
          %1294 = vst.msk [vmem:[%s1290 + $0x10] sm:$0xff] %vm1291, %v1282
          %1295 = vst.msk [vmem:[%s1290 + $0x18] sm:$0xff] %vm1291, %v1283
          %1296 = vst.msk [vmem:[%s1290 + $0x20] sm:$0xff] %vm1291, %v1284
          %1297 = vst.msk [vmem:[%s1290 + $0x28] sm:$0xff] %vm1291, %v1285
          %1298 = vst.msk [vmem:[%s1290 + $0x30] sm:$0xff] %vm1291, %v1286
          %1299 = vst.msk [vmem:[%s1290 + $0x38] sm:$0xff] %vm1291, %v1287
          %1300 = vxpose.xlu0.b32.start [1/16] %v1106, 128
          %1301 = vxpose.xlu0.b32.cont [2/16] %v1110, 128
          %1302 = vxpose.xlu0.b32.cont [3/16] %v1116, 128
          %1303 = vxpose.xlu0.b32.cont [4/16] %v1120, 128
          %1304 = vxpose.xlu0.b32.cont [5/16] %v1126, 128
          %1305 = vxpose.xlu0.b32.cont [6/16] %v1130, 128
          %1306 = vxpose.xlu0.b32.cont [7/16] %v1136, 128
          %1307 = vxpose.xlu0.b32.cont [8/16] %v1140, 128
          %1308 = vxpose.xlu0.b32.cont [9/16] %v1146, 128
          %1309 = vxpose.xlu0.b32.cont [10/16] %v1150, 128
          %1310 = vxpose.xlu0.b32.cont [11/16] %v1156, 128
          %1311 = vxpose.xlu0.b32.cont [12/16] %v1160, 128
          %1312 = vxpose.xlu0.b32.cont [13/16] %v1166, 128
          %1313 = vxpose.xlu0.b32.cont [14/16] %v1170, 128
          %1314 = vxpose.xlu0.b32.cont [15/16] %v1176, 128
          %1315 = vxpose.xlu0.b32.end [16/16] %v1180, 128
          %v1316 = vpop.trf.xlu0
          %v1317 = vpop.trf.xlu0
          %v1318 = vpop.trf.xlu0
          %v1319 = vpop.trf.xlu0
          %v1320 = vpop.trf.xlu0
          %v1321 = vpop.trf.xlu0
          %v1322 = vpop.trf.xlu0
          %v1323 = vpop.trf.xlu0
          %v1324 = vpop.trf.xlu0
          %v1325 = vpop.trf.xlu0
          %v1326 = vpop.trf.xlu0
          %v1327 = vpop.trf.xlu0
          %v1328 = vpop.trf.xlu0
          %v1329 = vpop.trf.xlu0
          %v1330 = vpop.trf.xlu0
          %v1331 = vpop.trf.xlu0
          %v1332 = vpack.c.bf16 %v1317, %v1316
          %v1333 = vpack.c.bf16 %v1319, %v1318
          %s1334 = smul.u32 %s1279, 2
          %s1335 = smul.addr %s1334, 8
          %s1336 = scalar_lea.vmem [#allocation3], %s1335
          %1337 = vst [vmem:[%s1336] sm:$0xff] %v1332
          %1338 = vst [vmem:[%s1336 + $0x8] sm:$0xff] %v1333
          %v1339 = vpack.c.bf16 %v1220, %v1217
          %v1340 = vpack.c.bf16 %v1228, %v1225
          %v1341 = vpack.c.bf16 %v1236, %v1233
          %v1342 = vpack.c.bf16 %v1244, %v1241
          %v1343 = vpack.c.bf16 %v1252, %v1249
          %v1344 = vpack.c.bf16 %v1260, %v1257
          %v1345 = vpack.c.bf16 %v1268, %v1265
          %v1346 = vpack.c.bf16 %v1276, %v1273
          %s1347 = smul.addr %s1288, 8
          %s1348 = scalar_lea.vmem [#allocation4], %s1347
          %1349 = vst.msk [vmem:[%s1348] sm:$0xff] %vm1291, %v1339
          %1350 = vst.msk [vmem:[%s1348 + $0x8] sm:$0xff] %vm1291, %v1340
          %1351 = vst.msk [vmem:[%s1348 + $0x10] sm:$0xff] %vm1291, %v1341
          %1352 = vst.msk [vmem:[%s1348 + $0x18] sm:$0xff] %vm1291, %v1342
          %1353 = vst.msk [vmem:[%s1348 + $0x20] sm:$0xff] %vm1291, %v1343
          %1354 = vst.msk [vmem:[%s1348 + $0x28] sm:$0xff] %vm1291, %v1344
          %1355 = vst.msk [vmem:[%s1348 + $0x30] sm:$0xff] %vm1291, %v1345
          %1356 = vst.msk [vmem:[%s1348 + $0x38] sm:$0xff] %vm1291, %v1346
          %s1357 = sadd.s32 %s1279, 1
          %1366 = vrot.lane.b32.xlu0 %v1280, 96
          %v1367 = vpop.permute.xlu0 %1366
          %1368 = vrot.lane.b32.xlu0 %v1281, 96
          %v1369 = vpop.permute.xlu0 %1368
          %1370 = vrot.lane.b32.xlu0 %v1282, 96
          %v1371 = vpop.permute.xlu0 %1370
          %1372 = vrot.lane.b32.xlu0 %v1283, 96
          %v1373 = vpop.permute.xlu0 %1372
          %1374 = vrot.lane.b32.xlu0 %v1284, 96
          %v1375 = vpop.permute.xlu0 %1374
          %1376 = vrot.lane.b32.xlu0 %v1285, 96
          %v1377 = vpop.permute.xlu0 %1376
          %1378 = vrot.lane.b32.xlu0 %v1286, 96
          %v1379 = vpop.permute.xlu0 %1378
          %1380 = vrot.lane.b32.xlu0 %v1287, 96
          %v1381 = vpop.permute.xlu0 %1380
          %s1390 = smul.u32 %s1357, 8
          %s1391 = smul.addr %s1390, 8
          %s1392 = scalar_lea.vmem [#allocation2], %s1391
          %1393 = vst.msk [vmem:[%s1392] sm:$0xff] %vm1291, %v1367
          %1394 = vst.msk [vmem:[%s1392 + $0x8] sm:$0xff] %vm1291, %v1369
          %1395 = vst.msk [vmem:[%s1392 + $0x10] sm:$0xff] %vm1291, %v1371
          %1396 = vst.msk [vmem:[%s1392 + $0x18] sm:$0xff] %vm1291, %v1373
          %1397 = vst.msk [vmem:[%s1392 + $0x20] sm:$0xff] %vm1291, %v1375
          %1398 = vst.msk [vmem:[%s1392 + $0x28] sm:$0xff] %vm1291, %v1377
          %1399 = vst.msk [vmem:[%s1392 + $0x30] sm:$0xff] %vm1291, %v1379
          %1400 = vst.msk [vmem:[%s1392 + $0x38] sm:$0xff] %vm1291, %v1381
          %1417 = vrot.lane.b32.xlu0 %v1106, 96
          %v1418 = vpop.permute.xlu0 %1417
          %1419 = vrot.lane.b32.xlu0 %v1110, 96
          %v1420 = vpop.permute.xlu0 %1419
          %1421 = vrot.lane.b32.xlu0 %v1116, 96
          %v1422 = vpop.permute.xlu0 %1421
          %1423 = vrot.lane.b32.xlu0 %v1120, 96
          %v1424 = vpop.permute.xlu0 %1423
          %1425 = vrot.lane.b32.xlu0 %v1126, 96
          %v1426 = vpop.permute.xlu0 %1425
          %1427 = vrot.lane.b32.xlu0 %v1130, 96
          %v1428 = vpop.permute.xlu0 %1427
          %1429 = vrot.lane.b32.xlu0 %v1136, 96
          %v1430 = vpop.permute.xlu0 %1429
          %1431 = vrot.lane.b32.xlu0 %v1140, 96
          %v1432 = vpop.permute.xlu0 %1431
          %1433 = vrot.lane.b32.xlu0 %v1146, 96
          %v1434 = vpop.permute.xlu0 %1433
          %1435 = vrot.lane.b32.xlu0 %v1150, 96
          %v1436 = vpop.permute.xlu0 %1435
          %1437 = vrot.lane.b32.xlu0 %v1156, 96
          %v1438 = vpop.permute.xlu0 %1437
          %1439 = vrot.lane.b32.xlu0 %v1160, 96
          %v1440 = vpop.permute.xlu0 %1439
          %1441 = vrot.lane.b32.xlu0 %v1166, 96
          %v1442 = vpop.permute.xlu0 %1441
          %1443 = vrot.lane.b32.xlu0 %v1170, 96
          %v1444 = vpop.permute.xlu0 %1443
          %1445 = vrot.lane.b32.xlu0 %v1176, 96
          %v1446 = vpop.permute.xlu0 %1445
          %1447 = vrot.lane.b32.xlu0 %v1180, 96
          %v1448 = vpop.permute.xlu0 %1447
          %1465 = vxpose.xlu0.b32.start [1/16] %v1418, 128
          %1466 = vxpose.xlu0.b32.cont [2/16] %v1420, 128
          %1467 = vxpose.xlu0.b32.cont [3/16] %v1422, 128
          %1468 = vxpose.xlu0.b32.cont [4/16] %v1424, 128
          %1469 = vxpose.xlu0.b32.cont [5/16] %v1426, 128
          %1470 = vxpose.xlu0.b32.cont [6/16] %v1428, 128
          %1471 = vxpose.xlu0.b32.cont [7/16] %v1430, 128
          %1472 = vxpose.xlu0.b32.cont [8/16] %v1432, 128
          %1473 = vxpose.xlu0.b32.cont [9/16] %v1434, 128
          %1474 = vxpose.xlu0.b32.cont [10/16] %v1436, 128
          %1475 = vxpose.xlu0.b32.cont [11/16] %v1438, 128
          %1476 = vxpose.xlu0.b32.cont [12/16] %v1440, 128
          %1477 = vxpose.xlu0.b32.cont [13/16] %v1442, 128
          %1478 = vxpose.xlu0.b32.cont [14/16] %v1444, 128
          %1479 = vxpose.xlu0.b32.cont [15/16] %v1446, 128
          %1480 = vxpose.xlu0.b32.end [16/16] %v1448, 128
          %v1481 = vpop.trf.xlu0
          %v1482 = vpop.trf.xlu0
          %v1483 = vpop.trf.xlu0
          %v1484 = vpop.trf.xlu0
          %v1485 = vpop.trf.xlu0
          %v1486 = vpop.trf.xlu0
          %v1487 = vpop.trf.xlu0
          %v1488 = vpop.trf.xlu0
          %v1489 = vpop.trf.xlu0
          %v1490 = vpop.trf.xlu0
          %v1491 = vpop.trf.xlu0
          %v1492 = vpop.trf.xlu0
          %v1493 = vpop.trf.xlu0
          %v1494 = vpop.trf.xlu0
          %v1495 = vpop.trf.xlu0
          %v1496 = vpop.trf.xlu0
          %v1497 = vpack.c.bf16 %v1482, %v1481
          %v1498 = vpack.c.bf16 %v1484, %v1483
          %s1499 = smul.u32 %s1357, 2
          %s1500 = smul.addr %s1499, 8
          %s1501 = scalar_lea.vmem [#allocation3], %s1500
          %1502 = vst [vmem:[%s1501] sm:$0xff] %v1497
          %1503 = vst [vmem:[%s1501 + $0x8] sm:$0xff] %v1498
          %1512 = vrot.lane.b32.xlu0 %v1339, 96
          %v1513 = vpop.permute.xlu0 %1512
          %1514 = vrot.lane.b32.xlu0 %v1340, 96
          %v1515 = vpop.permute.xlu0 %1514
          %1516 = vrot.lane.b32.xlu0 %v1341, 96
          %v1517 = vpop.permute.xlu0 %1516
          %1518 = vrot.lane.b32.xlu0 %v1342, 96
          %v1519 = vpop.permute.xlu0 %1518
          %1520 = vrot.lane.b32.xlu0 %v1343, 96
          %v1521 = vpop.permute.xlu0 %1520
          %1522 = vrot.lane.b32.xlu0 %v1344, 96
          %v1523 = vpop.permute.xlu0 %1522
          %1524 = vrot.lane.b32.xlu0 %v1345, 96
          %v1525 = vpop.permute.xlu0 %1524
          %1526 = vrot.lane.b32.xlu0 %v1346, 96
          %v1527 = vpop.permute.xlu0 %1526
          %s1536 = smul.addr %s1390, 8
          %s1537 = scalar_lea.vmem [#allocation4], %s1536
          %1538 = vst.msk [vmem:[%s1537] sm:$0xff] %vm1291, %v1513
          %1539 = vst.msk [vmem:[%s1537 + $0x8] sm:$0xff] %vm1291, %v1515
          %1540 = vst.msk [vmem:[%s1537 + $0x10] sm:$0xff] %vm1291, %v1517
          %1541 = vst.msk [vmem:[%s1537 + $0x18] sm:$0xff] %vm1291, %v1519
          %1542 = vst.msk [vmem:[%s1537 + $0x20] sm:$0xff] %vm1291, %v1521
          %1543 = vst.msk [vmem:[%s1537 + $0x28] sm:$0xff] %vm1291, %v1523
          %1544 = vst.msk [vmem:[%s1537 + $0x30] sm:$0xff] %vm1291, %v1525
          %1545 = vst.msk [vmem:[%s1537 + $0x38] sm:$0xff] %vm1291, %v1527
          %s1546 = sadd.s32 %s1279, 2
          %1547 = vrot.lane.b32.xlu0 %v1280, 64
          %v1548 = vpop.permute.xlu0 %1547
          %1549 = vrot.lane.b32.xlu0 %v1281, 64
          %v1550 = vpop.permute.xlu0 %1549
          %1551 = vrot.lane.b32.xlu0 %v1282, 64
          %v1552 = vpop.permute.xlu0 %1551
          %1553 = vrot.lane.b32.xlu0 %v1283, 64
          %v1554 = vpop.permute.xlu0 %1553
          %1555 = vrot.lane.b32.xlu0 %v1284, 64
          %v1556 = vpop.permute.xlu0 %1555
          %1557 = vrot.lane.b32.xlu0 %v1285, 64
          %v1558 = vpop.permute.xlu0 %1557
          %1559 = vrot.lane.b32.xlu0 %v1286, 64
          %v1560 = vpop.permute.xlu0 %1559
          %1561 = vrot.lane.b32.xlu0 %v1287, 64
          %v1562 = vpop.permute.xlu0 %1561
          %s1571 = smul.u32 %s1546, 8
          %s1572 = smul.addr %s1571, 8
          %s1573 = scalar_lea.vmem [#allocation2], %s1572
          %1574 = vst.msk [vmem:[%s1573] sm:$0xff] %vm1291, %v1548
          %1575 = vst.msk [vmem:[%s1573 + $0x8] sm:$0xff] %vm1291, %v1550
          %1576 = vst.msk [vmem:[%s1573 + $0x10] sm:$0xff] %vm1291, %v1552
          %1577 = vst.msk [vmem:[%s1573 + $0x18] sm:$0xff] %vm1291, %v1554
          %1578 = vst.msk [vmem:[%s1573 + $0x20] sm:$0xff] %vm1291, %v1556
          %1579 = vst.msk [vmem:[%s1573 + $0x28] sm:$0xff] %vm1291, %v1558
          %1580 = vst.msk [vmem:[%s1573 + $0x30] sm:$0xff] %vm1291, %v1560
          %1581 = vst.msk [vmem:[%s1573 + $0x38] sm:$0xff] %vm1291, %v1562
          %1582 = vrot.lane.b32.xlu0 %v1106, 64
          %v1583 = vpop.permute.xlu0 %1582
          %1584 = vrot.lane.b32.xlu0 %v1110, 64
          %v1585 = vpop.permute.xlu0 %1584
          %1586 = vrot.lane.b32.xlu0 %v1116, 64
          %v1587 = vpop.permute.xlu0 %1586
          %1588 = vrot.lane.b32.xlu0 %v1120, 64
          %v1589 = vpop.permute.xlu0 %1588
          %1590 = vrot.lane.b32.xlu0 %v1126, 64
          %v1591 = vpop.permute.xlu0 %1590
          %1592 = vrot.lane.b32.xlu0 %v1130, 64
          %v1593 = vpop.permute.xlu0 %1592
          %1594 = vrot.lane.b32.xlu0 %v1136, 64
          %v1595 = vpop.permute.xlu0 %1594
          %1596 = vrot.lane.b32.xlu0 %v1140, 64
          %v1597 = vpop.permute.xlu0 %1596
          %1598 = vrot.lane.b32.xlu0 %v1146, 64
          %v1599 = vpop.permute.xlu0 %1598
          %1600 = vrot.lane.b32.xlu0 %v1150, 64
          %v1601 = vpop.permute.xlu0 %1600
          %1602 = vrot.lane.b32.xlu0 %v1156, 64
          %v1603 = vpop.permute.xlu0 %1602
          %1604 = vrot.lane.b32.xlu0 %v1160, 64
          %v1605 = vpop.permute.xlu0 %1604
          %1606 = vrot.lane.b32.xlu0 %v1166, 64
          %v1607 = vpop.permute.xlu0 %1606
          %1608 = vrot.lane.b32.xlu0 %v1170, 64
          %v1609 = vpop.permute.xlu0 %1608
          %1610 = vrot.lane.b32.xlu0 %v1176, 64
          %v1611 = vpop.permute.xlu0 %1610
          %1612 = vrot.lane.b32.xlu0 %v1180, 64
          %v1613 = vpop.permute.xlu0 %1612
          %1630 = vxpose.xlu0.b32.start [1/16] %v1583, 128
          %1631 = vxpose.xlu0.b32.cont [2/16] %v1585, 128
          %1632 = vxpose.xlu0.b32.cont [3/16] %v1587, 128
          %1633 = vxpose.xlu0.b32.cont [4/16] %v1589, 128
          %1634 = vxpose.xlu0.b32.cont [5/16] %v1591, 128
          %1635 = vxpose.xlu0.b32.cont [6/16] %v1593, 128
          %1636 = vxpose.xlu0.b32.cont [7/16] %v1595, 128
          %1637 = vxpose.xlu0.b32.cont [8/16] %v1597, 128
          %1638 = vxpose.xlu0.b32.cont [9/16] %v1599, 128
          %1639 = vxpose.xlu0.b32.cont [10/16] %v1601, 128
          %1640 = vxpose.xlu0.b32.cont [11/16] %v1603, 128
          %1641 = vxpose.xlu0.b32.cont [12/16] %v1605, 128
          %1642 = vxpose.xlu0.b32.cont [13/16] %v1607, 128
          %1643 = vxpose.xlu0.b32.cont [14/16] %v1609, 128
          %1644 = vxpose.xlu0.b32.cont [15/16] %v1611, 128
          %1645 = vxpose.xlu0.b32.end [16/16] %v1613, 128
          %v1646 = vpop.trf.xlu0
          %v1647 = vpop.trf.xlu0
          %v1648 = vpop.trf.xlu0
          %v1649 = vpop.trf.xlu0
          %v1650 = vpop.trf.xlu0
          %v1651 = vpop.trf.xlu0
          %v1652 = vpop.trf.xlu0
          %v1653 = vpop.trf.xlu0
          %v1654 = vpop.trf.xlu0
          %v1655 = vpop.trf.xlu0
          %v1656 = vpop.trf.xlu0
          %v1657 = vpop.trf.xlu0
          %v1658 = vpop.trf.xlu0
          %v1659 = vpop.trf.xlu0
          %v1660 = vpop.trf.xlu0
          %v1661 = vpop.trf.xlu0
          %v1662 = vpack.c.bf16 %v1647, %v1646
          %v1663 = vpack.c.bf16 %v1649, %v1648
          %s1664 = smul.u32 %s1546, 2
          %s1665 = smul.addr %s1664, 8
          %s1666 = scalar_lea.vmem [#allocation3], %s1665
          %1667 = vst [vmem:[%s1666] sm:$0xff] %v1662
          %1668 = vst [vmem:[%s1666 + $0x8] sm:$0xff] %v1663
          %1669 = vrot.lane.b32.xlu0 %v1339, 64
          %v1670 = vpop.permute.xlu0 %1669
          %1671 = vrot.lane.b32.xlu0 %v1340, 64
          %v1672 = vpop.permute.xlu0 %1671
          %1673 = vrot.lane.b32.xlu0 %v1341, 64
          %v1674 = vpop.permute.xlu0 %1673
          %1675 = vrot.lane.b32.xlu0 %v1342, 64
          %v1676 = vpop.permute.xlu0 %1675
          %1677 = vrot.lane.b32.xlu0 %v1343, 64
          %v1678 = vpop.permute.xlu0 %1677
          %1679 = vrot.lane.b32.xlu0 %v1344, 64
          %v1680 = vpop.permute.xlu0 %1679
          %1681 = vrot.lane.b32.xlu0 %v1345, 64
          %v1682 = vpop.permute.xlu0 %1681
          %1683 = vrot.lane.b32.xlu0 %v1346, 64
          %v1684 = vpop.permute.xlu0 %1683
          %s1693 = smul.addr %s1571, 8
          %s1694 = scalar_lea.vmem [#allocation4], %s1693
          %1695 = vst.msk [vmem:[%s1694] sm:$0xff] %vm1291, %v1670
          %1696 = vst.msk [vmem:[%s1694 + $0x8] sm:$0xff] %vm1291, %v1672
          %1697 = vst.msk [vmem:[%s1694 + $0x10] sm:$0xff] %vm1291, %v1674
          %1698 = vst.msk [vmem:[%s1694 + $0x18] sm:$0xff] %vm1291, %v1676
          %1699 = vst.msk [vmem:[%s1694 + $0x20] sm:$0xff] %vm1291, %v1678
          %1700 = vst.msk [vmem:[%s1694 + $0x28] sm:$0xff] %vm1291, %v1680
          %1701 = vst.msk [vmem:[%s1694 + $0x30] sm:$0xff] %vm1291, %v1682
          %1702 = vst.msk [vmem:[%s1694 + $0x38] sm:$0xff] %vm1291, %v1684
          %s1703 = sadd.s32 %s1279, 3
          %1704 = vrot.lane.b32.xlu0 %v1280, 32
          %v1705 = vpop.permute.xlu0 %1704
          %1706 = vrot.lane.b32.xlu0 %v1281, 32
          %v1707 = vpop.permute.xlu0 %1706
          %1708 = vrot.lane.b32.xlu0 %v1282, 32
          %v1709 = vpop.permute.xlu0 %1708
          %1710 = vrot.lane.b32.xlu0 %v1283, 32
          %v1711 = vpop.permute.xlu0 %1710
          %1712 = vrot.lane.b32.xlu0 %v1284, 32
          %v1713 = vpop.permute.xlu0 %1712
          %1714 = vrot.lane.b32.xlu0 %v1285, 32
          %v1715 = vpop.permute.xlu0 %1714
          %1716 = vrot.lane.b32.xlu0 %v1286, 32
          %v1717 = vpop.permute.xlu0 %1716
          %1718 = vrot.lane.b32.xlu0 %v1287, 32
          %v1719 = vpop.permute.xlu0 %1718
          %s1728 = smul.u32 %s1703, 8
          %s1729 = smul.addr %s1728, 8
          %s1730 = scalar_lea.vmem [#allocation2], %s1729
          %1731 = vst.msk [vmem:[%s1730] sm:$0xff] %vm1291, %v1705
          %1732 = vst.msk [vmem:[%s1730 + $0x8] sm:$0xff] %vm1291, %v1707
          %1733 = vst.msk [vmem:[%s1730 + $0x10] sm:$0xff] %vm1291, %v1709
          %1734 = vst.msk [vmem:[%s1730 + $0x18] sm:$0xff] %vm1291, %v1711
          %1735 = vst.msk [vmem:[%s1730 + $0x20] sm:$0xff] %vm1291, %v1713
          %1736 = vst.msk [vmem:[%s1730 + $0x28] sm:$0xff] %vm1291, %v1715
          %1737 = vst.msk [vmem:[%s1730 + $0x30] sm:$0xff] %vm1291, %v1717
          %1738 = vst.msk [vmem:[%s1730 + $0x38] sm:$0xff] %vm1291, %v1719
          %1739 = vrot.lane.b32.xlu0 %v1106, 32
          %v1740 = vpop.permute.xlu0 %1739
          %1741 = vrot.lane.b32.xlu0 %v1110, 32
          %v1742 = vpop.permute.xlu0 %1741
          %1743 = vrot.lane.b32.xlu0 %v1116, 32
          %v1744 = vpop.permute.xlu0 %1743
          %1745 = vrot.lane.b32.xlu0 %v1120, 32
          %v1746 = vpop.permute.xlu0 %1745
          %1747 = vrot.lane.b32.xlu0 %v1126, 32
          %v1748 = vpop.permute.xlu0 %1747
          %1749 = vrot.lane.b32.xlu0 %v1130, 32
          %v1750 = vpop.permute.xlu0 %1749
          %1751 = vrot.lane.b32.xlu0 %v1136, 32
          %v1752 = vpop.permute.xlu0 %1751
          %1753 = vrot.lane.b32.xlu0 %v1140, 32
          %v1754 = vpop.permute.xlu0 %1753
          %1755 = vrot.lane.b32.xlu0 %v1146, 32
          %v1756 = vpop.permute.xlu0 %1755
          %1757 = vrot.lane.b32.xlu0 %v1150, 32
          %v1758 = vpop.permute.xlu0 %1757
          %1759 = vrot.lane.b32.xlu0 %v1156, 32
          %v1760 = vpop.permute.xlu0 %1759
          %1761 = vrot.lane.b32.xlu0 %v1160, 32
          %v1762 = vpop.permute.xlu0 %1761
          %1763 = vrot.lane.b32.xlu0 %v1166, 32
          %v1764 = vpop.permute.xlu0 %1763
          %1765 = vrot.lane.b32.xlu0 %v1170, 32
          %v1766 = vpop.permute.xlu0 %1765
          %1767 = vrot.lane.b32.xlu0 %v1176, 32
          %v1768 = vpop.permute.xlu0 %1767
          %1769 = vrot.lane.b32.xlu0 %v1180, 32
          %v1770 = vpop.permute.xlu0 %1769
          %1787 = vxpose.xlu0.b32.start [1/16] %v1740, 128
          %1788 = vxpose.xlu0.b32.cont [2/16] %v1742, 128
          %1789 = vxpose.xlu0.b32.cont [3/16] %v1744, 128
          %1790 = vxpose.xlu0.b32.cont [4/16] %v1746, 128
          %1791 = vxpose.xlu0.b32.cont [5/16] %v1748, 128
          %1792 = vxpose.xlu0.b32.cont [6/16] %v1750, 128
          %1793 = vxpose.xlu0.b32.cont [7/16] %v1752, 128
          %1794 = vxpose.xlu0.b32.cont [8/16] %v1754, 128
          %1795 = vxpose.xlu0.b32.cont [9/16] %v1756, 128
          %1796 = vxpose.xlu0.b32.cont [10/16] %v1758, 128
          %1797 = vxpose.xlu0.b32.cont [11/16] %v1760, 128
          %1798 = vxpose.xlu0.b32.cont [12/16] %v1762, 128
          %1799 = vxpose.xlu0.b32.cont [13/16] %v1764, 128
          %1800 = vxpose.xlu0.b32.cont [14/16] %v1766, 128
          %1801 = vxpose.xlu0.b32.cont [15/16] %v1768, 128
          %1802 = vxpose.xlu0.b32.end [16/16] %v1770, 128
          %v1803 = vpop.trf.xlu0
          %v1804 = vpop.trf.xlu0
          %v1805 = vpop.trf.xlu0
          %v1806 = vpop.trf.xlu0
          %v1807 = vpop.trf.xlu0
          %v1808 = vpop.trf.xlu0
          %v1809 = vpop.trf.xlu0
          %v1810 = vpop.trf.xlu0
          %v1811 = vpop.trf.xlu0
          %v1812 = vpop.trf.xlu0
          %v1813 = vpop.trf.xlu0
          %v1814 = vpop.trf.xlu0
          %v1815 = vpop.trf.xlu0
          %v1816 = vpop.trf.xlu0
          %v1817 = vpop.trf.xlu0
          %v1818 = vpop.trf.xlu0
          %v1819 = vpack.c.bf16 %v1804, %v1803
          %v1820 = vpack.c.bf16 %v1806, %v1805
          %s1821 = smul.u32 %s1703, 2
          %s1822 = smul.addr %s1821, 8
          %s1823 = scalar_lea.vmem [#allocation3], %s1822
          %1824 = vst [vmem:[%s1823] sm:$0xff] %v1819
          %1825 = vst [vmem:[%s1823 + $0x8] sm:$0xff] %v1820
          %1826 = vrot.lane.b32.xlu0 %v1339, 32
          %v1827 = vpop.permute.xlu0 %1826
          %1828 = vrot.lane.b32.xlu0 %v1340, 32
          %v1829 = vpop.permute.xlu0 %1828
          %1830 = vrot.lane.b32.xlu0 %v1341, 32
          %v1831 = vpop.permute.xlu0 %1830
          %1832 = vrot.lane.b32.xlu0 %v1342, 32
          %v1833 = vpop.permute.xlu0 %1832
          %1834 = vrot.lane.b32.xlu0 %v1343, 32
          %v1835 = vpop.permute.xlu0 %1834
          %1836 = vrot.lane.b32.xlu0 %v1344, 32
          %v1837 = vpop.permute.xlu0 %1836
          %1838 = vrot.lane.b32.xlu0 %v1345, 32
          %v1839 = vpop.permute.xlu0 %1838
          %1840 = vrot.lane.b32.xlu0 %v1346, 32
          %v1841 = vpop.permute.xlu0 %1840
          %s1850 = smul.addr %s1728, 8
          %s1851 = scalar_lea.vmem [#allocation4], %s1850
          %1852 = vst.msk [vmem:[%s1851] sm:$0xff] %vm1291, %v1827
          %1853 = vst.msk [vmem:[%s1851 + $0x8] sm:$0xff] %vm1291, %v1829
          %1854 = vst.msk [vmem:[%s1851 + $0x10] sm:$0xff] %vm1291, %v1831
          %1855 = vst.msk [vmem:[%s1851 + $0x18] sm:$0xff] %vm1291, %v1833
          %1856 = vst.msk [vmem:[%s1851 + $0x20] sm:$0xff] %vm1291, %v1835
          %1857 = vst.msk [vmem:[%s1851 + $0x28] sm:$0xff] %vm1291, %v1837
          %1858 = vst.msk [vmem:[%s1851 + $0x30] sm:$0xff] %vm1291, %v1839
          %1859 = vst.msk [vmem:[%s1851 + $0x38] sm:$0xff] %vm1291, %v1841
        $region104: #{tpu_custom_call.1} parent=75 // pred_fallthru
          _
        %p1860 = scmp.eq.s32.totalorder %s43, 0
        // Predicated region
        $region105: #{tpu_custom_call.1} parent=75 // pred_check
          %p1861 = pneg %p1860
        $region106: #{tpu_custom_call.1} parent=75 // pred_check_branch
          %1863 = sbr.rel (%p1861) target = $region108
        $region107: #{tpu_custom_call.1} parent=75 // pred_region
          %vm1864 = vcmask 7168
          %1865 = vst.msk [vmem:[#allocation5] sm:$0xff] %vm1864, -inf
          %1866 = vst.msk [vmem:[#allocation5 + $0x8] sm:$0xff] %vm1864, -inf
          %1867 = vst.msk [vmem:[#allocation5 + $0x10] sm:$0xff] %vm1864, -inf
          %1868 = vst.msk [vmem:[#allocation5 + $0x18] sm:$0xff] %vm1864, -inf
          %1869 = vst.msk [vmem:[#allocation5 + $0x20] sm:$0xff] %vm1864, -inf
          %1870 = vst.msk [vmem:[#allocation5 + $0x28] sm:$0xff] %vm1864, -inf
          %1871 = vst.msk [vmem:[#allocation5 + $0x30] sm:$0xff] %vm1864, -inf
          %1872 = vst.msk [vmem:[#allocation5 + $0x38] sm:$0xff] %vm1864, -inf
          %1873 = vst.msk [vmem:[#allocation5 + $0x40] sm:$0xff] %vm1864, -inf
          %1874 = vst.msk [vmem:[#allocation5 + $0x48] sm:$0xff] %vm1864, -inf
          %1875 = vst.msk [vmem:[#allocation5 + $0x50] sm:$0xff] %vm1864, -inf
          %1876 = vst.msk [vmem:[#allocation5 + $0x58] sm:$0xff] %vm1864, -inf
          %1877 = vst.msk [vmem:[#allocation5 + $0x60] sm:$0xff] %vm1864, -inf
          %1878 = vst.msk [vmem:[#allocation5 + $0x68] sm:$0xff] %vm1864, -inf
          %1879 = vst.msk [vmem:[#allocation5 + $0x70] sm:$0xff] %vm1864, -inf
          %1880 = vst.msk [vmem:[#allocation5 + $0x78] sm:$0xff] %vm1864, -inf
          %1881 = vst.msk [vmem:[#allocation5 + $0x80] sm:$0xff] %vm1864, -inf
          %1882 = vst.msk [vmem:[#allocation5 + $0x88] sm:$0xff] %vm1864, -inf
          %1883 = vst.msk [vmem:[#allocation5 + $0x90] sm:$0xff] %vm1864, -inf
          %1884 = vst.msk [vmem:[#allocation5 + $0x98] sm:$0xff] %vm1864, -inf
          %1885 = vst.msk [vmem:[#allocation5 + $0xa0] sm:$0xff] %vm1864, -inf
          %1886 = vst.msk [vmem:[#allocation5 + $0xa8] sm:$0xff] %vm1864, -inf
          %1887 = vst.msk [vmem:[#allocation5 + $0xb0] sm:$0xff] %vm1864, -inf
          %1888 = vst.msk [vmem:[#allocation5 + $0xb8] sm:$0xff] %vm1864, -inf
          %1889 = vst.msk [vmem:[#allocation5 + $0xc0] sm:$0xff] %vm1864, -inf
          %1890 = vst.msk [vmem:[#allocation5 + $0xc8] sm:$0xff] %vm1864, -inf
          %1891 = vst.msk [vmem:[#allocation5 + $0xd0] sm:$0xff] %vm1864, -inf
          %1892 = vst.msk [vmem:[#allocation5 + $0xd8] sm:$0xff] %vm1864, -inf
          %1893 = vst.msk [vmem:[#allocation5 + $0xe0] sm:$0xff] %vm1864, -inf
          %1894 = vst.msk [vmem:[#allocation5 + $0xe8] sm:$0xff] %vm1864, -inf
          %1895 = vst.msk [vmem:[#allocation5 + $0xf0] sm:$0xff] %vm1864, -inf
          %1896 = vst.msk [vmem:[#allocation5 + $0xf8] sm:$0xff] %vm1864, -inf
          %1897 = vst.msk [vmem:[#allocation5 + $0x100] sm:$0xff] %vm1864, -inf
          %1898 = vst.msk [vmem:[#allocation5 + $0x108] sm:$0xff] %vm1864, -inf
          %1899 = vst.msk [vmem:[#allocation5 + $0x110] sm:$0xff] %vm1864, -inf
          %1900 = vst.msk [vmem:[#allocation5 + $0x118] sm:$0xff] %vm1864, -inf
          %1901 = vst.msk [vmem:[#allocation5 + $0x120] sm:$0xff] %vm1864, -inf
          %1902 = vst.msk [vmem:[#allocation5 + $0x128] sm:$0xff] %vm1864, -inf
          %1903 = vst.msk [vmem:[#allocation5 + $0x130] sm:$0xff] %vm1864, -inf
          %1904 = vst.msk [vmem:[#allocation5 + $0x138] sm:$0xff] %vm1864, -inf
          %1905 = vst.msk [vmem:[#allocation5 + $0x140] sm:$0xff] %vm1864, -inf
          %1906 = vst.msk [vmem:[#allocation5 + $0x148] sm:$0xff] %vm1864, -inf
          %1907 = vst.msk [vmem:[#allocation5 + $0x150] sm:$0xff] %vm1864, -inf
          %1908 = vst.msk [vmem:[#allocation5 + $0x158] sm:$0xff] %vm1864, -inf
          %1909 = vst.msk [vmem:[#allocation5 + $0x160] sm:$0xff] %vm1864, -inf
          %1910 = vst.msk [vmem:[#allocation5 + $0x168] sm:$0xff] %vm1864, -inf
          %1911 = vst.msk [vmem:[#allocation5 + $0x170] sm:$0xff] %vm1864, -inf
          %1912 = vst.msk [vmem:[#allocation5 + $0x178] sm:$0xff] %vm1864, -inf
          %1913 = vst.msk [vmem:[#allocation5 + $0x180] sm:$0xff] %vm1864, -inf
          %1914 = vst.msk [vmem:[#allocation5 + $0x188] sm:$0xff] %vm1864, -inf
          %1915 = vst.msk [vmem:[#allocation5 + $0x190] sm:$0xff] %vm1864, -inf
          %1916 = vst.msk [vmem:[#allocation5 + $0x198] sm:$0xff] %vm1864, -inf
          %1917 = vst.msk [vmem:[#allocation5 + $0x1a0] sm:$0xff] %vm1864, -inf
          %1918 = vst.msk [vmem:[#allocation5 + $0x1a8] sm:$0xff] %vm1864, -inf
          %1919 = vst.msk [vmem:[#allocation5 + $0x1b0] sm:$0xff] %vm1864, -inf
          %1920 = vst.msk [vmem:[#allocation5 + $0x1b8] sm:$0xff] %vm1864, -inf
          %1921 = vst.msk [vmem:[#allocation5 + $0x1c0] sm:$0xff] %vm1864, -inf
          %1922 = vst.msk [vmem:[#allocation5 + $0x1c8] sm:$0xff] %vm1864, -inf
          %1923 = vst.msk [vmem:[#allocation5 + $0x1d0] sm:$0xff] %vm1864, -inf
          %1924 = vst.msk [vmem:[#allocation5 + $0x1d8] sm:$0xff] %vm1864, -inf
          %1925 = vst.msk [vmem:[#allocation5 + $0x1e0] sm:$0xff] %vm1864, -inf
          %1926 = vst.msk [vmem:[#allocation5 + $0x1e8] sm:$0xff] %vm1864, -inf
          %1927 = vst.msk [vmem:[#allocation5 + $0x1f0] sm:$0xff] %vm1864, -inf
          %1928 = vst.msk [vmem:[#allocation5 + $0x1f8] sm:$0xff] %vm1864, -inf
          %1929 = vst.msk [vmem:[#allocation6] sm:$0xff] %vm1864, 0.0
          %1930 = vst.msk [vmem:[#allocation6 + $0x8] sm:$0xff] %vm1864, 0.0
          %1931 = vst.msk [vmem:[#allocation6 + $0x10] sm:$0xff] %vm1864, 0.0
          %1932 = vst.msk [vmem:[#allocation6 + $0x18] sm:$0xff] %vm1864, 0.0
          %1933 = vst.msk [vmem:[#allocation6 + $0x20] sm:$0xff] %vm1864, 0.0
          %1934 = vst.msk [vmem:[#allocation6 + $0x28] sm:$0xff] %vm1864, 0.0
          %1935 = vst.msk [vmem:[#allocation6 + $0x30] sm:$0xff] %vm1864, 0.0
          %1936 = vst.msk [vmem:[#allocation6 + $0x38] sm:$0xff] %vm1864, 0.0
          %1937 = vst.msk [vmem:[#allocation6 + $0x40] sm:$0xff] %vm1864, 0.0
          %1938 = vst.msk [vmem:[#allocation6 + $0x48] sm:$0xff] %vm1864, 0.0
          %1939 = vst.msk [vmem:[#allocation6 + $0x50] sm:$0xff] %vm1864, 0.0
          %1940 = vst.msk [vmem:[#allocation6 + $0x58] sm:$0xff] %vm1864, 0.0
          %1941 = vst.msk [vmem:[#allocation6 + $0x60] sm:$0xff] %vm1864, 0.0
          %1942 = vst.msk [vmem:[#allocation6 + $0x68] sm:$0xff] %vm1864, 0.0
          %1943 = vst.msk [vmem:[#allocation6 + $0x70] sm:$0xff] %vm1864, 0.0
          %1944 = vst.msk [vmem:[#allocation6 + $0x78] sm:$0xff] %vm1864, 0.0
          %1945 = vst.msk [vmem:[#allocation6 + $0x80] sm:$0xff] %vm1864, 0.0
          %1946 = vst.msk [vmem:[#allocation6 + $0x88] sm:$0xff] %vm1864, 0.0
          %1947 = vst.msk [vmem:[#allocation6 + $0x90] sm:$0xff] %vm1864, 0.0
          %1948 = vst.msk [vmem:[#allocation6 + $0x98] sm:$0xff] %vm1864, 0.0
          %1949 = vst.msk [vmem:[#allocation6 + $0xa0] sm:$0xff] %vm1864, 0.0
          %1950 = vst.msk [vmem:[#allocation6 + $0xa8] sm:$0xff] %vm1864, 0.0
          %1951 = vst.msk [vmem:[#allocation6 + $0xb0] sm:$0xff] %vm1864, 0.0
          %1952 = vst.msk [vmem:[#allocation6 + $0xb8] sm:$0xff] %vm1864, 0.0
          %1953 = vst.msk [vmem:[#allocation6 + $0xc0] sm:$0xff] %vm1864, 0.0
          %1954 = vst.msk [vmem:[#allocation6 + $0xc8] sm:$0xff] %vm1864, 0.0
          %1955 = vst.msk [vmem:[#allocation6 + $0xd0] sm:$0xff] %vm1864, 0.0
          %1956 = vst.msk [vmem:[#allocation6 + $0xd8] sm:$0xff] %vm1864, 0.0
          %1957 = vst.msk [vmem:[#allocation6 + $0xe0] sm:$0xff] %vm1864, 0.0
          %1958 = vst.msk [vmem:[#allocation6 + $0xe8] sm:$0xff] %vm1864, 0.0
          %1959 = vst.msk [vmem:[#allocation6 + $0xf0] sm:$0xff] %vm1864, 0.0
          %1960 = vst.msk [vmem:[#allocation6 + $0xf8] sm:$0xff] %vm1864, 0.0
          %1961 = vst.msk [vmem:[#allocation6 + $0x100] sm:$0xff] %vm1864, 0.0
          %1962 = vst.msk [vmem:[#allocation6 + $0x108] sm:$0xff] %vm1864, 0.0
          %1963 = vst.msk [vmem:[#allocation6 + $0x110] sm:$0xff] %vm1864, 0.0
          %1964 = vst.msk [vmem:[#allocation6 + $0x118] sm:$0xff] %vm1864, 0.0
          %1965 = vst.msk [vmem:[#allocation6 + $0x120] sm:$0xff] %vm1864, 0.0
          %1966 = vst.msk [vmem:[#allocation6 + $0x128] sm:$0xff] %vm1864, 0.0
          %1967 = vst.msk [vmem:[#allocation6 + $0x130] sm:$0xff] %vm1864, 0.0
          %1968 = vst.msk [vmem:[#allocation6 + $0x138] sm:$0xff] %vm1864, 0.0
          %1969 = vst.msk [vmem:[#allocation6 + $0x140] sm:$0xff] %vm1864, 0.0
          %1970 = vst.msk [vmem:[#allocation6 + $0x148] sm:$0xff] %vm1864, 0.0
          %1971 = vst.msk [vmem:[#allocation6 + $0x150] sm:$0xff] %vm1864, 0.0
          %1972 = vst.msk [vmem:[#allocation6 + $0x158] sm:$0xff] %vm1864, 0.0
          %1973 = vst.msk [vmem:[#allocation6 + $0x160] sm:$0xff] %vm1864, 0.0
          %1974 = vst.msk [vmem:[#allocation6 + $0x168] sm:$0xff] %vm1864, 0.0
          %1975 = vst.msk [vmem:[#allocation6 + $0x170] sm:$0xff] %vm1864, 0.0
          %1976 = vst.msk [vmem:[#allocation6 + $0x178] sm:$0xff] %vm1864, 0.0
          %1977 = vst.msk [vmem:[#allocation6 + $0x180] sm:$0xff] %vm1864, 0.0
          %1978 = vst.msk [vmem:[#allocation6 + $0x188] sm:$0xff] %vm1864, 0.0
          %1979 = vst.msk [vmem:[#allocation6 + $0x190] sm:$0xff] %vm1864, 0.0
          %1980 = vst.msk [vmem:[#allocation6 + $0x198] sm:$0xff] %vm1864, 0.0
          %1981 = vst.msk [vmem:[#allocation6 + $0x1a0] sm:$0xff] %vm1864, 0.0
          %1982 = vst.msk [vmem:[#allocation6 + $0x1a8] sm:$0xff] %vm1864, 0.0
          %1983 = vst.msk [vmem:[#allocation6 + $0x1b0] sm:$0xff] %vm1864, 0.0
          %1984 = vst.msk [vmem:[#allocation6 + $0x1b8] sm:$0xff] %vm1864, 0.0
          %1985 = vst.msk [vmem:[#allocation6 + $0x1c0] sm:$0xff] %vm1864, 0.0
          %1986 = vst.msk [vmem:[#allocation6 + $0x1c8] sm:$0xff] %vm1864, 0.0
          %1987 = vst.msk [vmem:[#allocation6 + $0x1d0] sm:$0xff] %vm1864, 0.0
          %1988 = vst.msk [vmem:[#allocation6 + $0x1d8] sm:$0xff] %vm1864, 0.0
          %1989 = vst.msk [vmem:[#allocation6 + $0x1e0] sm:$0xff] %vm1864, 0.0
          %1990 = vst.msk [vmem:[#allocation6 + $0x1e8] sm:$0xff] %vm1864, 0.0
          %1991 = vst.msk [vmem:[#allocation6 + $0x1f0] sm:$0xff] %vm1864, 0.0
          %1992 = vst.msk [vmem:[#allocation6 + $0x1f8] sm:$0xff] %vm1864, 0.0
          %vm1993 = vcmask 261120
          %1994 = vst.msk [vmem:[#allocation7] sm:$0xff] %vm1993, 0.0
          %1995 = vst.msk [vmem:[#allocation7 + $0x8] sm:$0xff] %vm1993, 0.0
          %1996 = vst.msk [vmem:[#allocation7 + $0x10] sm:$0xff] %vm1993, 0.0
          %1997 = vst.msk [vmem:[#allocation7 + $0x18] sm:$0xff] %vm1993, 0.0
          %1998 = vst.msk [vmem:[#allocation7 + $0x20] sm:$0xff] %vm1993, 0.0
          %1999 = vst.msk [vmem:[#allocation7 + $0x28] sm:$0xff] %vm1993, 0.0
          %2000 = vst.msk [vmem:[#allocation7 + $0x30] sm:$0xff] %vm1993, 0.0
          %2001 = vst.msk [vmem:[#allocation7 + $0x38] sm:$0xff] %vm1993, 0.0
          %2002 = vst.msk [vmem:[#allocation7 + $0x40] sm:$0xff] %vm1993, 0.0
          %2003 = vst.msk [vmem:[#allocation7 + $0x48] sm:$0xff] %vm1993, 0.0
          %2004 = vst.msk [vmem:[#allocation7 + $0x50] sm:$0xff] %vm1993, 0.0
          %2005 = vst.msk [vmem:[#allocation7 + $0x58] sm:$0xff] %vm1993, 0.0
          %2006 = vst.msk [vmem:[#allocation7 + $0x60] sm:$0xff] %vm1993, 0.0
          %2007 = vst.msk [vmem:[#allocation7 + $0x68] sm:$0xff] %vm1993, 0.0
          %2008 = vst.msk [vmem:[#allocation7 + $0x70] sm:$0xff] %vm1993, 0.0
          %2009 = vst.msk [vmem:[#allocation7 + $0x78] sm:$0xff] %vm1993, 0.0
          %2010 = vst.msk [vmem:[#allocation7 + $0x80] sm:$0xff] %vm1993, 0.0
          %2011 = vst.msk [vmem:[#allocation7 + $0x88] sm:$0xff] %vm1993, 0.0
          %2012 = vst.msk [vmem:[#allocation7 + $0x90] sm:$0xff] %vm1993, 0.0
          %2013 = vst.msk [vmem:[#allocation7 + $0x98] sm:$0xff] %vm1993, 0.0
          %2014 = vst.msk [vmem:[#allocation7 + $0xa0] sm:$0xff] %vm1993, 0.0
          %2015 = vst.msk [vmem:[#allocation7 + $0xa8] sm:$0xff] %vm1993, 0.0
          %2016 = vst.msk [vmem:[#allocation7 + $0xb0] sm:$0xff] %vm1993, 0.0
          %2017 = vst.msk [vmem:[#allocation7 + $0xb8] sm:$0xff] %vm1993, 0.0
          %2018 = vst.msk [vmem:[#allocation7 + $0xc0] sm:$0xff] %vm1993, 0.0
          %2019 = vst.msk [vmem:[#allocation7 + $0xc8] sm:$0xff] %vm1993, 0.0
          %2020 = vst.msk [vmem:[#allocation7 + $0xd0] sm:$0xff] %vm1993, 0.0
          %2021 = vst.msk [vmem:[#allocation7 + $0xd8] sm:$0xff] %vm1993, 0.0
          %2022 = vst.msk [vmem:[#allocation7 + $0xe0] sm:$0xff] %vm1993, 0.0
          %2023 = vst.msk [vmem:[#allocation7 + $0xe8] sm:$0xff] %vm1993, 0.0
          %2024 = vst.msk [vmem:[#allocation7 + $0xf0] sm:$0xff] %vm1993, 0.0
          %2025 = vst.msk [vmem:[#allocation7 + $0xf8] sm:$0xff] %vm1993, 0.0
          %2026 = vst.msk [vmem:[#allocation7 + $0x100] sm:$0xff] %vm1993, 0.0
          %2027 = vst.msk [vmem:[#allocation7 + $0x108] sm:$0xff] %vm1993, 0.0
          %2028 = vst.msk [vmem:[#allocation7 + $0x110] sm:$0xff] %vm1993, 0.0
          %2029 = vst.msk [vmem:[#allocation7 + $0x118] sm:$0xff] %vm1993, 0.0
          %2030 = vst.msk [vmem:[#allocation7 + $0x120] sm:$0xff] %vm1993, 0.0
          %2031 = vst.msk [vmem:[#allocation7 + $0x128] sm:$0xff] %vm1993, 0.0
          %2032 = vst.msk [vmem:[#allocation7 + $0x130] sm:$0xff] %vm1993, 0.0
          %2033 = vst.msk [vmem:[#allocation7 + $0x138] sm:$0xff] %vm1993, 0.0
          %2034 = vst.msk [vmem:[#allocation7 + $0x140] sm:$0xff] %vm1993, 0.0
          %2035 = vst.msk [vmem:[#allocation7 + $0x148] sm:$0xff] %vm1993, 0.0
          %2036 = vst.msk [vmem:[#allocation7 + $0x150] sm:$0xff] %vm1993, 0.0
          %2037 = vst.msk [vmem:[#allocation7 + $0x158] sm:$0xff] %vm1993, 0.0
          %2038 = vst.msk [vmem:[#allocation7 + $0x160] sm:$0xff] %vm1993, 0.0
          %2039 = vst.msk [vmem:[#allocation7 + $0x168] sm:$0xff] %vm1993, 0.0
          %2040 = vst.msk [vmem:[#allocation7 + $0x170] sm:$0xff] %vm1993, 0.0
          %2041 = vst.msk [vmem:[#allocation7 + $0x178] sm:$0xff] %vm1993, 0.0
          %2042 = vst.msk [vmem:[#allocation7 + $0x180] sm:$0xff] %vm1993, 0.0
          %2043 = vst.msk [vmem:[#allocation7 + $0x188] sm:$0xff] %vm1993, 0.0
          %2044 = vst.msk [vmem:[#allocation7 + $0x190] sm:$0xff] %vm1993, 0.0
          %2045 = vst.msk [vmem:[#allocation7 + $0x198] sm:$0xff] %vm1993, 0.0
          %2046 = vst.msk [vmem:[#allocation7 + $0x1a0] sm:$0xff] %vm1993, 0.0
          %2047 = vst.msk [vmem:[#allocation7 + $0x1a8] sm:$0xff] %vm1993, 0.0
          %2048 = vst.msk [vmem:[#allocation7 + $0x1b0] sm:$0xff] %vm1993, 0.0
          %2049 = vst.msk [vmem:[#allocation7 + $0x1b8] sm:$0xff] %vm1993, 0.0
          %2050 = vst.msk [vmem:[#allocation7 + $0x1c0] sm:$0xff] %vm1993, 0.0
          %2051 = vst.msk [vmem:[#allocation7 + $0x1c8] sm:$0xff] %vm1993, 0.0
          %2052 = vst.msk [vmem:[#allocation7 + $0x1d0] sm:$0xff] %vm1993, 0.0
          %2053 = vst.msk [vmem:[#allocation7 + $0x1d8] sm:$0xff] %vm1993, 0.0
          %2054 = vst.msk [vmem:[#allocation7 + $0x1e0] sm:$0xff] %vm1993, 0.0
          %2055 = vst.msk [vmem:[#allocation7 + $0x1e8] sm:$0xff] %vm1993, 0.0
          %2056 = vst.msk [vmem:[#allocation7 + $0x1f0] sm:$0xff] %vm1993, 0.0
          %2057 = vst.msk [vmem:[#allocation7 + $0x1f8] sm:$0xff] %vm1993, 0.0
        $region108: #{tpu_custom_call.1} parent=75 // pred_fallthru
          _
        %s2058 = smul.u32 %s42, 4
        %s2059 = smul.u32 %s43, 4
        loop: start=0, step=1, limit=4
        $region109: #{tpu_custom_call.1} parent=75 // loop_pre_header
          _
        $region110: #{tpu_custom_call.1} parent=75 // loop_header
          %s2061 = sphi 0, %s2065
          %p2062 = scmp.ge.s32.totalorder %s2061, 4
        $region111: #{tpu_custom_call.1} parent=75 // loop_header_branch
          %2064 = sbr.rel (%p2062) target = $region115
        $region112: #{tpu_custom_call.1} parent=75 // loop_body
          %s2066 = sadd.s32 %s2058, %s2061
          %s2067 = smul.u32 %s2066, 8
          %s2068 = smul.addr %s2067, 8
          %s2069 = scalar_lea.vmem [#allocation2], %s2068
          %v2070 = vld [vmem:[%s2069] sm:$0xff]
          %v2071 = vld [vmem:[%s2069 + $0x8] sm:$0xff]
          %v2072 = vld [vmem:[%s2069 + $0x10] sm:$0xff]
          %v2073 = vld [vmem:[%s2069 + $0x18] sm:$0xff]
          %v2074 = vld [vmem:[%s2069 + $0x20] sm:$0xff]
          %v2075 = vld [vmem:[%s2069 + $0x28] sm:$0xff]
          %v2076 = vld [vmem:[%s2069 + $0x30] sm:$0xff]
          %v2077 = vld [vmem:[%s2069 + $0x38] sm:$0xff]
          %s2078 = sadd.s32 %s2059, %s2061
          %s2079 = smul.u32 %s2078, 2
          %s2080 = smul.addr %s2079, 8
          %s2081 = scalar_lea.vmem [#allocation3], %s2080
          %v2082 = vld [vmem:[%s2081] sm:$0xff]
          %v2083 = vld [vmem:[%s2081 + $0x8] sm:$0xff]
          %vm2084 = vcmask 261120
          %v2086 = vsel %vm2084, %v2070, 0
          %v2089 = vsel %vm2084, %v2071, 0
          %v2092 = vsel %vm2084, %v2072, 0
          %v2095 = vsel %vm2084, %v2073, 0
          %v2098 = vsel %vm2084, %v2074, 0
          %v2101 = vsel %vm2084, %v2075, 0
          %v2104 = vsel %vm2084, %v2076, 0
          %v2107 = vsel %vm2084, %v2077, 0
          %2109 = vmatprep.subr.bf16.mxu0 0
          %2110 = vmatpush1.bf16.msra.mxu0 %v2082
          %2111 = vmatprep.subr.bf16.mxu0 0
          %2112 = vmatpush1.bf16.msra.mxu0 %v2083
          %2113 = vmatprep.subr.bf16.mxu0 0
          %2114 = vmatpush1.bf16.msra.mxu0 0
          %2115 = vmatprep.subr.bf16.mxu0 0
          %2116 = vmatpush1.bf16.msra.mxu0 0
          %2117 = vmatprep.subr.bf16.mxu0 0
          %2118 = vmatpush1.bf16.msra.mxu0 0
          %2119 = vmatprep.subr.bf16.mxu0 0
          %2120 = vmatpush1.bf16.msra.mxu0 0
          %2121 = vmatprep.subr.bf16.mxu0 0
          %2122 = vmatpush1.bf16.msra.mxu0 0
          %2123 = vmatprep.subr.bf16.mxu0 0
          %2124 = vmatpush1.bf16.msra.mxu0 0
          %2125 = vmatprep.subr.bf16.mxu0 0
          %2126 = vmatpush1.bf16.msra.mxu0 0
          %2127 = vmatprep.subr.bf16.mxu0 0
          %2128 = vmatpush1.bf16.msra.mxu0 0
          %2129 = vmatprep.subr.bf16.mxu0 0
          %2130 = vmatpush1.bf16.msra.mxu0 0
          %2131 = vmatprep.subr.bf16.mxu0 0
          %2132 = vmatpush1.bf16.msra.mxu0 0
          %2133 = vmatprep.subr.bf16.mxu0 0
          %2134 = vmatpush1.bf16.msra.mxu0 0
          %2135 = vmatprep.subr.bf16.mxu0 0
          %2136 = vmatpush1.bf16.msra.mxu0 0
          %2137 = vmatprep.subr.bf16.mxu0 0
          %2138 = vmatpush1.bf16.msra.mxu0 0
          %2139 = vmatprep.subr.bf16.mxu0 0
          %2140 = vmatpush1.bf16.msra.mxu0 0
          %2141 = vmatprep.mubr.bf16.mxu0 0
          %2142 = vmatmul.mubr.bf16.gmra.mrb[0].mxu0 %v2086
          %v2143 = vpop.f32.mrb[0].mxu0
          %v2144 = vadd.f32 0.0, %v2143
          %v2145 = vpop.f32.mrb[0].mxu0
          %v2146 = vpop.f32.mrb[0].mxu0
          %v2147 = vadd.f32 0.0, %v2146
          %v2148 = vpop.f32.mrb[0].mxu0
          %2149 = vmatprep.mubr.bf16.mxu0 0
          %2150 = vmatmul.mubr.bf16.gmra.mrb[0].mxu0 %v2089
          %v2151 = vpop.f32.mrb[0].mxu0
          %v2152 = vadd.f32 0.0, %v2151
          %v2153 = vpop.f32.mrb[0].mxu0
          %v2154 = vpop.f32.mrb[0].mxu0
          %v2155 = vadd.f32 0.0, %v2154
          %v2156 = vpop.f32.mrb[0].mxu0
          %2157 = vmatprep.mubr.bf16.mxu0 0
          %2158 = vmatmul.mubr.bf16.gmra.mrb[0].mxu0 %v2092
          %v2159 = vpop.f32.mrb[0].mxu0
          %v2160 = vadd.f32 0.0, %v2159
          %v2161 = vpop.f32.mrb[0].mxu0
          %v2162 = vpop.f32.mrb[0].mxu0
          %v2163 = vadd.f32 0.0, %v2162
          %v2164 = vpop.f32.mrb[0].mxu0
          %2165 = vmatprep.mubr.bf16.mxu0 0
          %2166 = vmatmul.mubr.bf16.gmra.mrb[0].mxu0 %v2095
          %v2167 = vpop.f32.mrb[0].mxu0
          %v2168 = vadd.f32 0.0, %v2167
          %v2169 = vpop.f32.mrb[0].mxu0
          %v2170 = vpop.f32.mrb[0].mxu0
          %v2171 = vadd.f32 0.0, %v2170
          %v2172 = vpop.f32.mrb[0].mxu0
          %2173 = vmatprep.mubr.bf16.mxu0 0
          %2174 = vmatmul.mubr.bf16.gmra.mrb[0].mxu0 %v2098
          %v2175 = vpop.f32.mrb[0].mxu0
          %v2176 = vadd.f32 0.0, %v2175
          %v2177 = vpop.f32.mrb[0].mxu0
          %v2178 = vpop.f32.mrb[0].mxu0
          %v2179 = vadd.f32 0.0, %v2178
          %v2180 = vpop.f32.mrb[0].mxu0
          %2181 = vmatprep.mubr.bf16.mxu0 0
          %2182 = vmatmul.mubr.bf16.gmra.mrb[0].mxu0 %v2101
          %v2183 = vpop.f32.mrb[0].mxu0
          %v2184 = vadd.f32 0.0, %v2183
          %v2185 = vpop.f32.mrb[0].mxu0
          %v2186 = vpop.f32.mrb[0].mxu0
          %v2187 = vadd.f32 0.0, %v2186
          %v2188 = vpop.f32.mrb[0].mxu0
          %2189 = vmatprep.mubr.bf16.mxu0 0
          %2190 = vmatmul.mubr.bf16.gmra.mrb[0].mxu0 %v2104
          %v2191 = vpop.f32.mrb[0].mxu0
          %v2192 = vadd.f32 0.0, %v2191
          %v2193 = vpop.f32.mrb[0].mxu0
          %v2194 = vpop.f32.mrb[0].mxu0
          %v2195 = vadd.f32 0.0, %v2194
          %v2196 = vpop.f32.mrb[0].mxu0
          %2197 = vmatprep.mubr.bf16.mxu0 0
          %2198 = vmatmul.mubr.bf16.gmra.mrb[0].mxu0 %v2107
          %v2199 = vpop.f32.mrb[0].mxu0
          %v2200 = vadd.f32 0.0, %v2199
          %v2201 = vpop.f32.mrb[0].mxu0
          %v2202 = vpop.f32.mrb[0].mxu0
          %v2203 = vadd.f32 0.0, %v2202
          %v2204 = vpop.f32.mrb[0].mxu0
          %2205 = vdwg.mxu0
          %s2206 = smul.u32 %s2061, 128
          %s2207 = scalar_lea.vmem [#allocation5], %s2206
          %v2208 = vld [vmem:[%s2207] sm:$0xff]
          %v2209 = vld [vmem:[%s2207 + $0x8] sm:$0xff]
          %v2210 = vld [vmem:[%s2207 + $0x10] sm:$0xff]
          %v2211 = vld [vmem:[%s2207 + $0x18] sm:$0xff]
          %v2212 = vld [vmem:[%s2207 + $0x20] sm:$0xff]
          %v2213 = vld [vmem:[%s2207 + $0x28] sm:$0xff]
          %v2214 = vld [vmem:[%s2207 + $0x30] sm:$0xff]
          %v2215 = vld [vmem:[%s2207 + $0x38] sm:$0xff]
          %v2216 = vld [vmem:[%s2207 + $0x40] sm:$0xff]
          %v2217 = vld [vmem:[%s2207 + $0x48] sm:$0xff]
          %v2218 = vld [vmem:[%s2207 + $0x50] sm:$0xff]
          %v2219 = vld [vmem:[%s2207 + $0x58] sm:$0xff]
          %v2220 = vld [vmem:[%s2207 + $0x60] sm:$0xff]
          %v2221 = vld [vmem:[%s2207 + $0x68] sm:$0xff]
          %v2222 = vld [vmem:[%s2207 + $0x70] sm:$0xff]
          %v2223 = vld [vmem:[%s2207 + $0x78] sm:$0xff]
          %2224 = vmax.xlane.f32.xlu0 %v2144
          %v2225 = vpop.xlane.xlu0 %2224
          %2226 = vmax.xlane.f32.xlu0 %v2147
          %v2227 = vpop.xlane.xlu0 %2226
          %2228 = vmax.xlane.f32.xlu0 %v2152
          %v2229 = vpop.xlane.xlu0 %2228
          %2230 = vmax.xlane.f32.xlu0 %v2155
          %v2231 = vpop.xlane.xlu0 %2230
          %2232 = vmax.xlane.f32.xlu0 %v2160
          %v2233 = vpop.xlane.xlu0 %2232
          %2234 = vmax.xlane.f32.xlu0 %v2163
          %v2235 = vpop.xlane.xlu0 %2234
          %2236 = vmax.xlane.f32.xlu0 %v2168
          %v2237 = vpop.xlane.xlu0 %2236
          %2238 = vmax.xlane.f32.xlu0 %v2171
          %v2239 = vpop.xlane.xlu0 %2238
          %2240 = vmax.xlane.f32.xlu0 %v2176
          %v2241 = vpop.xlane.xlu0 %2240
          %2242 = vmax.xlane.f32.xlu0 %v2179
          %v2243 = vpop.xlane.xlu0 %2242
          %2244 = vmax.xlane.f32.xlu0 %v2184
          %v2245 = vpop.xlane.xlu0 %2244
          %2246 = vmax.xlane.f32.xlu0 %v2187
          %v2247 = vpop.xlane.xlu0 %2246
          %2248 = vmax.xlane.f32.xlu0 %v2192
          %v2249 = vpop.xlane.xlu0 %2248
          %2250 = vmax.xlane.f32.xlu0 %v2195
          %v2251 = vpop.xlane.xlu0 %2250
          %2252 = vmax.xlane.f32.xlu0 %v2200
          %v2253 = vpop.xlane.xlu0 %2252
          %2254 = vmax.xlane.f32.xlu0 %v2203
          %v2255 = vpop.xlane.xlu0 %2254
          %v2256 = vmax.f32 %v2208, %v2225
          %v2257 = vmax.f32 %v2209, %v2227
          %v2258 = vmax.f32 %v2210, %v2229
          %v2259 = vmax.f32 %v2211, %v2231
          %v2260 = vmax.f32 %v2212, %v2233
          %v2261 = vmax.f32 %v2213, %v2235
          %v2262 = vmax.f32 %v2214, %v2237
          %v2263 = vmax.f32 %v2215, %v2239
          %v2264 = vmax.f32 %v2216, %v2241
          %v2265 = vmax.f32 %v2217, %v2243
          %v2266 = vmax.f32 %v2218, %v2245
          %v2267 = vmax.f32 %v2219, %v2247
          %v2268 = vmax.f32 %v2220, %v2249
          %v2269 = vmax.f32 %v2221, %v2251
          %v2270 = vmax.f32 %v2222, %v2253
          %v2271 = vmax.f32 %v2223, %v2255
          %v2272 = vsub.f32 %v2208, %v2256
          %v2273 = vsub.f32 %v2209, %v2257
          %v2274 = vsub.f32 %v2210, %v2258
          %v2275 = vsub.f32 %v2211, %v2259
          %v2276 = vsub.f32 %v2212, %v2260
          %v2277 = vsub.f32 %v2213, %v2261
          %v2278 = vsub.f32 %v2214, %v2262
          %v2279 = vsub.f32 %v2215, %v2263
          %v2280 = vsub.f32 %v2216, %v2264
          %v2281 = vsub.f32 %v2217, %v2265
          %v2282 = vsub.f32 %v2218, %v2266
          %v2283 = vsub.f32 %v2219, %v2267
          %v2284 = vsub.f32 %v2220, %v2268
          %v2285 = vsub.f32 %v2221, %v2269
          %v2286 = vsub.f32 %v2222, %v2270
          %v2287 = vsub.f32 %v2223, %v2271
          %v2288 = vmul.f32 %v2272, 1.442695
          %v2289 = vpow.pop %v2288
          %v2290 = vmul.f32 %v2273, 1.442695
          %v2291 = vpow.pop %v2290
          %v2292 = vmul.f32 %v2274, 1.442695
          %v2293 = vpow.pop %v2292
          %v2294 = vmul.f32 %v2275, 1.442695
          %v2295 = vpow.pop %v2294
          %v2296 = vmul.f32 %v2276, 1.442695
          %v2297 = vpow.pop %v2296
          %v2298 = vmul.f32 %v2277, 1.442695
          %v2299 = vpow.pop %v2298
          %v2300 = vmul.f32 %v2278, 1.442695
          %v2301 = vpow.pop %v2300
          %v2302 = vmul.f32 %v2279, 1.442695
          %v2303 = vpow.pop %v2302
          %v2304 = vmul.f32 %v2280, 1.442695
          %v2305 = vpow.pop %v2304
          %v2306 = vmul.f32 %v2281, 1.442695
          %v2307 = vpow.pop %v2306
          %v2308 = vmul.f32 %v2282, 1.442695
          %v2309 = vpow.pop %v2308
          %v2310 = vmul.f32 %v2283, 1.442695
          %v2311 = vpow.pop %v2310
          %v2312 = vmul.f32 %v2284, 1.442695
          %v2313 = vpow.pop %v2312
          %v2314 = vmul.f32 %v2285, 1.442695
          %v2315 = vpow.pop %v2314
          %v2316 = vmul.f32 %v2286, 1.442695
          %v2317 = vpow.pop %v2316
          %v2318 = vmul.f32 %v2287, 1.442695
          %v2319 = vpow.pop %v2318
          %2321 = vset.pattern.permute.xlu0 0
          %2322 = vperm.xlu0 %2321, %v2256
          %v2323 = vpop.permute.xlu0 %2322
          %2326 = vset.pattern.permute.xlu0 0
          %2327 = vperm.xlu0 %2326, %v2257
          %v2328 = vpop.permute.xlu0 %2327
          %2331 = vset.pattern.permute.xlu0 0
          %2332 = vperm.xlu0 %2331, %v2258
          %v2333 = vpop.permute.xlu0 %2332
          %2336 = vset.pattern.permute.xlu0 0
          %2337 = vperm.xlu0 %2336, %v2259
          %v2338 = vpop.permute.xlu0 %2337
          %2341 = vset.pattern.permute.xlu0 0
          %2342 = vperm.xlu0 %2341, %v2260
          %v2343 = vpop.permute.xlu0 %2342
          %2346 = vset.pattern.permute.xlu0 0
          %2347 = vperm.xlu0 %2346, %v2261
          %v2348 = vpop.permute.xlu0 %2347
          %2351 = vset.pattern.permute.xlu0 0
          %2352 = vperm.xlu0 %2351, %v2262
          %v2353 = vpop.permute.xlu0 %2352
          %2356 = vset.pattern.permute.xlu0 0
          %2357 = vperm.xlu0 %2356, %v2263
          %v2358 = vpop.permute.xlu0 %2357
          %2361 = vset.pattern.permute.xlu0 0
          %2362 = vperm.xlu0 %2361, %v2264
          %v2363 = vpop.permute.xlu0 %2362
          %2366 = vset.pattern.permute.xlu0 0
          %2367 = vperm.xlu0 %2366, %v2265
          %v2368 = vpop.permute.xlu0 %2367
          %2371 = vset.pattern.permute.xlu0 0
          %2372 = vperm.xlu0 %2371, %v2266
          %v2373 = vpop.permute.xlu0 %2372
          %2376 = vset.pattern.permute.xlu0 0
          %2377 = vperm.xlu0 %2376, %v2267
          %v2378 = vpop.permute.xlu0 %2377
          %2381 = vset.pattern.permute.xlu0 0
          %2382 = vperm.xlu0 %2381, %v2268
          %v2383 = vpop.permute.xlu0 %2382
          %2386 = vset.pattern.permute.xlu0 0
          %2387 = vperm.xlu0 %2386, %v2269
          %v2388 = vpop.permute.xlu0 %2387
          %2391 = vset.pattern.permute.xlu0 0
          %2392 = vperm.xlu0 %2391, %v2270
          %v2393 = vpop.permute.xlu0 %2392
          %2396 = vset.pattern.permute.xlu0 0
          %2397 = vperm.xlu0 %2396, %v2271
          %v2398 = vpop.permute.xlu0 %2397
          %v2400 = vsub.f32 %v2144, %v2323
          %v2401 = vsub.f32 %v2147, %v2328
          %v2402 = vsub.f32 %v2152, %v2333
          %v2403 = vsub.f32 %v2155, %v2338
          %v2404 = vsub.f32 %v2160, %v2343
          %v2405 = vsub.f32 %v2163, %v2348
          %v2406 = vsub.f32 %v2168, %v2353
          %v2407 = vsub.f32 %v2171, %v2358
          %v2408 = vsub.f32 %v2176, %v2363
          %v2409 = vsub.f32 %v2179, %v2368
          %v2410 = vsub.f32 %v2184, %v2373
          %v2411 = vsub.f32 %v2187, %v2378
          %v2412 = vsub.f32 %v2192, %v2383
          %v2413 = vsub.f32 %v2195, %v2388
          %v2414 = vsub.f32 %v2200, %v2393
          %v2415 = vsub.f32 %v2203, %v2398
          %v2416 = vmul.f32 %v2400, 1.442695
          %v2417 = vpow.pop %v2416
          %v2418 = vmul.f32 %v2401, 1.442695
          %v2419 = vpow.pop %v2418
          %v2420 = vmul.f32 %v2402, 1.442695
          %v2421 = vpow.pop %v2420
          %v2422 = vmul.f32 %v2403, 1.442695
          %v2423 = vpow.pop %v2422
          %v2424 = vmul.f32 %v2404, 1.442695
          %v2425 = vpow.pop %v2424
          %v2426 = vmul.f32 %v2405, 1.442695
          %v2427 = vpow.pop %v2426
          %v2428 = vmul.f32 %v2406, 1.442695
          %v2429 = vpow.pop %v2428
          %v2430 = vmul.f32 %v2407, 1.442695
          %v2431 = vpow.pop %v2430
          %v2432 = vmul.f32 %v2408, 1.442695
          %v2433 = vpow.pop %v2432
          %v2434 = vmul.f32 %v2409, 1.442695
          %v2435 = vpow.pop %v2434
          %v2436 = vmul.f32 %v2410, 1.442695
          %v2437 = vpow.pop %v2436
          %v2438 = vmul.f32 %v2411, 1.442695
          %v2439 = vpow.pop %v2438
          %v2440 = vmul.f32 %v2412, 1.442695
          %v2441 = vpow.pop %v2440
          %v2442 = vmul.f32 %v2413, 1.442695
          %v2443 = vpow.pop %v2442
          %v2444 = vmul.f32 %v2414, 1.442695
          %v2445 = vpow.pop %v2444
          %v2446 = vmul.f32 %v2415, 1.442695
          %v2447 = vpow.pop %v2446
          %s2448 = scalar_lea.vmem [#allocation6], %s2206
          %v2449 = vld [vmem:[%s2448] sm:$0xff]
          %v2450 = vld [vmem:[%s2448 + $0x8] sm:$0xff]
          %v2451 = vld [vmem:[%s2448 + $0x10] sm:$0xff]
          %v2452 = vld [vmem:[%s2448 + $0x18] sm:$0xff]
          %v2453 = vld [vmem:[%s2448 + $0x20] sm:$0xff]
          %v2454 = vld [vmem:[%s2448 + $0x28] sm:$0xff]
          %v2455 = vld [vmem:[%s2448 + $0x30] sm:$0xff]
          %v2456 = vld [vmem:[%s2448 + $0x38] sm:$0xff]
          %v2457 = vld [vmem:[%s2448 + $0x40] sm:$0xff]
          %v2458 = vld [vmem:[%s2448 + $0x48] sm:$0xff]
          %v2459 = vld [vmem:[%s2448 + $0x50] sm:$0xff]
          %v2460 = vld [vmem:[%s2448 + $0x58] sm:$0xff]
          %v2461 = vld [vmem:[%s2448 + $0x60] sm:$0xff]
          %v2462 = vld [vmem:[%s2448 + $0x68] sm:$0xff]
          %v2463 = vld [vmem:[%s2448 + $0x70] sm:$0xff]
          %v2464 = vld [vmem:[%s2448 + $0x78] sm:$0xff]
          %v2465 = vmul.f32 %v2289, %v2449
          %v2466 = vmul.f32 %v2291, %v2450
          %v2467 = vmul.f32 %v2293, %v2451
          %v2468 = vmul.f32 %v2295, %v2452
          %v2469 = vmul.f32 %v2297, %v2453
          %v2470 = vmul.f32 %v2299, %v2454
          %v2471 = vmul.f32 %v2301, %v2455
          %v2472 = vmul.f32 %v2303, %v2456
          %v2473 = vmul.f32 %v2305, %v2457
          %v2474 = vmul.f32 %v2307, %v2458
          %v2475 = vmul.f32 %v2309, %v2459
          %v2476 = vmul.f32 %v2311, %v2460
          %v2477 = vmul.f32 %v2313, %v2461
          %v2478 = vmul.f32 %v2315, %v2462
          %v2479 = vmul.f32 %v2317, %v2463
          %v2480 = vmul.f32 %v2319, %v2464
          %2481 = vadd.xlane.f32.xlu0 %v2417
          %v2482 = vpop.xlane.xlu0 %2481
          %2483 = vadd.xlane.f32.xlu0 %v2419
          %v2484 = vpop.xlane.xlu0 %2483
          %2485 = vadd.xlane.f32.xlu0 %v2421
          %v2486 = vpop.xlane.xlu0 %2485
          %2487 = vadd.xlane.f32.xlu0 %v2423
          %v2488 = vpop.xlane.xlu0 %2487
          %2489 = vadd.xlane.f32.xlu0 %v2425
          %v2490 = vpop.xlane.xlu0 %2489
          %2491 = vadd.xlane.f32.xlu0 %v2427
          %v2492 = vpop.xlane.xlu0 %2491
          %2493 = vadd.xlane.f32.xlu0 %v2429
          %v2494 = vpop.xlane.xlu0 %2493
          %2495 = vadd.xlane.f32.xlu0 %v2431
          %v2496 = vpop.xlane.xlu0 %2495
          %2497 = vadd.xlane.f32.xlu0 %v2433
          %v2498 = vpop.xlane.xlu0 %2497
          %2499 = vadd.xlane.f32.xlu0 %v2435
          %v2500 = vpop.xlane.xlu0 %2499
          %2501 = vadd.xlane.f32.xlu0 %v2437
          %v2502 = vpop.xlane.xlu0 %2501
          %2503 = vadd.xlane.f32.xlu0 %v2439
          %v2504 = vpop.xlane.xlu0 %2503
          %2505 = vadd.xlane.f32.xlu0 %v2441
          %v2506 = vpop.xlane.xlu0 %2505
          %2507 = vadd.xlane.f32.xlu0 %v2443
          %v2508 = vpop.xlane.xlu0 %2507
          %2509 = vadd.xlane.f32.xlu0 %v2445
          %v2510 = vpop.xlane.xlu0 %2509
          %2511 = vadd.xlane.f32.xlu0 %v2447
          %v2512 = vpop.xlane.xlu0 %2511
          %v2513 = vadd.f32 %v2465, %v2482
          %v2514 = vadd.f32 %v2466, %v2484
          %v2515 = vadd.f32 %v2467, %v2486
          %v2516 = vadd.f32 %v2468, %v2488
          %v2517 = vadd.f32 %v2469, %v2490
          %v2518 = vadd.f32 %v2470, %v2492
          %v2519 = vadd.f32 %v2471, %v2494
          %v2520 = vadd.f32 %v2472, %v2496
          %v2521 = vadd.f32 %v2473, %v2498
          %v2522 = vadd.f32 %v2474, %v2500
          %v2523 = vadd.f32 %v2475, %v2502
          %v2524 = vadd.f32 %v2476, %v2504
          %v2525 = vadd.f32 %v2477, %v2506
          %v2526 = vadd.f32 %v2478, %v2508
          %v2527 = vadd.f32 %v2479, %v2510
          %v2528 = vadd.f32 %v2480, %v2512
          %vm2529 = vcmask 7168
          %2530 = vst.msk [vmem:[%s2448] sm:$0xff] %vm2529, %v2513
          %2531 = vst.msk [vmem:[%s2448 + $0x8] sm:$0xff] %vm2529, %v2514
          %2532 = vst.msk [vmem:[%s2448 + $0x10] sm:$0xff] %vm2529, %v2515
          %2533 = vst.msk [vmem:[%s2448 + $0x18] sm:$0xff] %vm2529, %v2516
          %2534 = vst.msk [vmem:[%s2448 + $0x20] sm:$0xff] %vm2529, %v2517
          %2535 = vst.msk [vmem:[%s2448 + $0x28] sm:$0xff] %vm2529, %v2518
          %2536 = vst.msk [vmem:[%s2448 + $0x30] sm:$0xff] %vm2529, %v2519
          %2537 = vst.msk [vmem:[%s2448 + $0x38] sm:$0xff] %vm2529, %v2520
          %2538 = vst.msk [vmem:[%s2448 + $0x40] sm:$0xff] %vm2529, %v2521
          %2539 = vst.msk [vmem:[%s2448 + $0x48] sm:$0xff] %vm2529, %v2522
          %2540 = vst.msk [vmem:[%s2448 + $0x50] sm:$0xff] %vm2529, %v2523
          %2541 = vst.msk [vmem:[%s2448 + $0x58] sm:$0xff] %vm2529, %v2524
          %2542 = vst.msk [vmem:[%s2448 + $0x60] sm:$0xff] %vm2529, %v2525
          %2543 = vst.msk [vmem:[%s2448 + $0x68] sm:$0xff] %vm2529, %v2526
          %2544 = vst.msk [vmem:[%s2448 + $0x70] sm:$0xff] %vm2529, %v2527
          %2545 = vst.msk [vmem:[%s2448 + $0x78] sm:$0xff] %vm2529, %v2528
          %s2546 = scalar_lea.vmem [#allocation7], %s2206
          %v2547 = vld [vmem:[%s2546] sm:$0xff]
          %v2548 = vld [vmem:[%s2546 + $0x8] sm:$0xff]
          %v2549 = vld [vmem:[%s2546 + $0x10] sm:$0xff]
          %v2550 = vld [vmem:[%s2546 + $0x18] sm:$0xff]
          %v2551 = vld [vmem:[%s2546 + $0x20] sm:$0xff]
          %v2552 = vld [vmem:[%s2546 + $0x28] sm:$0xff]
          %v2553 = vld [vmem:[%s2546 + $0x30] sm:$0xff]
          %v2554 = vld [vmem:[%s2546 + $0x38] sm:$0xff]
          %v2555 = vld [vmem:[%s2546 + $0x40] sm:$0xff]
          %v2556 = vld [vmem:[%s2546 + $0x48] sm:$0xff]
          %v2557 = vld [vmem:[%s2546 + $0x50] sm:$0xff]
          %v2558 = vld [vmem:[%s2546 + $0x58] sm:$0xff]
          %v2559 = vld [vmem:[%s2546 + $0x60] sm:$0xff]
          %v2560 = vld [vmem:[%s2546 + $0x68] sm:$0xff]
          %v2561 = vld [vmem:[%s2546 + $0x70] sm:$0xff]
          %v2562 = vld [vmem:[%s2546 + $0x78] sm:$0xff]
          %2564 = vset.pattern.permute.xlu0 0
          %2565 = vperm.xlu0 %2564, %v2289
          %v2566 = vpop.permute.xlu0 %2565
          %2569 = vset.pattern.permute.xlu0 0
          %2570 = vperm.xlu0 %2569, %v2291
          %v2571 = vpop.permute.xlu0 %2570
          %2574 = vset.pattern.permute.xlu0 0
          %2575 = vperm.xlu0 %2574, %v2293
          %v2576 = vpop.permute.xlu0 %2575
          %2579 = vset.pattern.permute.xlu0 0
          %2580 = vperm.xlu0 %2579, %v2295
          %v2581 = vpop.permute.xlu0 %2580
          %2584 = vset.pattern.permute.xlu0 0
          %2585 = vperm.xlu0 %2584, %v2297
          %v2586 = vpop.permute.xlu0 %2585
          %2589 = vset.pattern.permute.xlu0 0
          %2590 = vperm.xlu0 %2589, %v2299
          %v2591 = vpop.permute.xlu0 %2590
          %2594 = vset.pattern.permute.xlu0 0
          %2595 = vperm.xlu0 %2594, %v2301
          %v2596 = vpop.permute.xlu0 %2595
          %2599 = vset.pattern.permute.xlu0 0
          %2600 = vperm.xlu0 %2599, %v2303
          %v2601 = vpop.permute.xlu0 %2600
          %2604 = vset.pattern.permute.xlu0 0
          %2605 = vperm.xlu0 %2604, %v2305
          %v2606 = vpop.permute.xlu0 %2605
          %2609 = vset.pattern.permute.xlu0 0
          %2610 = vperm.xlu0 %2609, %v2307
          %v2611 = vpop.permute.xlu0 %2610
          %2614 = vset.pattern.permute.xlu0 0
          %2615 = vperm.xlu0 %2614, %v2309
          %v2616 = vpop.permute.xlu0 %2615
          %2619 = vset.pattern.permute.xlu0 0
          %2620 = vperm.xlu0 %2619, %v2311
          %v2621 = vpop.permute.xlu0 %2620
          %2624 = vset.pattern.permute.xlu0 0
          %2625 = vperm.xlu0 %2624, %v2313
          %v2626 = vpop.permute.xlu0 %2625
          %2629 = vset.pattern.permute.xlu0 0
          %2630 = vperm.xlu0 %2629, %v2315
          %v2631 = vpop.permute.xlu0 %2630
          %2634 = vset.pattern.permute.xlu0 0
          %2635 = vperm.xlu0 %2634, %v2317
          %v2636 = vpop.permute.xlu0 %2635
          %2639 = vset.pattern.permute.xlu0 0
          %2640 = vperm.xlu0 %2639, %v2319
          %v2641 = vpop.permute.xlu0 %2640
          %v2643 = vmul.f32 %v2566, %v2547
          %v2644 = vmul.f32 %v2571, %v2548
          %v2645 = vmul.f32 %v2576, %v2549
          %v2646 = vmul.f32 %v2581, %v2550
          %v2647 = vmul.f32 %v2586, %v2551
          %v2648 = vmul.f32 %v2591, %v2552
          %v2649 = vmul.f32 %v2596, %v2553
          %v2650 = vmul.f32 %v2601, %v2554
          %v2651 = vmul.f32 %v2606, %v2555
          %v2652 = vmul.f32 %v2611, %v2556
          %v2653 = vmul.f32 %v2616, %v2557
          %v2654 = vmul.f32 %v2621, %v2558
          %v2655 = vmul.f32 %v2626, %v2559
          %v2656 = vmul.f32 %v2631, %v2560
          %v2657 = vmul.f32 %v2636, %v2561
          %v2658 = vmul.f32 %v2641, %v2562
          %v2659 = vpack.c.bf16 %v2419, %v2417
          %v2660 = vpack.c.bf16 %v2423, %v2421
          %v2661 = vpack.c.bf16 %v2427, %v2425
          %v2662 = vpack.c.bf16 %v2431, %v2429
          %v2663 = vpack.c.bf16 %v2435, %v2433
          %v2664 = vpack.c.bf16 %v2439, %v2437
          %v2665 = vpack.c.bf16 %v2443, %v2441
          %v2666 = vpack.c.bf16 %v2447, %v2445
          %s2667 = smul.u32 %s2078, 8
          %s2668 = smul.addr %s2667, 8
          %s2669 = scalar_lea.vmem [#allocation4], %s2668
          %v2670 = vld [vmem:[%s2669] sm:$0xff]
          %v2671 = vld [vmem:[%s2669 + $0x8] sm:$0xff]
          %v2672 = vld [vmem:[%s2669 + $0x10] sm:$0xff]
          %v2673 = vld [vmem:[%s2669 + $0x18] sm:$0xff]
          %v2674 = vld [vmem:[%s2669 + $0x20] sm:$0xff]
          %v2675 = vld [vmem:[%s2669 + $0x28] sm:$0xff]
          %v2676 = vld [vmem:[%s2669 + $0x30] sm:$0xff]
          %v2677 = vld [vmem:[%s2669 + $0x38] sm:$0xff]
          %2678 = vmatprep.subr.bf16.mxu0 0
          %2679 = vmatpush1.bf16.msra.mxu0 %v2670
          %2680 = vmatprep.subr.bf16.mxu0 0
          %2681 = vmatpush1.bf16.msra.mxu0 %v2671
          %2682 = vmatprep.subr.bf16.mxu0 0
          %2683 = vmatpush1.bf16.msra.mxu0 %v2672
          %2684 = vmatprep.subr.bf16.mxu0 0
          %2685 = vmatpush1.bf16.msra.mxu0 %v2673
          %2686 = vmatprep.subr.bf16.mxu0 0
          %2687 = vmatpush1.bf16.msra.mxu0 %v2674
          %2688 = vmatprep.subr.bf16.mxu0 0
          %2689 = vmatpush1.bf16.msra.mxu0 %v2675
          %2690 = vmatprep.subr.bf16.mxu0 0
          %2691 = vmatpush1.bf16.msra.mxu0 %v2676
          %2692 = vmatprep.subr.bf16.mxu0 0
          %2693 = vmatpush1.bf16.msra.mxu0 %v2677
          %2694 = vmatprep.subr.bf16.mxu0 0
          %2695 = vmatpush1.bf16.msra.mxu0 0
          %2696 = vmatprep.subr.bf16.mxu0 0
          %2697 = vmatpush1.bf16.msra.mxu0 0
          %2698 = vmatprep.subr.bf16.mxu0 0
          %2699 = vmatpush1.bf16.msra.mxu0 0
          %2700 = vmatprep.subr.bf16.mxu0 0
          %2701 = vmatpush1.bf16.msra.mxu0 0
          %2702 = vmatprep.subr.bf16.mxu0 0
          %2703 = vmatpush1.bf16.msra.mxu0 0
          %2704 = vmatprep.subr.bf16.mxu0 0
          %2705 = vmatpush1.bf16.msra.mxu0 0
          %2706 = vmatprep.subr.bf16.mxu0 0
          %2707 = vmatpush1.bf16.msra.mxu0 0
          %2708 = vmatprep.subr.bf16.mxu0 0
          %2709 = vmatpush1.bf16.msra.mxu0 0
          %2710 = vmatprep.mubr.bf16.mxu0 0
          %2711 = vmatmul.mubr.bf16.gmra.mrb[0].mxu0 %v2659
          %v2712 = vpop.f32.mrb[0].mxu0
          %v2713 = vadd.f32 0.0, %v2712
          %v2714 = vpop.f32.mrb[0].mxu0
          %v2715 = vpop.f32.mrb[0].mxu0
          %v2716 = vadd.f32 0.0, %v2715
          %v2717 = vpop.f32.mrb[0].mxu0
          %2718 = vmatprep.mubr.bf16.mxu0 0
          %2719 = vmatmul.mubr.bf16.gmra.mrb[0].mxu0 %v2660
          %v2720 = vpop.f32.mrb[0].mxu0
          %v2721 = vadd.f32 0.0, %v2720
          %v2722 = vpop.f32.mrb[0].mxu0
          %v2723 = vpop.f32.mrb[0].mxu0
          %v2724 = vadd.f32 0.0, %v2723
          %v2725 = vpop.f32.mrb[0].mxu0
          %2726 = vmatprep.mubr.bf16.mxu0 0
          %2727 = vmatmul.mubr.bf16.gmra.mrb[0].mxu0 %v2661
          %v2728 = vpop.f32.mrb[0].mxu0
          %v2729 = vadd.f32 0.0, %v2728
          %v2730 = vpop.f32.mrb[0].mxu0
          %v2731 = vpop.f32.mrb[0].mxu0
          %v2732 = vadd.f32 0.0, %v2731
          %v2733 = vpop.f32.mrb[0].mxu0
          %2734 = vmatprep.mubr.bf16.mxu0 0
          %2735 = vmatmul.mubr.bf16.gmra.mrb[0].mxu0 %v2662
          %v2736 = vpop.f32.mrb[0].mxu0
          %v2737 = vadd.f32 0.0, %v2736
          %v2738 = vpop.f32.mrb[0].mxu0
          %v2739 = vpop.f32.mrb[0].mxu0
          %v2740 = vadd.f32 0.0, %v2739
          %v2741 = vpop.f32.mrb[0].mxu0
          %2742 = vmatprep.mubr.bf16.mxu0 0
          %2743 = vmatmul.mubr.bf16.gmra.mrb[0].mxu0 %v2663
          %v2744 = vpop.f32.mrb[0].mxu0
          %v2745 = vadd.f32 0.0, %v2744
          %v2746 = vpop.f32.mrb[0].mxu0
          %v2747 = vpop.f32.mrb[0].mxu0
          %v2748 = vadd.f32 0.0, %v2747
          %v2749 = vpop.f32.mrb[0].mxu0
          %2750 = vmatprep.mubr.bf16.mxu0 0
          %2751 = vmatmul.mubr.bf16.gmra.mrb[0].mxu0 %v2664
          %v2752 = vpop.f32.mrb[0].mxu0
          %v2753 = vadd.f32 0.0, %v2752
          %v2754 = vpop.f32.mrb[0].mxu0
          %v2755 = vpop.f32.mrb[0].mxu0
          %v2756 = vadd.f32 0.0, %v2755
          %v2757 = vpop.f32.mrb[0].mxu0
          %2758 = vmatprep.mubr.bf16.mxu0 0
          %2759 = vmatmul.mubr.bf16.gmra.mrb[0].mxu0 %v2665
          %v2760 = vpop.f32.mrb[0].mxu0
          %v2761 = vadd.f32 0.0, %v2760
          %v2762 = vpop.f32.mrb[0].mxu0
          %v2763 = vpop.f32.mrb[0].mxu0
          %v2764 = vadd.f32 0.0, %v2763
          %v2765 = vpop.f32.mrb[0].mxu0
          %2766 = vmatprep.mubr.bf16.mxu0 0
          %2767 = vmatmul.mubr.bf16.gmra.mrb[0].mxu0 %v2666
          %v2768 = vpop.f32.mrb[0].mxu0
          %v2769 = vadd.f32 0.0, %v2768
          %v2770 = vpop.f32.mrb[0].mxu0
          %v2771 = vpop.f32.mrb[0].mxu0
          %v2772 = vadd.f32 0.0, %v2771
          %v2773 = vpop.f32.mrb[0].mxu0
          %2774 = vdwg.mxu0
          %v2775 = vadd.f32 %v2643, %v2713
          %v2776 = vadd.f32 %v2644, %v2716
          %v2777 = vadd.f32 %v2645, %v2721
          %v2778 = vadd.f32 %v2646, %v2724
          %v2779 = vadd.f32 %v2647, %v2729
          %v2780 = vadd.f32 %v2648, %v2732
          %v2781 = vadd.f32 %v2649, %v2737
          %v2782 = vadd.f32 %v2650, %v2740
          %v2783 = vadd.f32 %v2651, %v2745
          %v2784 = vadd.f32 %v2652, %v2748
          %v2785 = vadd.f32 %v2653, %v2753
          %v2786 = vadd.f32 %v2654, %v2756
          %v2787 = vadd.f32 %v2655, %v2761
          %v2788 = vadd.f32 %v2656, %v2764
          %v2789 = vadd.f32 %v2657, %v2769
          %v2790 = vadd.f32 %v2658, %v2772
          %2791 = vst.msk [vmem:[%s2546] sm:$0xff] %vm2084, %v2775
          %2792 = vst.msk [vmem:[%s2546 + $0x8] sm:$0xff] %vm2084, %v2776
          %2793 = vst.msk [vmem:[%s2546 + $0x10] sm:$0xff] %vm2084, %v2777
          %2794 = vst.msk [vmem:[%s2546 + $0x18] sm:$0xff] %vm2084, %v2778
          %2795 = vst.msk [vmem:[%s2546 + $0x20] sm:$0xff] %vm2084, %v2779
          %2796 = vst.msk [vmem:[%s2546 + $0x28] sm:$0xff] %vm2084, %v2780
          %2797 = vst.msk [vmem:[%s2546 + $0x30] sm:$0xff] %vm2084, %v2781
          %2798 = vst.msk [vmem:[%s2546 + $0x38] sm:$0xff] %vm2084, %v2782
          %2799 = vst.msk [vmem:[%s2546 + $0x40] sm:$0xff] %vm2084, %v2783
          %2800 = vst.msk [vmem:[%s2546 + $0x48] sm:$0xff] %vm2084, %v2784
          %2801 = vst.msk [vmem:[%s2546 + $0x50] sm:$0xff] %vm2084, %v2785
          %2802 = vst.msk [vmem:[%s2546 + $0x58] sm:$0xff] %vm2084, %v2786
          %2803 = vst.msk [vmem:[%s2546 + $0x60] sm:$0xff] %vm2084, %v2787
          %2804 = vst.msk [vmem:[%s2546 + $0x68] sm:$0xff] %vm2084, %v2788
          %2805 = vst.msk [vmem:[%s2546 + $0x70] sm:$0xff] %vm2084, %v2789
          %2806 = vst.msk [vmem:[%s2546 + $0x78] sm:$0xff] %vm2084, %v2790
          %2807 = vst.msk [vmem:[%s2207] sm:$0xff] %vm2529, %v2256
          %2808 = vst.msk [vmem:[%s2207 + $0x8] sm:$0xff] %vm2529, %v2257
          %2809 = vst.msk [vmem:[%s2207 + $0x10] sm:$0xff] %vm2529, %v2258
          %2810 = vst.msk [vmem:[%s2207 + $0x18] sm:$0xff] %vm2529, %v2259
          %2811 = vst.msk [vmem:[%s2207 + $0x20] sm:$0xff] %vm2529, %v2260
          %2812 = vst.msk [vmem:[%s2207 + $0x28] sm:$0xff] %vm2529, %v2261
          %2813 = vst.msk [vmem:[%s2207 + $0x30] sm:$0xff] %vm2529, %v2262
          %2814 = vst.msk [vmem:[%s2207 + $0x38] sm:$0xff] %vm2529, %v2263
          %2815 = vst.msk [vmem:[%s2207 + $0x40] sm:$0xff] %vm2529, %v2264
          %2816 = vst.msk [vmem:[%s2207 + $0x48] sm:$0xff] %vm2529, %v2265
          %2817 = vst.msk [vmem:[%s2207 + $0x50] sm:$0xff] %vm2529, %v2266
          %2818 = vst.msk [vmem:[%s2207 + $0x58] sm:$0xff] %vm2529, %v2267
          %2819 = vst.msk [vmem:[%s2207 + $0x60] sm:$0xff] %vm2529, %v2268
          %2820 = vst.msk [vmem:[%s2207 + $0x68] sm:$0xff] %vm2529, %v2269
          %2821 = vst.msk [vmem:[%s2207 + $0x70] sm:$0xff] %vm2529, %v2270
          %2822 = vst.msk [vmem:[%s2207 + $0x78] sm:$0xff] %vm2529, %v2271
        $region113: #{tpu_custom_call.1} parent=75 // loop_footer
          %s2065 = sadd.s32 1, %s2061
        $region114: #{tpu_custom_call.1} parent=75 // loop_footer_branch
          %2060 = sbr.rel target = $region110
        $region115: #{tpu_custom_call.1} parent=75 // loop_exit
          _
        %p2823 = scmp.eq.s32.totalorder %s43, 1
        // Predicated region
        $region116: #{tpu_custom_call.1} parent=75 // pred_check
          %p2824 = pneg %p2823
        $region117: #{tpu_custom_call.1} parent=75 // pred_check_branch
          %2826 = sbr.rel (%p2824) target = $region119
        $region118: #{tpu_custom_call.1} parent=75 // pred_region
          %v2827 = vld [vmem:[%s544] sm:$0xf]
          %v2828 = vld [vmem:[%s544 + $0x4] sm:$0xf]
          %v2829 = vld [vmem:[%s544 + $0x8] sm:$0xf]
          %v2830 = vld [vmem:[%s544 + $0xc] sm:$0xf]
          %v2831 = vld [vmem:[%s544 + $0x10] sm:$0xf]
          %v2832 = vld [vmem:[%s544 + $0x14] sm:$0xf]
          %v2833 = vld [vmem:[%s544 + $0x18] sm:$0xf]
          %v2834 = vld [vmem:[%s544 + $0x1c] sm:$0xf]
          %v2835 = vld [vmem:[%s544 + $0x20] sm:$0xf]
          %v2836 = vld [vmem:[%s544 + $0x24] sm:$0xf]
          %v2837 = vld [vmem:[%s544 + $0x28] sm:$0xf]
          %v2838 = vld [vmem:[%s544 + $0x2c] sm:$0xf]
          %v2839 = vld [vmem:[%s544 + $0x30] sm:$0xf]
          %v2840 = vld [vmem:[%s544 + $0x34] sm:$0xf]
          %v2841 = vld [vmem:[%s544 + $0x38] sm:$0xf]
          %v2842 = vld [vmem:[%s544 + $0x3c] sm:$0xf]
          %v2843 = vunpack.c.l.bf16 %v2827
          %v2844 = vunpack.c.l.bf16 %v2828
          %v2845 = vunpack.c.l.bf16 %v2829
          %v2846 = vunpack.c.l.bf16 %v2830
          %v2847 = vunpack.c.l.bf16 %v2831
          %v2848 = vunpack.c.l.bf16 %v2832
          %v2849 = vunpack.c.l.bf16 %v2833
          %v2850 = vunpack.c.l.bf16 %v2834
          %v2851 = vunpack.c.l.bf16 %v2835
          %v2852 = vunpack.c.l.bf16 %v2836
          %v2853 = vunpack.c.l.bf16 %v2837
          %v2854 = vunpack.c.l.bf16 %v2838
          %v2855 = vunpack.c.l.bf16 %v2839
          %v2856 = vunpack.c.l.bf16 %v2840
          %v2857 = vunpack.c.l.bf16 %v2841
          %v2858 = vunpack.c.l.bf16 %v2842
          %v2859 = vld [vmem:[#allocation6] sm:$0xff]
          %v2860 = vld [vmem:[#allocation6 + $0x8] sm:$0xff]
          %v2861 = vld [vmem:[#allocation6 + $0x10] sm:$0xff]
          %v2862 = vld [vmem:[#allocation6 + $0x18] sm:$0xff]
          %v2863 = vld [vmem:[#allocation6 + $0x20] sm:$0xff]
          %v2864 = vld [vmem:[#allocation6 + $0x28] sm:$0xff]
          %v2865 = vld [vmem:[#allocation6 + $0x30] sm:$0xff]
          %v2866 = vld [vmem:[#allocation6 + $0x38] sm:$0xff]
          %v2867 = vld [vmem:[#allocation6 + $0x40] sm:$0xff]
          %v2868 = vld [vmem:[#allocation6 + $0x48] sm:$0xff]
          %v2869 = vld [vmem:[#allocation6 + $0x50] sm:$0xff]
          %v2870 = vld [vmem:[#allocation6 + $0x58] sm:$0xff]
          %v2871 = vld [vmem:[#allocation6 + $0x60] sm:$0xff]
          %v2872 = vld [vmem:[#allocation6 + $0x68] sm:$0xff]
          %v2873 = vld [vmem:[#allocation6 + $0x70] sm:$0xff]
          %v2874 = vld [vmem:[#allocation6 + $0x78] sm:$0xff]
          %v2875 = vrcp.pop %v2859
          %v2876 = vrcp.pop %v2860
          %v2877 = vrcp.pop %v2861
          %v2878 = vrcp.pop %v2862
          %v2879 = vrcp.pop %v2863
          %v2880 = vrcp.pop %v2864
          %v2881 = vrcp.pop %v2865
          %v2882 = vrcp.pop %v2866
          %v2883 = vrcp.pop %v2867
          %v2884 = vrcp.pop %v2868
          %v2885 = vrcp.pop %v2869
          %v2886 = vrcp.pop %v2870
          %v2887 = vrcp.pop %v2871
          %v2888 = vrcp.pop %v2872
          %v2889 = vrcp.pop %v2873
          %v2890 = vrcp.pop %v2874
          %v2891 = vld [vmem:[#allocation7] sm:$0xff]
          %v2892 = vld [vmem:[#allocation7 + $0x8] sm:$0xff]
          %v2893 = vld [vmem:[#allocation7 + $0x10] sm:$0xff]
          %v2894 = vld [vmem:[#allocation7 + $0x18] sm:$0xff]
          %v2895 = vld [vmem:[#allocation7 + $0x20] sm:$0xff]
          %v2896 = vld [vmem:[#allocation7 + $0x28] sm:$0xff]
          %v2897 = vld [vmem:[#allocation7 + $0x30] sm:$0xff]
          %v2898 = vld [vmem:[#allocation7 + $0x38] sm:$0xff]
          %v2899 = vld [vmem:[#allocation7 + $0x40] sm:$0xff]
          %v2900 = vld [vmem:[#allocation7 + $0x48] sm:$0xff]
          %v2901 = vld [vmem:[#allocation7 + $0x50] sm:$0xff]
          %v2902 = vld [vmem:[#allocation7 + $0x58] sm:$0xff]
          %v2903 = vld [vmem:[#allocation7 + $0x60] sm:$0xff]
          %v2904 = vld [vmem:[#allocation7 + $0x68] sm:$0xff]
          %v2905 = vld [vmem:[#allocation7 + $0x70] sm:$0xff]
          %v2906 = vld [vmem:[#allocation7 + $0x78] sm:$0xff]
          %2908 = vset.pattern.permute.xlu0 0
          %2909 = vperm.xlu0 %2908, %v2875
          %v2910 = vpop.permute.xlu0 %2909
          %2913 = vset.pattern.permute.xlu0 0
          %2914 = vperm.xlu0 %2913, %v2876
          %v2915 = vpop.permute.xlu0 %2914
          %2918 = vset.pattern.permute.xlu0 0
          %2919 = vperm.xlu0 %2918, %v2877
          %v2920 = vpop.permute.xlu0 %2919
          %2923 = vset.pattern.permute.xlu0 0
          %2924 = vperm.xlu0 %2923, %v2878
          %v2925 = vpop.permute.xlu0 %2924
          %2928 = vset.pattern.permute.xlu0 0
          %2929 = vperm.xlu0 %2928, %v2879
          %v2930 = vpop.permute.xlu0 %2929
          %2933 = vset.pattern.permute.xlu0 0
          %2934 = vperm.xlu0 %2933, %v2880
          %v2935 = vpop.permute.xlu0 %2934
          %2938 = vset.pattern.permute.xlu0 0
          %2939 = vperm.xlu0 %2938, %v2881
          %v2940 = vpop.permute.xlu0 %2939
          %2943 = vset.pattern.permute.xlu0 0
          %2944 = vperm.xlu0 %2943, %v2882
          %v2945 = vpop.permute.xlu0 %2944
          %2948 = vset.pattern.permute.xlu0 0
          %2949 = vperm.xlu0 %2948, %v2883
          %v2950 = vpop.permute.xlu0 %2949
          %2953 = vset.pattern.permute.xlu0 0
          %2954 = vperm.xlu0 %2953, %v2884
          %v2955 = vpop.permute.xlu0 %2954
          %2958 = vset.pattern.permute.xlu0 0
          %2959 = vperm.xlu0 %2958, %v2885
          %v2960 = vpop.permute.xlu0 %2959
          %2963 = vset.pattern.permute.xlu0 0
          %2964 = vperm.xlu0 %2963, %v2886
          %v2965 = vpop.permute.xlu0 %2964
          %2968 = vset.pattern.permute.xlu0 0
          %2969 = vperm.xlu0 %2968, %v2887
          %v2970 = vpop.permute.xlu0 %2969
          %2973 = vset.pattern.permute.xlu0 0
          %2974 = vperm.xlu0 %2973, %v2888
          %v2975 = vpop.permute.xlu0 %2974
          %2978 = vset.pattern.permute.xlu0 0
          %2979 = vperm.xlu0 %2978, %v2889
          %v2980 = vpop.permute.xlu0 %2979
          %2983 = vset.pattern.permute.xlu0 0
          %2984 = vperm.xlu0 %2983, %v2890
          %v2985 = vpop.permute.xlu0 %2984
          %v2987 = vmul.f32 %v2891, %v2910
          %v2988 = vmul.f32 %v2892, %v2915
          %v2989 = vmul.f32 %v2893, %v2920
          %v2990 = vmul.f32 %v2894, %v2925
          %v2991 = vmul.f32 %v2895, %v2930
          %v2992 = vmul.f32 %v2896, %v2935
          %v2993 = vmul.f32 %v2897, %v2940
          %v2994 = vmul.f32 %v2898, %v2945
          %v2995 = vmul.f32 %v2899, %v2950
          %v2996 = vmul.f32 %v2900, %v2955
          %v2997 = vmul.f32 %v2901, %v2960
          %v2998 = vmul.f32 %v2902, %v2965
          %v2999 = vmul.f32 %v2903, %v2970
          %v3000 = vmul.f32 %v2904, %v2975
          %v3001 = vmul.f32 %v2905, %v2980
          %v3002 = vmul.f32 %v2906, %v2985
          %vm3003 = vcmask 261120
          %3004 = vst.msk [vmem:[#allocation8] sm:$0xff] %vm3003, %v2987
          %3005 = vst.msk [vmem:[#allocation8 + $0x8] sm:$0xff] %vm3003, %v2988
          %3006 = vst.msk [vmem:[#allocation8 + $0x10] sm:$0xff] %vm3003, %v2989
          %3007 = vst.msk [vmem:[#allocation8 + $0x18] sm:$0xff] %vm3003, %v2990
          %3008 = vst.msk [vmem:[#allocation8 + $0x20] sm:$0xff] %vm3003, %v2991
          %3009 = vst.msk [vmem:[#allocation8 + $0x28] sm:$0xff] %vm3003, %v2992
          %3010 = vst.msk [vmem:[#allocation8 + $0x30] sm:$0xff] %vm3003, %v2993
          %3011 = vst.msk [vmem:[#allocation8 + $0x38] sm:$0xff] %vm3003, %v2994
          %3012 = vst.msk [vmem:[#allocation8 + $0x40] sm:$0xff] %vm3003, %v2995
          %3013 = vst.msk [vmem:[#allocation8 + $0x48] sm:$0xff] %vm3003, %v2996
          %3014 = vst.msk [vmem:[#allocation8 + $0x50] sm:$0xff] %vm3003, %v2997
          %3015 = vst.msk [vmem:[#allocation8 + $0x58] sm:$0xff] %vm3003, %v2998
          %3016 = vst.msk [vmem:[#allocation8 + $0x60] sm:$0xff] %vm3003, %v2999
          %3017 = vst.msk [vmem:[#allocation8 + $0x68] sm:$0xff] %vm3003, %v3000
          %3018 = vst.msk [vmem:[#allocation8 + $0x70] sm:$0xff] %vm3003, %v3001
          %3019 = vst.msk [vmem:[#allocation8 + $0x78] sm:$0xff] %vm3003, %v3002
          %s3020 = scalar_lea.vmem [#allocation6], 128
          %v3021 = vld [vmem:[%s3020] sm:$0xff]
          %v3022 = vld [vmem:[%s3020 + $0x8] sm:$0xff]
          %v3023 = vld [vmem:[%s3020 + $0x10] sm:$0xff]
          %v3024 = vld [vmem:[%s3020 + $0x18] sm:$0xff]
          %v3025 = vld [vmem:[%s3020 + $0x20] sm:$0xff]
          %v3026 = vld [vmem:[%s3020 + $0x28] sm:$0xff]
          %v3027 = vld [vmem:[%s3020 + $0x30] sm:$0xff]
          %v3028 = vld [vmem:[%s3020 + $0x38] sm:$0xff]
          %v3029 = vld [vmem:[%s3020 + $0x40] sm:$0xff]
          %v3030 = vld [vmem:[%s3020 + $0x48] sm:$0xff]
          %v3031 = vld [vmem:[%s3020 + $0x50] sm:$0xff]
          %v3032 = vld [vmem:[%s3020 + $0x58] sm:$0xff]
          %v3033 = vld [vmem:[%s3020 + $0x60] sm:$0xff]
          %v3034 = vld [vmem:[%s3020 + $0x68] sm:$0xff]
          %v3035 = vld [vmem:[%s3020 + $0x70] sm:$0xff]
          %v3036 = vld [vmem:[%s3020 + $0x78] sm:$0xff]
          %v3037 = vrcp.pop %v3021
          %v3038 = vrcp.pop %v3022
          %v3039 = vrcp.pop %v3023
          %v3040 = vrcp.pop %v3024
          %v3041 = vrcp.pop %v3025
          %v3042 = vrcp.pop %v3026
          %v3043 = vrcp.pop %v3027
          %v3044 = vrcp.pop %v3028
          %v3045 = vrcp.pop %v3029
          %v3046 = vrcp.pop %v3030
          %v3047 = vrcp.pop %v3031
          %v3048 = vrcp.pop %v3032
          %v3049 = vrcp.pop %v3033
          %v3050 = vrcp.pop %v3034
          %v3051 = vrcp.pop %v3035
          %v3052 = vrcp.pop %v3036
          %s3053 = scalar_lea.vmem [#allocation7], 128
          %v3054 = vld [vmem:[%s3053] sm:$0xff]
          %v3055 = vld [vmem:[%s3053 + $0x8] sm:$0xff]
          %v3056 = vld [vmem:[%s3053 + $0x10] sm:$0xff]
          %v3057 = vld [vmem:[%s3053 + $0x18] sm:$0xff]
          %v3058 = vld [vmem:[%s3053 + $0x20] sm:$0xff]
          %v3059 = vld [vmem:[%s3053 + $0x28] sm:$0xff]
          %v3060 = vld [vmem:[%s3053 + $0x30] sm:$0xff]
          %v3061 = vld [vmem:[%s3053 + $0x38] sm:$0xff]
          %v3062 = vld [vmem:[%s3053 + $0x40] sm:$0xff]
          %v3063 = vld [vmem:[%s3053 + $0x48] sm:$0xff]
          %v3064 = vld [vmem:[%s3053 + $0x50] sm:$0xff]
          %v3065 = vld [vmem:[%s3053 + $0x58] sm:$0xff]
          %v3066 = vld [vmem:[%s3053 + $0x60] sm:$0xff]
          %v3067 = vld [vmem:[%s3053 + $0x68] sm:$0xff]
          %v3068 = vld [vmem:[%s3053 + $0x70] sm:$0xff]
          %v3069 = vld [vmem:[%s3053 + $0x78] sm:$0xff]
          %3071 = vset.pattern.permute.xlu0 0
          %3072 = vperm.xlu0 %3071, %v3037
          %v3073 = vpop.permute.xlu0 %3072
          %3076 = vset.pattern.permute.xlu0 0
          %3077 = vperm.xlu0 %3076, %v3038
          %v3078 = vpop.permute.xlu0 %3077
          %3081 = vset.pattern.permute.xlu0 0
          %3082 = vperm.xlu0 %3081, %v3039
          %v3083 = vpop.permute.xlu0 %3082
          %3086 = vset.pattern.permute.xlu0 0
          %3087 = vperm.xlu0 %3086, %v3040
          %v3088 = vpop.permute.xlu0 %3087
          %3091 = vset.pattern.permute.xlu0 0
          %3092 = vperm.xlu0 %3091, %v3041
          %v3093 = vpop.permute.xlu0 %3092
          %3096 = vset.pattern.permute.xlu0 0
          %3097 = vperm.xlu0 %3096, %v3042
          %v3098 = vpop.permute.xlu0 %3097
          %3101 = vset.pattern.permute.xlu0 0
          %3102 = vperm.xlu0 %3101, %v3043
          %v3103 = vpop.permute.xlu0 %3102
          %3106 = vset.pattern.permute.xlu0 0
          %3107 = vperm.xlu0 %3106, %v3044
          %v3108 = vpop.permute.xlu0 %3107
          %3111 = vset.pattern.permute.xlu0 0
          %3112 = vperm.xlu0 %3111, %v3045
          %v3113 = vpop.permute.xlu0 %3112
          %3116 = vset.pattern.permute.xlu0 0
          %3117 = vperm.xlu0 %3116, %v3046
          %v3118 = vpop.permute.xlu0 %3117
          %3121 = vset.pattern.permute.xlu0 0
          %3122 = vperm.xlu0 %3121, %v3047
          %v3123 = vpop.permute.xlu0 %3122
          %3126 = vset.pattern.permute.xlu0 0
          %3127 = vperm.xlu0 %3126, %v3048
          %v3128 = vpop.permute.xlu0 %3127
          %3131 = vset.pattern.permute.xlu0 0
          %3132 = vperm.xlu0 %3131, %v3049
          %v3133 = vpop.permute.xlu0 %3132
          %3136 = vset.pattern.permute.xlu0 0
          %3137 = vperm.xlu0 %3136, %v3050
          %v3138 = vpop.permute.xlu0 %3137
          %3141 = vset.pattern.permute.xlu0 0
          %3142 = vperm.xlu0 %3141, %v3051
          %v3143 = vpop.permute.xlu0 %3142
          %3146 = vset.pattern.permute.xlu0 0
          %3147 = vperm.xlu0 %3146, %v3052
          %v3148 = vpop.permute.xlu0 %3147
          %v3150 = vmul.f32 %v3054, %v3073
          %v3151 = vmul.f32 %v3055, %v3078
          %v3152 = vmul.f32 %v3056, %v3083
          %v3153 = vmul.f32 %v3057, %v3088
          %v3154 = vmul.f32 %v3058, %v3093
          %v3155 = vmul.f32 %v3059, %v3098
          %v3156 = vmul.f32 %v3060, %v3103
          %v3157 = vmul.f32 %v3061, %v3108
          %v3158 = vmul.f32 %v3062, %v3113
          %v3159 = vmul.f32 %v3063, %v3118
          %v3160 = vmul.f32 %v3064, %v3123
          %v3161 = vmul.f32 %v3065, %v3128
          %v3162 = vmul.f32 %v3066, %v3133
          %v3163 = vmul.f32 %v3067, %v3138
          %v3164 = vmul.f32 %v3068, %v3143
          %v3165 = vmul.f32 %v3069, %v3148
          %3182 = vrot.lane.b32.xlu0 %v3150, 32
          %v3183 = vpop.permute.xlu0 %3182
          %3184 = vrot.lane.b32.xlu0 %v3151, 32
          %v3185 = vpop.permute.xlu0 %3184
          %3186 = vrot.lane.b32.xlu0 %v3152, 32
          %v3187 = vpop.permute.xlu0 %3186
          %3188 = vrot.lane.b32.xlu0 %v3153, 32
          %v3189 = vpop.permute.xlu0 %3188
          %3190 = vrot.lane.b32.xlu0 %v3154, 32
          %v3191 = vpop.permute.xlu0 %3190
          %3192 = vrot.lane.b32.xlu0 %v3155, 32
          %v3193 = vpop.permute.xlu0 %3192
          %3194 = vrot.lane.b32.xlu0 %v3156, 32
          %v3195 = vpop.permute.xlu0 %3194
          %3196 = vrot.lane.b32.xlu0 %v3157, 32
          %v3197 = vpop.permute.xlu0 %3196
          %3198 = vrot.lane.b32.xlu0 %v3158, 32
          %v3199 = vpop.permute.xlu0 %3198
          %3200 = vrot.lane.b32.xlu0 %v3159, 32
          %v3201 = vpop.permute.xlu0 %3200
          %3202 = vrot.lane.b32.xlu0 %v3160, 32
          %v3203 = vpop.permute.xlu0 %3202
          %3204 = vrot.lane.b32.xlu0 %v3161, 32
          %v3205 = vpop.permute.xlu0 %3204
          %3206 = vrot.lane.b32.xlu0 %v3162, 32
          %v3207 = vpop.permute.xlu0 %3206
          %3208 = vrot.lane.b32.xlu0 %v3163, 32
          %v3209 = vpop.permute.xlu0 %3208
          %3210 = vrot.lane.b32.xlu0 %v3164, 32
          %v3211 = vpop.permute.xlu0 %3210
          %3212 = vrot.lane.b32.xlu0 %v3165, 32
          %v3213 = vpop.permute.xlu0 %3212
          %vm3230 = vcmask 523520
          %3231 = vst.msk [vmem:[#allocation8] sm:$0xff] %vm3230, %v3183
          %3232 = vst.msk [vmem:[#allocation8 + $0x8] sm:$0xff] %vm3230, %v3185
          %3233 = vst.msk [vmem:[#allocation8 + $0x10] sm:$0xff] %vm3230, %v3187
          %3234 = vst.msk [vmem:[#allocation8 + $0x18] sm:$0xff] %vm3230, %v3189
          %3235 = vst.msk [vmem:[#allocation8 + $0x20] sm:$0xff] %vm3230, %v3191
          %3236 = vst.msk [vmem:[#allocation8 + $0x28] sm:$0xff] %vm3230, %v3193
          %3237 = vst.msk [vmem:[#allocation8 + $0x30] sm:$0xff] %vm3230, %v3195
          %3238 = vst.msk [vmem:[#allocation8 + $0x38] sm:$0xff] %vm3230, %v3197
          %3239 = vst.msk [vmem:[#allocation8 + $0x40] sm:$0xff] %vm3230, %v3199
          %3240 = vst.msk [vmem:[#allocation8 + $0x48] sm:$0xff] %vm3230, %v3201
          %3241 = vst.msk [vmem:[#allocation8 + $0x50] sm:$0xff] %vm3230, %v3203
          %3242 = vst.msk [vmem:[#allocation8 + $0x58] sm:$0xff] %vm3230, %v3205
          %3243 = vst.msk [vmem:[#allocation8 + $0x60] sm:$0xff] %vm3230, %v3207
          %3244 = vst.msk [vmem:[#allocation8 + $0x68] sm:$0xff] %vm3230, %v3209
          %3245 = vst.msk [vmem:[#allocation8 + $0x70] sm:$0xff] %vm3230, %v3211
          %3246 = vst.msk [vmem:[#allocation8 + $0x78] sm:$0xff] %vm3230, %v3213
          %s3247 = scalar_lea.vmem [#allocation6], 256
          %v3248 = vld [vmem:[%s3247] sm:$0xff]
          %v3249 = vld [vmem:[%s3247 + $0x8] sm:$0xff]
          %v3250 = vld [vmem:[%s3247 + $0x10] sm:$0xff]
          %v3251 = vld [vmem:[%s3247 + $0x18] sm:$0xff]
          %v3252 = vld [vmem:[%s3247 + $0x20] sm:$0xff]
          %v3253 = vld [vmem:[%s3247 + $0x28] sm:$0xff]
          %v3254 = vld [vmem:[%s3247 + $0x30] sm:$0xff]
          %v3255 = vld [vmem:[%s3247 + $0x38] sm:$0xff]
          %v3256 = vld [vmem:[%s3247 + $0x40] sm:$0xff]
          %v3257 = vld [vmem:[%s3247 + $0x48] sm:$0xff]
          %v3258 = vld [vmem:[%s3247 + $0x50] sm:$0xff]
          %v3259 = vld [vmem:[%s3247 + $0x58] sm:$0xff]
          %v3260 = vld [vmem:[%s3247 + $0x60] sm:$0xff]
          %v3261 = vld [vmem:[%s3247 + $0x68] sm:$0xff]
          %v3262 = vld [vmem:[%s3247 + $0x70] sm:$0xff]
          %v3263 = vld [vmem:[%s3247 + $0x78] sm:$0xff]
          %v3264 = vrcp.pop %v3248
          %v3265 = vrcp.pop %v3249
          %v3266 = vrcp.pop %v3250
          %v3267 = vrcp.pop %v3251
          %v3268 = vrcp.pop %v3252
          %v3269 = vrcp.pop %v3253
          %v3270 = vrcp.pop %v3254
          %v3271 = vrcp.pop %v3255
          %v3272 = vrcp.pop %v3256
          %v3273 = vrcp.pop %v3257
          %v3274 = vrcp.pop %v3258
          %v3275 = vrcp.pop %v3259
          %v3276 = vrcp.pop %v3260
          %v3277 = vrcp.pop %v3261
          %v3278 = vrcp.pop %v3262
          %v3279 = vrcp.pop %v3263
          %s3280 = scalar_lea.vmem [#allocation7], 256
          %v3281 = vld [vmem:[%s3280] sm:$0xff]
          %v3282 = vld [vmem:[%s3280 + $0x8] sm:$0xff]
          %v3283 = vld [vmem:[%s3280 + $0x10] sm:$0xff]
          %v3284 = vld [vmem:[%s3280 + $0x18] sm:$0xff]
          %v3285 = vld [vmem:[%s3280 + $0x20] sm:$0xff]
          %v3286 = vld [vmem:[%s3280 + $0x28] sm:$0xff]
          %v3287 = vld [vmem:[%s3280 + $0x30] sm:$0xff]
          %v3288 = vld [vmem:[%s3280 + $0x38] sm:$0xff]
          %v3289 = vld [vmem:[%s3280 + $0x40] sm:$0xff]
          %v3290 = vld [vmem:[%s3280 + $0x48] sm:$0xff]
          %v3291 = vld [vmem:[%s3280 + $0x50] sm:$0xff]
          %v3292 = vld [vmem:[%s3280 + $0x58] sm:$0xff]
          %v3293 = vld [vmem:[%s3280 + $0x60] sm:$0xff]
          %v3294 = vld [vmem:[%s3280 + $0x68] sm:$0xff]
          %v3295 = vld [vmem:[%s3280 + $0x70] sm:$0xff]
          %v3296 = vld [vmem:[%s3280 + $0x78] sm:$0xff]
          %3298 = vset.pattern.permute.xlu0 0
          %3299 = vperm.xlu0 %3298, %v3264
          %v3300 = vpop.permute.xlu0 %3299
          %3303 = vset.pattern.permute.xlu0 0
          %3304 = vperm.xlu0 %3303, %v3265
          %v3305 = vpop.permute.xlu0 %3304
          %3308 = vset.pattern.permute.xlu0 0
          %3309 = vperm.xlu0 %3308, %v3266
          %v3310 = vpop.permute.xlu0 %3309
          %3313 = vset.pattern.permute.xlu0 0
          %3314 = vperm.xlu0 %3313, %v3267
          %v3315 = vpop.permute.xlu0 %3314
          %3318 = vset.pattern.permute.xlu0 0
          %3319 = vperm.xlu0 %3318, %v3268
          %v3320 = vpop.permute.xlu0 %3319
          %3323 = vset.pattern.permute.xlu0 0
          %3324 = vperm.xlu0 %3323, %v3269
          %v3325 = vpop.permute.xlu0 %3324
          %3328 = vset.pattern.permute.xlu0 0
          %3329 = vperm.xlu0 %3328, %v3270
          %v3330 = vpop.permute.xlu0 %3329
          %3333 = vset.pattern.permute.xlu0 0
          %3334 = vperm.xlu0 %3333, %v3271
          %v3335 = vpop.permute.xlu0 %3334
          %3338 = vset.pattern.permute.xlu0 0
          %3339 = vperm.xlu0 %3338, %v3272
          %v3340 = vpop.permute.xlu0 %3339
          %3343 = vset.pattern.permute.xlu0 0
          %3344 = vperm.xlu0 %3343, %v3273
          %v3345 = vpop.permute.xlu0 %3344
          %3348 = vset.pattern.permute.xlu0 0
          %3349 = vperm.xlu0 %3348, %v3274
          %v3350 = vpop.permute.xlu0 %3349
          %3353 = vset.pattern.permute.xlu0 0
          %3354 = vperm.xlu0 %3353, %v3275
          %v3355 = vpop.permute.xlu0 %3354
          %3358 = vset.pattern.permute.xlu0 0
          %3359 = vperm.xlu0 %3358, %v3276
          %v3360 = vpop.permute.xlu0 %3359
          %3363 = vset.pattern.permute.xlu0 0
          %3364 = vperm.xlu0 %3363, %v3277
          %v3365 = vpop.permute.xlu0 %3364
          %3368 = vset.pattern.permute.xlu0 0
          %3369 = vperm.xlu0 %3368, %v3278
          %v3370 = vpop.permute.xlu0 %3369
          %3373 = vset.pattern.permute.xlu0 0
          %3374 = vperm.xlu0 %3373, %v3279
          %v3375 = vpop.permute.xlu0 %3374
          %v3377 = vmul.f32 %v3281, %v3300
          %v3378 = vmul.f32 %v3282, %v3305
          %v3379 = vmul.f32 %v3283, %v3310
          %v3380 = vmul.f32 %v3284, %v3315
          %v3381 = vmul.f32 %v3285, %v3320
          %v3382 = vmul.f32 %v3286, %v3325
          %v3383 = vmul.f32 %v3287, %v3330
          %v3384 = vmul.f32 %v3288, %v3335
          %v3385 = vmul.f32 %v3289, %v3340
          %v3386 = vmul.f32 %v3290, %v3345
          %v3387 = vmul.f32 %v3291, %v3350
          %v3388 = vmul.f32 %v3292, %v3355
          %v3389 = vmul.f32 %v3293, %v3360
          %v3390 = vmul.f32 %v3294, %v3365
          %v3391 = vmul.f32 %v3295, %v3370
          %v3392 = vmul.f32 %v3296, %v3375
          %3409 = vrot.lane.b32.xlu0 %v3377, 64
          %v3410 = vpop.permute.xlu0 %3409
          %3411 = vrot.lane.b32.xlu0 %v3378, 64
          %v3412 = vpop.permute.xlu0 %3411
          %3413 = vrot.lane.b32.xlu0 %v3379, 64
          %v3414 = vpop.permute.xlu0 %3413
          %3415 = vrot.lane.b32.xlu0 %v3380, 64
          %v3416 = vpop.permute.xlu0 %3415
          %3417 = vrot.lane.b32.xlu0 %v3381, 64
          %v3418 = vpop.permute.xlu0 %3417
          %3419 = vrot.lane.b32.xlu0 %v3382, 64
          %v3420 = vpop.permute.xlu0 %3419
          %3421 = vrot.lane.b32.xlu0 %v3383, 64
          %v3422 = vpop.permute.xlu0 %3421
          %3423 = vrot.lane.b32.xlu0 %v3384, 64
          %v3424 = vpop.permute.xlu0 %3423
          %3425 = vrot.lane.b32.xlu0 %v3385, 64
          %v3426 = vpop.permute.xlu0 %3425
          %3427 = vrot.lane.b32.xlu0 %v3386, 64
          %v3428 = vpop.permute.xlu0 %3427
          %3429 = vrot.lane.b32.xlu0 %v3387, 64
          %v3430 = vpop.permute.xlu0 %3429
          %3431 = vrot.lane.b32.xlu0 %v3388, 64
          %v3432 = vpop.permute.xlu0 %3431
          %3433 = vrot.lane.b32.xlu0 %v3389, 64
          %v3434 = vpop.permute.xlu0 %3433
          %3435 = vrot.lane.b32.xlu0 %v3390, 64
          %v3436 = vpop.permute.xlu0 %3435
          %3437 = vrot.lane.b32.xlu0 %v3391, 64
          %v3438 = vpop.permute.xlu0 %3437
          %3439 = vrot.lane.b32.xlu0 %v3392, 64
          %v3440 = vpop.permute.xlu0 %3439
          %vm3457 = vcmask 785920
          %3458 = vst.msk [vmem:[#allocation8] sm:$0xff] %vm3457, %v3410
          %3459 = vst.msk [vmem:[#allocation8 + $0x8] sm:$0xff] %vm3457, %v3412
          %3460 = vst.msk [vmem:[#allocation8 + $0x10] sm:$0xff] %vm3457, %v3414
          %3461 = vst.msk [vmem:[#allocation8 + $0x18] sm:$0xff] %vm3457, %v3416
          %3462 = vst.msk [vmem:[#allocation8 + $0x20] sm:$0xff] %vm3457, %v3418
          %3463 = vst.msk [vmem:[#allocation8 + $0x28] sm:$0xff] %vm3457, %v3420
          %3464 = vst.msk [vmem:[#allocation8 + $0x30] sm:$0xff] %vm3457, %v3422
          %3465 = vst.msk [vmem:[#allocation8 + $0x38] sm:$0xff] %vm3457, %v3424
          %3466 = vst.msk [vmem:[#allocation8 + $0x40] sm:$0xff] %vm3457, %v3426
          %3467 = vst.msk [vmem:[#allocation8 + $0x48] sm:$0xff] %vm3457, %v3428
          %3468 = vst.msk [vmem:[#allocation8 + $0x50] sm:$0xff] %vm3457, %v3430
          %3469 = vst.msk [vmem:[#allocation8 + $0x58] sm:$0xff] %vm3457, %v3432
          %3470 = vst.msk [vmem:[#allocation8 + $0x60] sm:$0xff] %vm3457, %v3434
          %3471 = vst.msk [vmem:[#allocation8 + $0x68] sm:$0xff] %vm3457, %v3436
          %3472 = vst.msk [vmem:[#allocation8 + $0x70] sm:$0xff] %vm3457, %v3438
          %3473 = vst.msk [vmem:[#allocation8 + $0x78] sm:$0xff] %vm3457, %v3440
          %s3474 = scalar_lea.vmem [#allocation6], 384
          %v3475 = vld [vmem:[%s3474] sm:$0xff]
          %v3476 = vld [vmem:[%s3474 + $0x8] sm:$0xff]
          %v3477 = vld [vmem:[%s3474 + $0x10] sm:$0xff]
          %v3478 = vld [vmem:[%s3474 + $0x18] sm:$0xff]
          %v3479 = vld [vmem:[%s3474 + $0x20] sm:$0xff]
          %v3480 = vld [vmem:[%s3474 + $0x28] sm:$0xff]
          %v3481 = vld [vmem:[%s3474 + $0x30] sm:$0xff]
          %v3482 = vld [vmem:[%s3474 + $0x38] sm:$0xff]
          %v3483 = vld [vmem:[%s3474 + $0x40] sm:$0xff]
          %v3484 = vld [vmem:[%s3474 + $0x48] sm:$0xff]
          %v3485 = vld [vmem:[%s3474 + $0x50] sm:$0xff]
          %v3486 = vld [vmem:[%s3474 + $0x58] sm:$0xff]
          %v3487 = vld [vmem:[%s3474 + $0x60] sm:$0xff]
          %v3488 = vld [vmem:[%s3474 + $0x68] sm:$0xff]
          %v3489 = vld [vmem:[%s3474 + $0x70] sm:$0xff]
          %v3490 = vld [vmem:[%s3474 + $0x78] sm:$0xff]
          %v3491 = vrcp.pop %v3475
          %v3492 = vrcp.pop %v3476
          %v3493 = vrcp.pop %v3477
          %v3494 = vrcp.pop %v3478
          %v3495 = vrcp.pop %v3479
          %v3496 = vrcp.pop %v3480
          %v3497 = vrcp.pop %v3481
          %v3498 = vrcp.pop %v3482
          %v3499 = vrcp.pop %v3483
          %v3500 = vrcp.pop %v3484
          %v3501 = vrcp.pop %v3485
          %v3502 = vrcp.pop %v3486
          %v3503 = vrcp.pop %v3487
          %v3504 = vrcp.pop %v3488
          %v3505 = vrcp.pop %v3489
          %v3506 = vrcp.pop %v3490
          %s3507 = scalar_lea.vmem [#allocation7], 384
          %v3508 = vld [vmem:[%s3507] sm:$0xff]
          %v3509 = vld [vmem:[%s3507 + $0x8] sm:$0xff]
          %v3510 = vld [vmem:[%s3507 + $0x10] sm:$0xff]
          %v3511 = vld [vmem:[%s3507 + $0x18] sm:$0xff]
          %v3512 = vld [vmem:[%s3507 + $0x20] sm:$0xff]
          %v3513 = vld [vmem:[%s3507 + $0x28] sm:$0xff]
          %v3514 = vld [vmem:[%s3507 + $0x30] sm:$0xff]
          %v3515 = vld [vmem:[%s3507 + $0x38] sm:$0xff]
          %v3516 = vld [vmem:[%s3507 + $0x40] sm:$0xff]
          %v3517 = vld [vmem:[%s3507 + $0x48] sm:$0xff]
          %v3518 = vld [vmem:[%s3507 + $0x50] sm:$0xff]
          %v3519 = vld [vmem:[%s3507 + $0x58] sm:$0xff]
          %v3520 = vld [vmem:[%s3507 + $0x60] sm:$0xff]
          %v3521 = vld [vmem:[%s3507 + $0x68] sm:$0xff]
          %v3522 = vld [vmem:[%s3507 + $0x70] sm:$0xff]
          %v3523 = vld [vmem:[%s3507 + $0x78] sm:$0xff]
          %3525 = vset.pattern.permute.xlu0 0
          %3526 = vperm.xlu0 %3525, %v3491
          %v3527 = vpop.permute.xlu0 %3526
          %3530 = vset.pattern.permute.xlu0 0
          %3531 = vperm.xlu0 %3530, %v3492
          %v3532 = vpop.permute.xlu0 %3531
          %3535 = vset.pattern.permute.xlu0 0
          %3536 = vperm.xlu0 %3535, %v3493
          %v3537 = vpop.permute.xlu0 %3536
          %3540 = vset.pattern.permute.xlu0 0
          %3541 = vperm.xlu0 %3540, %v3494
          %v3542 = vpop.permute.xlu0 %3541
          %3545 = vset.pattern.permute.xlu0 0
          %3546 = vperm.xlu0 %3545, %v3495
          %v3547 = vpop.permute.xlu0 %3546
          %3550 = vset.pattern.permute.xlu0 0
          %3551 = vperm.xlu0 %3550, %v3496
          %v3552 = vpop.permute.xlu0 %3551
          %3555 = vset.pattern.permute.xlu0 0
          %3556 = vperm.xlu0 %3555, %v3497
          %v3557 = vpop.permute.xlu0 %3556
          %3560 = vset.pattern.permute.xlu0 0
          %3561 = vperm.xlu0 %3560, %v3498
          %v3562 = vpop.permute.xlu0 %3561
          %3565 = vset.pattern.permute.xlu0 0
          %3566 = vperm.xlu0 %3565, %v3499
          %v3567 = vpop.permute.xlu0 %3566
          %3570 = vset.pattern.permute.xlu0 0
          %3571 = vperm.xlu0 %3570, %v3500
          %v3572 = vpop.permute.xlu0 %3571
          %3575 = vset.pattern.permute.xlu0 0
          %3576 = vperm.xlu0 %3575, %v3501
          %v3577 = vpop.permute.xlu0 %3576
          %3580 = vset.pattern.permute.xlu0 0
          %3581 = vperm.xlu0 %3580, %v3502
          %v3582 = vpop.permute.xlu0 %3581
          %3585 = vset.pattern.permute.xlu0 0
          %3586 = vperm.xlu0 %3585, %v3503
          %v3587 = vpop.permute.xlu0 %3586
          %3590 = vset.pattern.permute.xlu0 0
          %3591 = vperm.xlu0 %3590, %v3504
          %v3592 = vpop.permute.xlu0 %3591
          %3595 = vset.pattern.permute.xlu0 0
          %3596 = vperm.xlu0 %3595, %v3505
          %v3597 = vpop.permute.xlu0 %3596
          %3600 = vset.pattern.permute.xlu0 0
          %3601 = vperm.xlu0 %3600, %v3506
          %v3602 = vpop.permute.xlu0 %3601
          %v3604 = vmul.f32 %v3508, %v3527
          %v3605 = vmul.f32 %v3509, %v3532
          %v3606 = vmul.f32 %v3510, %v3537
          %v3607 = vmul.f32 %v3511, %v3542
          %v3608 = vmul.f32 %v3512, %v3547
          %v3609 = vmul.f32 %v3513, %v3552
          %v3610 = vmul.f32 %v3514, %v3557
          %v3611 = vmul.f32 %v3515, %v3562
          %v3612 = vmul.f32 %v3516, %v3567
          %v3613 = vmul.f32 %v3517, %v3572
          %v3614 = vmul.f32 %v3518, %v3577
          %v3615 = vmul.f32 %v3519, %v3582
          %v3616 = vmul.f32 %v3520, %v3587
          %v3617 = vmul.f32 %v3521, %v3592
          %v3618 = vmul.f32 %v3522, %v3597
          %v3619 = vmul.f32 %v3523, %v3602
          %3636 = vrot.lane.b32.xlu0 %v3604, 96
          %v3637 = vpop.permute.xlu0 %3636
          %3638 = vrot.lane.b32.xlu0 %v3605, 96
          %v3639 = vpop.permute.xlu0 %3638
          %3640 = vrot.lane.b32.xlu0 %v3606, 96
          %v3641 = vpop.permute.xlu0 %3640
          %3642 = vrot.lane.b32.xlu0 %v3607, 96
          %v3643 = vpop.permute.xlu0 %3642
          %3644 = vrot.lane.b32.xlu0 %v3608, 96
          %v3645 = vpop.permute.xlu0 %3644
          %3646 = vrot.lane.b32.xlu0 %v3609, 96
          %v3647 = vpop.permute.xlu0 %3646
          %3648 = vrot.lane.b32.xlu0 %v3610, 96
          %v3649 = vpop.permute.xlu0 %3648
          %3650 = vrot.lane.b32.xlu0 %v3611, 96
          %v3651 = vpop.permute.xlu0 %3650
          %3652 = vrot.lane.b32.xlu0 %v3612, 96
          %v3653 = vpop.permute.xlu0 %3652
          %3654 = vrot.lane.b32.xlu0 %v3613, 96
          %v3655 = vpop.permute.xlu0 %3654
          %3656 = vrot.lane.b32.xlu0 %v3614, 96
          %v3657 = vpop.permute.xlu0 %3656
          %3658 = vrot.lane.b32.xlu0 %v3615, 96
          %v3659 = vpop.permute.xlu0 %3658
          %3660 = vrot.lane.b32.xlu0 %v3616, 96
          %v3661 = vpop.permute.xlu0 %3660
          %3662 = vrot.lane.b32.xlu0 %v3617, 96
          %v3663 = vpop.permute.xlu0 %3662
          %3664 = vrot.lane.b32.xlu0 %v3618, 96
          %v3665 = vpop.permute.xlu0 %3664
          %3666 = vrot.lane.b32.xlu0 %v3619, 96
          %v3667 = vpop.permute.xlu0 %3666
          %vm3684 = vcmask 1048320
          %3685 = vst.msk [vmem:[#allocation8] sm:$0xff] %vm3684, %v3637
          %3686 = vst.msk [vmem:[#allocation8 + $0x8] sm:$0xff] %vm3684, %v3639
          %3687 = vst.msk [vmem:[#allocation8 + $0x10] sm:$0xff] %vm3684, %v3641
          %3688 = vst.msk [vmem:[#allocation8 + $0x18] sm:$0xff] %vm3684, %v3643
          %3689 = vst.msk [vmem:[#allocation8 + $0x20] sm:$0xff] %vm3684, %v3645
          %3690 = vst.msk [vmem:[#allocation8 + $0x28] sm:$0xff] %vm3684, %v3647
          %3691 = vst.msk [vmem:[#allocation8 + $0x30] sm:$0xff] %vm3684, %v3649
          %3692 = vst.msk [vmem:[#allocation8 + $0x38] sm:$0xff] %vm3684, %v3651
          %3693 = vst.msk [vmem:[#allocation8 + $0x40] sm:$0xff] %vm3684, %v3653
          %3694 = vst.msk [vmem:[#allocation8 + $0x48] sm:$0xff] %vm3684, %v3655
          %3695 = vst.msk [vmem:[#allocation8 + $0x50] sm:$0xff] %vm3684, %v3657
          %3696 = vst.msk [vmem:[#allocation8 + $0x58] sm:$0xff] %vm3684, %v3659
          %3697 = vst.msk [vmem:[#allocation8 + $0x60] sm:$0xff] %vm3684, %v3661
          %3698 = vst.msk [vmem:[#allocation8 + $0x68] sm:$0xff] %vm3684, %v3663
          %3699 = vst.msk [vmem:[#allocation8 + $0x70] sm:$0xff] %vm3684, %v3665
          %3700 = vst.msk [vmem:[#allocation8 + $0x78] sm:$0xff] %vm3684, %v3667
          %v3701 = vld [vmem:[#allocation8] sm:$0xff]
          %v3702 = vld [vmem:[#allocation8 + $0x8] sm:$0xff]
          %v3703 = vld [vmem:[#allocation8 + $0x10] sm:$0xff]
          %v3704 = vld [vmem:[#allocation8 + $0x18] sm:$0xff]
          %v3705 = vld [vmem:[#allocation8 + $0x20] sm:$0xff]
          %v3706 = vld [vmem:[#allocation8 + $0x28] sm:$0xff]
          %v3707 = vld [vmem:[#allocation8 + $0x30] sm:$0xff]
          %v3708 = vld [vmem:[#allocation8 + $0x38] sm:$0xff]
          %v3709 = vld [vmem:[#allocation8 + $0x40] sm:$0xff]
          %v3710 = vld [vmem:[#allocation8 + $0x48] sm:$0xff]
          %v3711 = vld [vmem:[#allocation8 + $0x50] sm:$0xff]
          %v3712 = vld [vmem:[#allocation8 + $0x58] sm:$0xff]
          %v3713 = vld [vmem:[#allocation8 + $0x60] sm:$0xff]
          %v3714 = vld [vmem:[#allocation8 + $0x68] sm:$0xff]
          %v3715 = vld [vmem:[#allocation8 + $0x70] sm:$0xff]
          %v3716 = vld [vmem:[#allocation8 + $0x78] sm:$0xff]
          %v3717 = vpack.c.bf16 %v3702, %v3701
          %v3718 = vpack.c.bf16 %v3704, %v3703
          %v3719 = vpack.c.bf16 %v3706, %v3705
          %v3720 = vpack.c.bf16 %v3708, %v3707
          %v3721 = vpack.c.bf16 %v3710, %v3709
          %v3722 = vpack.c.bf16 %v3712, %v3711
          %v3723 = vpack.c.bf16 %v3714, %v3713
          %v3724 = vpack.c.bf16 %v3716, %v3715
          %v3725 = vld [vmem:[#allocation15] sm:$0xf]
          %v3726 = vld [vmem:[#allocation15 + $0x4] sm:$0xf]
          %v3727 = vld [vmem:[#allocation15 + $0x8] sm:$0xf]
          %v3728 = vld [vmem:[#allocation15 + $0xc] sm:$0xf]
          %v3729 = vld [vmem:[#allocation15 + $0x10] sm:$0xf]
          %v3730 = vld [vmem:[#allocation15 + $0x14] sm:$0xf]
          %v3731 = vld [vmem:[#allocation15 + $0x18] sm:$0xf]
          %v3732 = vld [vmem:[#allocation15 + $0x1c] sm:$0xf]
          %v3733 = vld [vmem:[#allocation15 + $0x20] sm:$0xf]
          %v3734 = vld [vmem:[#allocation15 + $0x24] sm:$0xf]
          %v3735 = vld [vmem:[#allocation15 + $0x28] sm:$0xf]
          %v3736 = vld [vmem:[#allocation15 + $0x2c] sm:$0xf]
          %v3737 = vld [vmem:[#allocation15 + $0x30] sm:$0xf]
          %v3738 = vld [vmem:[#allocation15 + $0x34] sm:$0xf]
          %v3739 = vld [vmem:[#allocation15 + $0x38] sm:$0xf]
          %v3740 = vld [vmem:[#allocation15 + $0x3c] sm:$0xf]
          %v3741 = vld [vmem:[%s7] sm:$0x1]
          %v3743 = vlaneseq
          %v3744 = vshrl.u32 %v3743, 7
          %v3745 = vsub.s32 0, %v3744
          %v3746 = vrot.slane %v3741, %v3745
          %v3764 = vunpack.c.l.b16 %v3725
          %v3765 = vunpack.c.l.b16 %v3726
          %v3766 = vunpack.c.l.b16 %v3727
          %v3767 = vunpack.c.l.b16 %v3728
          %v3768 = vunpack.c.l.b16 %v3729
          %v3769 = vunpack.c.l.b16 %v3730
          %v3770 = vunpack.c.l.b16 %v3731
          %v3771 = vunpack.c.l.b16 %v3732
          %v3772 = vunpack.c.l.b16 %v3733
          %v3773 = vunpack.c.l.b16 %v3734
          %v3774 = vunpack.c.l.b16 %v3735
          %v3775 = vunpack.c.l.b16 %v3736
          %v3776 = vunpack.c.l.b16 %v3737
          %v3777 = vunpack.c.l.b16 %v3738
          %v3778 = vunpack.c.l.b16 %v3739
          %v3779 = vunpack.c.l.b16 %v3740
          %v3780 = vpack.c.b16 %v3765, %v3764
          %v3781 = vpack.c.b16 %v3767, %v3766
          %v3782 = vpack.c.b16 %v3769, %v3768
          %v3783 = vpack.c.b16 %v3771, %v3770
          %v3784 = vpack.c.b16 %v3773, %v3772
          %v3785 = vpack.c.b16 %v3775, %v3774
          %v3786 = vpack.c.b16 %v3777, %v3776
          %v3787 = vpack.c.b16 %v3779, %v3778
          %3796 = vmatprep.subr.bf16.mxu0 0
          %3797 = vmatpush1.bf16.msra.mxu0 %v3780
          %3798 = vmatprep.subr.bf16.mxu0 0
          %3799 = vmatpush1.bf16.msra.mxu0 %v3781
          %3800 = vmatprep.subr.bf16.mxu0 0
          %3801 = vmatpush1.bf16.msra.mxu0 %v3782
          %3802 = vmatprep.subr.bf16.mxu0 0
          %3803 = vmatpush1.bf16.msra.mxu0 %v3783
          %3804 = vmatprep.subr.bf16.mxu0 0
          %3805 = vmatpush1.bf16.msra.mxu0 %v3784
          %3806 = vmatprep.subr.bf16.mxu0 0
          %3807 = vmatpush1.bf16.msra.mxu0 %v3785
          %3808 = vmatprep.subr.bf16.mxu0 0
          %3809 = vmatpush1.bf16.msra.mxu0 %v3786
          %3810 = vmatprep.subr.bf16.mxu0 0
          %3811 = vmatpush1.bf16.msra.mxu0 %v3787
          %3812 = vmatprep.subr.bf16.mxu0 0
          %3813 = vmatpush1.bf16.msra.mxu0 0
          %3814 = vmatprep.subr.bf16.mxu0 0
          %3815 = vmatpush1.bf16.msra.mxu0 0
          %3816 = vmatprep.subr.bf16.mxu0 0
          %3817 = vmatpush1.bf16.msra.mxu0 0
          %3818 = vmatprep.subr.bf16.mxu0 0
          %3819 = vmatpush1.bf16.msra.mxu0 0
          %3820 = vmatprep.subr.bf16.mxu0 0
          %3821 = vmatpush1.bf16.msra.mxu0 0
          %3822 = vmatprep.subr.bf16.mxu0 0
          %3823 = vmatpush1.bf16.msra.mxu0 0
          %3824 = vmatprep.subr.bf16.mxu0 0
          %3825 = vmatpush1.bf16.msra.mxu0 0
          %3826 = vmatprep.subr.bf16.mxu0 0
          %3827 = vmatpush1.bf16.msra.mxu0 0
          %3828 = vmatprep.mubr.bf16.mxu0 0
          %3829 = vmatmul.mubr.bf16.gmra.mrb[0].mxu0 %v3717
          %v3830 = vpop.f32.mrb[0].mxu0
          %v3831 = vadd.f32 %v3746, %v3830
          %v3832 = vpop.f32.mrb[0].mxu0
          %v3833 = vpop.f32.mrb[0].mxu0
          %v3834 = vadd.f32 %v3746, %v3833
          %v3835 = vpop.f32.mrb[0].mxu0
          %3836 = vmatprep.mubr.bf16.mxu0 0
          %3837 = vmatmul.mubr.bf16.gmra.mrb[0].mxu0 %v3718
          %v3838 = vpop.f32.mrb[0].mxu0
          %v3839 = vadd.f32 %v3746, %v3838
          %v3840 = vpop.f32.mrb[0].mxu0
          %v3841 = vpop.f32.mrb[0].mxu0
          %v3842 = vadd.f32 %v3746, %v3841
          %v3843 = vpop.f32.mrb[0].mxu0
          %3844 = vmatprep.mubr.bf16.mxu0 0
          %3845 = vmatmul.mubr.bf16.gmra.mrb[0].mxu0 %v3719
          %v3846 = vpop.f32.mrb[0].mxu0
          %v3847 = vadd.f32 %v3746, %v3846
          %v3848 = vpop.f32.mrb[0].mxu0
          %v3849 = vpop.f32.mrb[0].mxu0
          %v3850 = vadd.f32 %v3746, %v3849
          %v3851 = vpop.f32.mrb[0].mxu0
          %3852 = vmatprep.mubr.bf16.mxu0 0
          %3853 = vmatmul.mubr.bf16.gmra.mrb[0].mxu0 %v3720
          %v3854 = vpop.f32.mrb[0].mxu0
          %v3855 = vadd.f32 %v3746, %v3854
          %v3856 = vpop.f32.mrb[0].mxu0
          %v3857 = vpop.f32.mrb[0].mxu0
          %v3858 = vadd.f32 %v3746, %v3857
          %v3859 = vpop.f32.mrb[0].mxu0
          %3860 = vmatprep.mubr.bf16.mxu0 0
          %3861 = vmatmul.mubr.bf16.gmra.mrb[0].mxu0 %v3721
          %v3862 = vpop.f32.mrb[0].mxu0
          %v3863 = vadd.f32 %v3746, %v3862
          %v3864 = vpop.f32.mrb[0].mxu0
          %v3865 = vpop.f32.mrb[0].mxu0
          %v3866 = vadd.f32 %v3746, %v3865
          %v3867 = vpop.f32.mrb[0].mxu0
          %3868 = vmatprep.mubr.bf16.mxu0 0
          %3869 = vmatmul.mubr.bf16.gmra.mrb[0].mxu0 %v3722
          %v3870 = vpop.f32.mrb[0].mxu0
          %v3871 = vadd.f32 %v3746, %v3870
          %v3872 = vpop.f32.mrb[0].mxu0
          %v3873 = vpop.f32.mrb[0].mxu0
          %v3874 = vadd.f32 %v3746, %v3873
          %v3875 = vpop.f32.mrb[0].mxu0
          %3876 = vmatprep.mubr.bf16.mxu0 0
          %3877 = vmatmul.mubr.bf16.gmra.mrb[0].mxu0 %v3723
          %v3878 = vpop.f32.mrb[0].mxu0
          %v3879 = vadd.f32 %v3746, %v3878
          %v3880 = vpop.f32.mrb[0].mxu0
          %v3881 = vpop.f32.mrb[0].mxu0
          %v3882 = vadd.f32 %v3746, %v3881
          %v3883 = vpop.f32.mrb[0].mxu0
          %3884 = vmatprep.mubr.bf16.mxu0 0
          %3885 = vmatmul.mubr.bf16.gmra.mrb[0].mxu0 %v3724
          %v3886 = vpop.f32.mrb[0].mxu0
          %v3887 = vadd.f32 %v3746, %v3886
          %v3888 = vpop.f32.mrb[0].mxu0
          %v3889 = vpop.f32.mrb[0].mxu0
          %v3890 = vadd.f32 %v3746, %v3889
          %v3891 = vpop.f32.mrb[0].mxu0
          %3892 = vdwg.mxu0
          %v3893 = vadd.f32 %v3831, %v2843
          %v3894 = vadd.f32 %v3834, %v2844
          %v3895 = vadd.f32 %v3839, %v2845
          %v3896 = vadd.f32 %v3842, %v2846
          %v3897 = vadd.f32 %v3847, %v2847
          %v3898 = vadd.f32 %v3850, %v2848
          %v3899 = vadd.f32 %v3855, %v2849
          %v3900 = vadd.f32 %v3858, %v2850
          %v3901 = vadd.f32 %v3863, %v2851
          %v3902 = vadd.f32 %v3866, %v2852
          %v3903 = vadd.f32 %v3871, %v2853
          %v3904 = vadd.f32 %v3874, %v2854
          %v3905 = vadd.f32 %v3879, %v2855
          %v3906 = vadd.f32 %v3882, %v2856
          %v3907 = vadd.f32 %v3887, %v2857
          %v3908 = vadd.f32 %v3890, %v2858
          %v3909 = vld [vmem:[%s8] sm:$0x1]
          %v3910 = vld [vmem:[%s9] sm:$0x1]
          %3911 = vadd.xlane.f32.xlu0 %v3893
          %v3912 = vpop.xlane.xlu0 %3911
          %3913 = vadd.xlane.f32.xlu0 %v3894
          %v3914 = vpop.xlane.xlu0 %3913
          %3915 = vadd.xlane.f32.xlu0 %v3895
          %v3916 = vpop.xlane.xlu0 %3915
          %3917 = vadd.xlane.f32.xlu0 %v3896
          %v3918 = vpop.xlane.xlu0 %3917
          %3919 = vadd.xlane.f32.xlu0 %v3897
          %v3920 = vpop.xlane.xlu0 %3919
          %3921 = vadd.xlane.f32.xlu0 %v3898
          %v3922 = vpop.xlane.xlu0 %3921
          %3923 = vadd.xlane.f32.xlu0 %v3899
          %v3924 = vpop.xlane.xlu0 %3923
          %3925 = vadd.xlane.f32.xlu0 %v3900
          %v3926 = vpop.xlane.xlu0 %3925
          %3927 = vadd.xlane.f32.xlu0 %v3901
          %v3928 = vpop.xlane.xlu0 %3927
          %3929 = vadd.xlane.f32.xlu0 %v3902
          %v3930 = vpop.xlane.xlu0 %3929
          %3931 = vadd.xlane.f32.xlu0 %v3903
          %v3932 = vpop.xlane.xlu0 %3931
          %3933 = vadd.xlane.f32.xlu0 %v3904
          %v3934 = vpop.xlane.xlu0 %3933
          %3935 = vadd.xlane.f32.xlu0 %v3905
          %v3936 = vpop.xlane.xlu0 %3935
          %3937 = vadd.xlane.f32.xlu0 %v3906
          %v3938 = vpop.xlane.xlu0 %3937
          %3939 = vadd.xlane.f32.xlu0 %v3907
          %v3940 = vpop.xlane.xlu0 %3939
          %3941 = vadd.xlane.f32.xlu0 %v3908
          %v3942 = vpop.xlane.xlu0 %3941
          %v3943 = vrcp.pop 128.0
          %v3944 = vmul.f32 %v3912, %v3943
          %v3945 = vmul.f32 %v3914, %v3943
          %v3946 = vmul.f32 %v3916, %v3943
          %v3947 = vmul.f32 %v3918, %v3943
          %v3948 = vmul.f32 %v3920, %v3943
          %v3949 = vmul.f32 %v3922, %v3943
          %v3950 = vmul.f32 %v3924, %v3943
          %v3951 = vmul.f32 %v3926, %v3943
          %v3952 = vmul.f32 %v3928, %v3943
          %v3953 = vmul.f32 %v3930, %v3943
          %v3954 = vmul.f32 %v3932, %v3943
          %v3955 = vmul.f32 %v3934, %v3943
          %v3956 = vmul.f32 %v3936, %v3943
          %v3957 = vmul.f32 %v3938, %v3943
          %v3958 = vmul.f32 %v3940, %v3943
          %v3959 = vmul.f32 %v3942, %v3943
          %v3960 = vsub.f32 %v3893, %v3944
          %v3961 = vsub.f32 %v3894, %v3945
          %v3962 = vsub.f32 %v3895, %v3946
          %v3963 = vsub.f32 %v3896, %v3947
          %v3964 = vsub.f32 %v3897, %v3948
          %v3965 = vsub.f32 %v3898, %v3949
          %v3966 = vsub.f32 %v3899, %v3950
          %v3967 = vsub.f32 %v3900, %v3951
          %v3968 = vsub.f32 %v3901, %v3952
          %v3969 = vsub.f32 %v3902, %v3953
          %v3970 = vsub.f32 %v3903, %v3954
          %v3971 = vsub.f32 %v3904, %v3955
          %v3972 = vsub.f32 %v3905, %v3956
          %v3973 = vsub.f32 %v3906, %v3957
          %v3974 = vsub.f32 %v3907, %v3958
          %v3975 = vsub.f32 %v3908, %v3959
          %v3976 = vmul.f32 %v3960, %v3960
          %v3977 = vmul.f32 %v3961, %v3961
          %v3978 = vmul.f32 %v3962, %v3962
          %v3979 = vmul.f32 %v3963, %v3963
          %v3980 = vmul.f32 %v3964, %v3964
          %v3981 = vmul.f32 %v3965, %v3965
          %v3982 = vmul.f32 %v3966, %v3966
          %v3983 = vmul.f32 %v3967, %v3967
          %v3984 = vmul.f32 %v3968, %v3968
          %v3985 = vmul.f32 %v3969, %v3969
          %v3986 = vmul.f32 %v3970, %v3970
          %v3987 = vmul.f32 %v3971, %v3971
          %v3988 = vmul.f32 %v3972, %v3972
          %v3989 = vmul.f32 %v3973, %v3973
          %v3990 = vmul.f32 %v3974, %v3974
          %v3991 = vmul.f32 %v3975, %v3975
          %3992 = vadd.xlane.f32.xlu0 %v3976
          %v3993 = vpop.xlane.xlu0 %3992
          %3994 = vadd.xlane.f32.xlu0 %v3977
          %v3995 = vpop.xlane.xlu0 %3994
          %3996 = vadd.xlane.f32.xlu0 %v3978
          %v3997 = vpop.xlane.xlu0 %3996
          %3998 = vadd.xlane.f32.xlu0 %v3979
          %v3999 = vpop.xlane.xlu0 %3998
          %4000 = vadd.xlane.f32.xlu0 %v3980
          %v4001 = vpop.xlane.xlu0 %4000
          %4002 = vadd.xlane.f32.xlu0 %v3981
          %v4003 = vpop.xlane.xlu0 %4002
          %4004 = vadd.xlane.f32.xlu0 %v3982
          %v4005 = vpop.xlane.xlu0 %4004
          %4006 = vadd.xlane.f32.xlu0 %v3983
          %v4007 = vpop.xlane.xlu0 %4006
          %4008 = vadd.xlane.f32.xlu0 %v3984
          %v4009 = vpop.xlane.xlu0 %4008
          %4010 = vadd.xlane.f32.xlu0 %v3985
          %v4011 = vpop.xlane.xlu0 %4010
          %4012 = vadd.xlane.f32.xlu0 %v3986
          %v4013 = vpop.xlane.xlu0 %4012
          %4014 = vadd.xlane.f32.xlu0 %v3987
          %v4015 = vpop.xlane.xlu0 %4014
          %4016 = vadd.xlane.f32.xlu0 %v3988
          %v4017 = vpop.xlane.xlu0 %4016
          %4018 = vadd.xlane.f32.xlu0 %v3989
          %v4019 = vpop.xlane.xlu0 %4018
          %4020 = vadd.xlane.f32.xlu0 %v3990
          %v4021 = vpop.xlane.xlu0 %4020
          %4022 = vadd.xlane.f32.xlu0 %v3991
          %v4023 = vpop.xlane.xlu0 %4022
          %v4024 = vmul.f32 %v3993, %v3943
          %v4025 = vmul.f32 %v3995, %v3943
          %v4026 = vmul.f32 %v3997, %v3943
          %v4027 = vmul.f32 %v3999, %v3943
          %v4028 = vmul.f32 %v4001, %v3943
          %v4029 = vmul.f32 %v4003, %v3943
          %v4030 = vmul.f32 %v4005, %v3943
          %v4031 = vmul.f32 %v4007, %v3943
          %v4032 = vmul.f32 %v4009, %v3943
          %v4033 = vmul.f32 %v4011, %v3943
          %v4034 = vmul.f32 %v4013, %v3943
          %v4035 = vmul.f32 %v4015, %v3943
          %v4036 = vmul.f32 %v4017, %v3943
          %v4037 = vmul.f32 %v4019, %v3943
          %v4038 = vmul.f32 %v4021, %v3943
          %v4039 = vmul.f32 %v4023, %v3943
          %v4040 = vadd.f32 %v4024, 1e-05
          %v4041 = vadd.f32 %v4025, 1e-05
          %v4042 = vadd.f32 %v4026, 1e-05
          %v4043 = vadd.f32 %v4027, 1e-05
          %v4044 = vadd.f32 %v4028, 1e-05
          %v4045 = vadd.f32 %v4029, 1e-05
          %v4046 = vadd.f32 %v4030, 1e-05
          %v4047 = vadd.f32 %v4031, 1e-05
          %v4048 = vadd.f32 %v4032, 1e-05
          %v4049 = vadd.f32 %v4033, 1e-05
          %v4050 = vadd.f32 %v4034, 1e-05
          %v4051 = vadd.f32 %v4035, 1e-05
          %v4052 = vadd.f32 %v4036, 1e-05
          %v4053 = vadd.f32 %v4037, 1e-05
          %v4054 = vadd.f32 %v4038, 1e-05
          %v4055 = vadd.f32 %v4039, 1e-05
          %v4056 = vrsqrt.pop %v4040
          %v4057 = vrsqrt.pop %v4041
          %v4058 = vrsqrt.pop %v4042
          %v4059 = vrsqrt.pop %v4043
          %v4060 = vrsqrt.pop %v4044
          %v4061 = vrsqrt.pop %v4045
          %v4062 = vrsqrt.pop %v4046
          %v4063 = vrsqrt.pop %v4047
          %v4064 = vrsqrt.pop %v4048
          %v4065 = vrsqrt.pop %v4049
          %v4066 = vrsqrt.pop %v4050
          %v4067 = vrsqrt.pop %v4051
          %v4068 = vrsqrt.pop %v4052
          %v4069 = vrsqrt.pop %v4053
          %v4070 = vrsqrt.pop %v4054
          %v4071 = vrsqrt.pop %v4055
          %v4072 = vmul.f32 %v3960, %v4056
          %v4073 = vmul.f32 %v3961, %v4057
          %v4074 = vmul.f32 %v3962, %v4058
          %v4075 = vmul.f32 %v3963, %v4059
          %v4076 = vmul.f32 %v3964, %v4060
          %v4077 = vmul.f32 %v3965, %v4061
          %v4078 = vmul.f32 %v3966, %v4062
          %v4079 = vmul.f32 %v3967, %v4063
          %v4080 = vmul.f32 %v3968, %v4064
          %v4081 = vmul.f32 %v3969, %v4065
          %v4082 = vmul.f32 %v3970, %v4066
          %v4083 = vmul.f32 %v3971, %v4067
          %v4084 = vmul.f32 %v3972, %v4068
          %v4085 = vmul.f32 %v3973, %v4069
          %v4086 = vmul.f32 %v3974, %v4070
          %v4087 = vmul.f32 %v3975, %v4071
          %v4089 = vlaneseq
          %v4090 = vshrl.u32 %v4089, 7
          %v4091 = vsub.s32 0, %v4090
          %v4092 = vrot.slane %v3909, %v4091
          %v4094 = vmul.f32 %v4072, %v4092
          %v4095 = vmul.f32 %v4073, %v4092
          %v4096 = vmul.f32 %v4074, %v4092
          %v4097 = vmul.f32 %v4075, %v4092
          %v4098 = vmul.f32 %v4076, %v4092
          %v4099 = vmul.f32 %v4077, %v4092
          %v4100 = vmul.f32 %v4078, %v4092
          %v4101 = vmul.f32 %v4079, %v4092
          %v4102 = vmul.f32 %v4080, %v4092
          %v4103 = vmul.f32 %v4081, %v4092
          %v4104 = vmul.f32 %v4082, %v4092
          %v4105 = vmul.f32 %v4083, %v4092
          %v4106 = vmul.f32 %v4084, %v4092
          %v4107 = vmul.f32 %v4085, %v4092
          %v4108 = vmul.f32 %v4086, %v4092
          %v4109 = vmul.f32 %v4087, %v4092
          %v4111 = vlaneseq
          %v4112 = vshrl.u32 %v4111, 7
          %v4113 = vsub.s32 0, %v4112
          %v4114 = vrot.slane %v3910, %v4113
          %v4116 = vadd.f32 %v4094, %v4114
          %v4117 = vadd.f32 %v4095, %v4114
          %v4118 = vadd.f32 %v4096, %v4114
          %v4119 = vadd.f32 %v4097, %v4114
          %v4120 = vadd.f32 %v4098, %v4114
          %v4121 = vadd.f32 %v4099, %v4114
          %v4122 = vadd.f32 %v4100, %v4114
          %v4123 = vadd.f32 %v4101, %v4114
          %v4124 = vadd.f32 %v4102, %v4114
          %v4125 = vadd.f32 %v4103, %v4114
          %v4126 = vadd.f32 %v4104, %v4114
          %v4127 = vadd.f32 %v4105, %v4114
          %v4128 = vadd.f32 %v4106, %v4114
          %v4129 = vadd.f32 %v4107, %v4114
          %v4130 = vadd.f32 %v4108, %v4114
          %v4131 = vadd.f32 %v4109, %v4114
          %v4132 = vpack.c.bf16 %v4117, %v4116
          %v4133 = vpack.c.bf16 %v4119, %v4118
          %v4134 = vpack.c.bf16 %v4121, %v4120
          %v4135 = vpack.c.bf16 %v4123, %v4122
          %v4136 = vpack.c.bf16 %v4125, %v4124
          %v4137 = vpack.c.bf16 %v4127, %v4126
          %v4138 = vpack.c.bf16 %v4129, %v4128
          %v4139 = vpack.c.bf16 %v4131, %v4130
          %v4140 = vld [vmem:[#allocation17] sm:$0xf]
          %v4141 = vld [vmem:[#allocation17 + $0x4] sm:$0xf]
          %v4142 = vld [vmem:[#allocation17 + $0x8] sm:$0xf]
          %v4143 = vld [vmem:[#allocation17 + $0xc] sm:$0xf]
          %v4144 = vld [vmem:[#allocation17 + $0x10] sm:$0xf]
          %v4145 = vld [vmem:[#allocation17 + $0x14] sm:$0xf]
          %v4146 = vld [vmem:[#allocation17 + $0x18] sm:$0xf]
          %v4147 = vld [vmem:[#allocation17 + $0x1c] sm:$0xf]
          %v4148 = vld [vmem:[#allocation17 + $0x20] sm:$0xf]
          %v4149 = vld [vmem:[#allocation17 + $0x24] sm:$0xf]
          %v4150 = vld [vmem:[#allocation17 + $0x28] sm:$0xf]
          %v4151 = vld [vmem:[#allocation17 + $0x2c] sm:$0xf]
          %v4152 = vld [vmem:[#allocation17 + $0x30] sm:$0xf]
          %v4153 = vld [vmem:[#allocation17 + $0x34] sm:$0xf]
          %v4154 = vld [vmem:[#allocation17 + $0x38] sm:$0xf]
          %v4155 = vld [vmem:[#allocation17 + $0x3c] sm:$0xf]
          %v4156 = vld [vmem:[%s11] sm:$0x1]
          %v4158 = vlaneseq
          %v4159 = vshrl.u32 %v4158, 7
          %v4160 = vsub.s32 0, %v4159
          %v4161 = vrot.slane %v4156, %v4160
          %v4179 = vunpack.c.l.b16 %v4140
          %v4180 = vunpack.c.l.b16 %v4141
          %v4181 = vunpack.c.l.b16 %v4142
          %v4182 = vunpack.c.l.b16 %v4143
          %v4183 = vunpack.c.l.b16 %v4144
          %v4184 = vunpack.c.l.b16 %v4145
          %v4185 = vunpack.c.l.b16 %v4146
          %v4186 = vunpack.c.l.b16 %v4147
          %v4187 = vunpack.c.l.b16 %v4148
          %v4188 = vunpack.c.l.b16 %v4149
          %v4189 = vunpack.c.l.b16 %v4150
          %v4190 = vunpack.c.l.b16 %v4151
          %v4191 = vunpack.c.l.b16 %v4152
          %v4192 = vunpack.c.l.b16 %v4153
          %v4193 = vunpack.c.l.b16 %v4154
          %v4194 = vunpack.c.l.b16 %v4155
          %v4195 = vpack.c.b16 %v4180, %v4179
          %v4196 = vpack.c.b16 %v4182, %v4181
          %v4197 = vpack.c.b16 %v4184, %v4183
          %v4198 = vpack.c.b16 %v4186, %v4185
          %v4199 = vpack.c.b16 %v4188, %v4187
          %v4200 = vpack.c.b16 %v4190, %v4189
          %v4201 = vpack.c.b16 %v4192, %v4191
          %v4202 = vpack.c.b16 %v4194, %v4193
          %4211 = vmatprep.subr.bf16.mxu0 0
          %4212 = vmatpush1.bf16.msra.mxu0 %v4195
          %4213 = vmatprep.subr.bf16.mxu0 0
          %4214 = vmatpush1.bf16.msra.mxu0 %v4196
          %4215 = vmatprep.subr.bf16.mxu0 0
          %4216 = vmatpush1.bf16.msra.mxu0 %v4197
          %4217 = vmatprep.subr.bf16.mxu0 0
          %4218 = vmatpush1.bf16.msra.mxu0 %v4198
          %4219 = vmatprep.subr.bf16.mxu0 0
          %4220 = vmatpush1.bf16.msra.mxu0 %v4199
          %4221 = vmatprep.subr.bf16.mxu0 0
          %4222 = vmatpush1.bf16.msra.mxu0 %v4200
          %4223 = vmatprep.subr.bf16.mxu0 0
          %4224 = vmatpush1.bf16.msra.mxu0 %v4201
          %4225 = vmatprep.subr.bf16.mxu0 0
          %4226 = vmatpush1.bf16.msra.mxu0 %v4202
          %4227 = vmatprep.subr.bf16.mxu0 0
          %4228 = vmatpush1.bf16.msra.mxu0 0
          %4229 = vmatprep.subr.bf16.mxu0 0
          %4230 = vmatpush1.bf16.msra.mxu0 0
          %4231 = vmatprep.subr.bf16.mxu0 0
          %4232 = vmatpush1.bf16.msra.mxu0 0
          %4233 = vmatprep.subr.bf16.mxu0 0
          %4234 = vmatpush1.bf16.msra.mxu0 0
          %4235 = vmatprep.subr.bf16.mxu0 0
          %4236 = vmatpush1.bf16.msra.mxu0 0
          %4237 = vmatprep.subr.bf16.mxu0 0
          %4238 = vmatpush1.bf16.msra.mxu0 0
          %4239 = vmatprep.subr.bf16.mxu0 0
          %4240 = vmatpush1.bf16.msra.mxu0 0
          %4241 = vmatprep.subr.bf16.mxu0 0
          %4242 = vmatpush1.bf16.msra.mxu0 0
          %4243 = vmatprep.mubr.bf16.mxu0 0
          %4244 = vmatmul.mubr.bf16.gmra.mrb[0].mxu0 %v4132
          %v4245 = vpop.f32.mrb[0].mxu0
          %v4246 = vadd.f32 %v4161, %v4245
          %v4247 = vpop.f32.mrb[0].mxu0
          %v4248 = vpop.f32.mrb[0].mxu0
          %v4249 = vadd.f32 %v4161, %v4248
          %v4250 = vpop.f32.mrb[0].mxu0
          %4251 = vmatprep.mubr.bf16.mxu0 0
          %4252 = vmatmul.mubr.bf16.gmra.mrb[0].mxu0 %v4133
          %v4253 = vpop.f32.mrb[0].mxu0
          %v4254 = vadd.f32 %v4161, %v4253
          %v4255 = vpop.f32.mrb[0].mxu0
          %v4256 = vpop.f32.mrb[0].mxu0
          %v4257 = vadd.f32 %v4161, %v4256
          %v4258 = vpop.f32.mrb[0].mxu0
          %4259 = vmatprep.mubr.bf16.mxu0 0
          %4260 = vmatmul.mubr.bf16.gmra.mrb[0].mxu0 %v4134
          %v4261 = vpop.f32.mrb[0].mxu0
          %v4262 = vadd.f32 %v4161, %v4261
          %v4263 = vpop.f32.mrb[0].mxu0
          %v4264 = vpop.f32.mrb[0].mxu0
          %v4265 = vadd.f32 %v4161, %v4264
          %v4266 = vpop.f32.mrb[0].mxu0
          %4267 = vmatprep.mubr.bf16.mxu0 0
          %4268 = vmatmul.mubr.bf16.gmra.mrb[0].mxu0 %v4135
          %v4269 = vpop.f32.mrb[0].mxu0
          %v4270 = vadd.f32 %v4161, %v4269
          %v4271 = vpop.f32.mrb[0].mxu0
          %v4272 = vpop.f32.mrb[0].mxu0
          %v4273 = vadd.f32 %v4161, %v4272
          %v4274 = vpop.f32.mrb[0].mxu0
          %4275 = vmatprep.mubr.bf16.mxu0 0
          %4276 = vmatmul.mubr.bf16.gmra.mrb[0].mxu0 %v4136
          %v4277 = vpop.f32.mrb[0].mxu0
          %v4278 = vadd.f32 %v4161, %v4277
          %v4279 = vpop.f32.mrb[0].mxu0
          %v4280 = vpop.f32.mrb[0].mxu0
          %v4281 = vadd.f32 %v4161, %v4280
          %v4282 = vpop.f32.mrb[0].mxu0
          %4283 = vmatprep.mubr.bf16.mxu0 0
          %4284 = vmatmul.mubr.bf16.gmra.mrb[0].mxu0 %v4137
          %v4285 = vpop.f32.mrb[0].mxu0
          %v4286 = vadd.f32 %v4161, %v4285
          %v4287 = vpop.f32.mrb[0].mxu0
          %v4288 = vpop.f32.mrb[0].mxu0
          %v4289 = vadd.f32 %v4161, %v4288
          %v4290 = vpop.f32.mrb[0].mxu0
          %4291 = vmatprep.mubr.bf16.mxu0 0
          %4292 = vmatmul.mubr.bf16.gmra.mrb[0].mxu0 %v4138
          %v4293 = vpop.f32.mrb[0].mxu0
          %v4294 = vadd.f32 %v4161, %v4293
          %v4295 = vpop.f32.mrb[0].mxu0
          %v4296 = vpop.f32.mrb[0].mxu0
          %v4297 = vadd.f32 %v4161, %v4296
          %v4298 = vpop.f32.mrb[0].mxu0
          %4299 = vmatprep.mubr.bf16.mxu0 0
          %4300 = vmatmul.mubr.bf16.gmra.mrb[0].mxu0 %v4139
          %v4301 = vpop.f32.mrb[0].mxu0
          %v4302 = vadd.f32 %v4161, %v4301
          %v4303 = vpop.f32.mrb[0].mxu0
          %v4304 = vpop.f32.mrb[0].mxu0
          %v4305 = vadd.f32 %v4161, %v4304
          %v4306 = vpop.f32.mrb[0].mxu0
          %4307 = vdwg.mxu0
          %v4308 = vmul.f32 %v4246, 0.5
          %v4309 = vmul.f32 %v4249, 0.5
          %v4310 = vmul.f32 %v4254, 0.5
          %v4311 = vmul.f32 %v4257, 0.5
          %v4312 = vmul.f32 %v4262, 0.5
          %v4313 = vmul.f32 %v4265, 0.5
          %v4314 = vmul.f32 %v4270, 0.5
          %v4315 = vmul.f32 %v4273, 0.5
          %v4316 = vmul.f32 %v4278, 0.5
          %v4317 = vmul.f32 %v4281, 0.5
          %v4318 = vmul.f32 %v4286, 0.5
          %v4319 = vmul.f32 %v4289, 0.5
          %v4320 = vmul.f32 %v4294, 0.5
          %v4321 = vmul.f32 %v4297, 0.5
          %v4322 = vmul.f32 %v4302, 0.5
          %v4323 = vmul.f32 %v4305, 0.5
          %v4324 = vmul.f32 %v4246, 0.044715
          %v4325 = vmul.f32 %v4249, 0.044715
          %v4326 = vmul.f32 %v4254, 0.044715
          %v4327 = vmul.f32 %v4257, 0.044715
          %v4328 = vmul.f32 %v4262, 0.044715
          %v4329 = vmul.f32 %v4265, 0.044715
          %v4330 = vmul.f32 %v4270, 0.044715
          %v4331 = vmul.f32 %v4273, 0.044715
          %v4332 = vmul.f32 %v4278, 0.044715
          %v4333 = vmul.f32 %v4281, 0.044715
          %v4334 = vmul.f32 %v4286, 0.044715
          %v4335 = vmul.f32 %v4289, 0.044715
          %v4336 = vmul.f32 %v4294, 0.044715
          %v4337 = vmul.f32 %v4297, 0.044715
          %v4338 = vmul.f32 %v4302, 0.044715
          %v4339 = vmul.f32 %v4305, 0.044715
          %v4340 = vmul.f32 %v4324, %v4246
          %v4341 = vmul.f32 %v4325, %v4249
          %v4342 = vmul.f32 %v4326, %v4254
          %v4343 = vmul.f32 %v4327, %v4257
          %v4344 = vmul.f32 %v4328, %v4262
          %v4345 = vmul.f32 %v4329, %v4265
          %v4346 = vmul.f32 %v4330, %v4270
          %v4347 = vmul.f32 %v4331, %v4273
          %v4348 = vmul.f32 %v4332, %v4278
          %v4349 = vmul.f32 %v4333, %v4281
          %v4350 = vmul.f32 %v4334, %v4286
          %v4351 = vmul.f32 %v4335, %v4289
          %v4352 = vmul.f32 %v4336, %v4294
          %v4353 = vmul.f32 %v4337, %v4297
          %v4354 = vmul.f32 %v4338, %v4302
          %v4355 = vmul.f32 %v4339, %v4305
          %v4356 = vmul.f32 %v4340, %v4246
          %v4357 = vmul.f32 %v4341, %v4249
          %v4358 = vmul.f32 %v4342, %v4254
          %v4359 = vmul.f32 %v4343, %v4257
          %v4360 = vmul.f32 %v4344, %v4262
          %v4361 = vmul.f32 %v4345, %v4265
          %v4362 = vmul.f32 %v4346, %v4270
          %v4363 = vmul.f32 %v4347, %v4273
          %v4364 = vmul.f32 %v4348, %v4278
          %v4365 = vmul.f32 %v4349, %v4281
          %v4366 = vmul.f32 %v4350, %v4286
          %v4367 = vmul.f32 %v4351, %v4289
          %v4368 = vmul.f32 %v4352, %v4294
          %v4369 = vmul.f32 %v4353, %v4297
          %v4370 = vmul.f32 %v4354, %v4302
          %v4371 = vmul.f32 %v4355, %v4305
          %v4372 = vadd.f32 %v4246, %v4356
          %v4373 = vadd.f32 %v4249, %v4357
          %v4374 = vadd.f32 %v4254, %v4358
          %v4375 = vadd.f32 %v4257, %v4359
          %v4376 = vadd.f32 %v4262, %v4360
          %v4377 = vadd.f32 %v4265, %v4361
          %v4378 = vadd.f32 %v4270, %v4362
          %v4379 = vadd.f32 %v4273, %v4363
          %v4380 = vadd.f32 %v4278, %v4364
          %v4381 = vadd.f32 %v4281, %v4365
          %v4382 = vadd.f32 %v4286, %v4366
          %v4383 = vadd.f32 %v4289, %v4367
          %v4384 = vadd.f32 %v4294, %v4368
          %v4385 = vadd.f32 %v4297, %v4369
          %v4386 = vadd.f32 %v4302, %v4370
          %v4387 = vadd.f32 %v4305, %v4371
          %v4388 = vmul.f32 %v4372, 0.7978846
          %v4389 = vmul.f32 %v4373, 0.7978846
          %v4390 = vmul.f32 %v4374, 0.7978846
          %v4391 = vmul.f32 %v4375, 0.7978846
          %v4392 = vmul.f32 %v4376, 0.7978846
          %v4393 = vmul.f32 %v4377, 0.7978846
          %v4394 = vmul.f32 %v4378, 0.7978846
          %v4395 = vmul.f32 %v4379, 0.7978846
          %v4396 = vmul.f32 %v4380, 0.7978846
          %v4397 = vmul.f32 %v4381, 0.7978846
          %v4398 = vmul.f32 %v4382, 0.7978846
          %v4399 = vmul.f32 %v4383, 0.7978846
          %v4400 = vmul.f32 %v4384, 0.7978846
          %v4401 = vmul.f32 %v4385, 0.7978846
          %v4402 = vmul.f32 %v4386, 0.7978846
          %v4403 = vmul.f32 %v4387, 0.7978846
          %v4404 = vtanh.pop %v4388
          %v4405 = vtanh.pop %v4389
          %v4406 = vtanh.pop %v4390
          %v4407 = vtanh.pop %v4391
          %v4408 = vtanh.pop %v4392
          %v4409 = vtanh.pop %v4393
          %v4410 = vtanh.pop %v4394
          %v4411 = vtanh.pop %v4395
          %v4412 = vtanh.pop %v4396
          %v4413 = vtanh.pop %v4397
          %v4414 = vtanh.pop %v4398
          %v4415 = vtanh.pop %v4399
          %v4416 = vtanh.pop %v4400
          %v4417 = vtanh.pop %v4401
          %v4418 = vtanh.pop %v4402
          %v4419 = vtanh.pop %v4403
          %v4420 = vadd.f32 %v4404, 1.0
          %v4421 = vadd.f32 %v4405, 1.0
          %v4422 = vadd.f32 %v4406, 1.0
          %v4423 = vadd.f32 %v4407, 1.0
          %v4424 = vadd.f32 %v4408, 1.0
          %v4425 = vadd.f32 %v4409, 1.0
          %v4426 = vadd.f32 %v4410, 1.0
          %v4427 = vadd.f32 %v4411, 1.0
          %v4428 = vadd.f32 %v4412, 1.0
          %v4429 = vadd.f32 %v4413, 1.0
          %v4430 = vadd.f32 %v4414, 1.0
          %v4431 = vadd.f32 %v4415, 1.0
          %v4432 = vadd.f32 %v4416, 1.0
          %v4433 = vadd.f32 %v4417, 1.0
          %v4434 = vadd.f32 %v4418, 1.0
          %v4435 = vadd.f32 %v4419, 1.0
          %v4436 = vmul.f32 %v4308, %v4420
          %v4437 = vmul.f32 %v4309, %v4421
          %v4438 = vmul.f32 %v4310, %v4422
          %v4439 = vmul.f32 %v4311, %v4423
          %v4440 = vmul.f32 %v4312, %v4424
          %v4441 = vmul.f32 %v4313, %v4425
          %v4442 = vmul.f32 %v4314, %v4426
          %v4443 = vmul.f32 %v4315, %v4427
          %v4444 = vmul.f32 %v4316, %v4428
          %v4445 = vmul.f32 %v4317, %v4429
          %v4446 = vmul.f32 %v4318, %v4430
          %v4447 = vmul.f32 %v4319, %v4431
          %v4448 = vmul.f32 %v4320, %v4432
          %v4449 = vmul.f32 %v4321, %v4433
          %v4450 = vmul.f32 %v4322, %v4434
          %v4451 = vmul.f32 %v4323, %v4435
          %v4452 = vpack.c.bf16 %v4437, %v4436
          %v4453 = vpack.c.bf16 %v4439, %v4438
          %v4454 = vpack.c.bf16 %v4441, %v4440
          %v4455 = vpack.c.bf16 %v4443, %v4442
          %v4456 = vpack.c.bf16 %v4445, %v4444
          %v4457 = vpack.c.bf16 %v4447, %v4446
          %v4458 = vpack.c.bf16 %v4449, %v4448
          %v4459 = vpack.c.bf16 %v4451, %v4450
          %v4460 = vld [vmem:[#allocation18] sm:$0xf]
          %v4461 = vld [vmem:[#allocation18 + $0x4] sm:$0xf]
          %v4462 = vld [vmem:[#allocation18 + $0x8] sm:$0xf]
          %v4463 = vld [vmem:[#allocation18 + $0xc] sm:$0xf]
          %v4464 = vld [vmem:[#allocation18 + $0x10] sm:$0xf]
          %v4465 = vld [vmem:[#allocation18 + $0x14] sm:$0xf]
          %v4466 = vld [vmem:[#allocation18 + $0x18] sm:$0xf]
          %v4467 = vld [vmem:[#allocation18 + $0x1c] sm:$0xf]
          %v4468 = vld [vmem:[#allocation18 + $0x20] sm:$0xf]
          %v4469 = vld [vmem:[#allocation18 + $0x24] sm:$0xf]
          %v4470 = vld [vmem:[#allocation18 + $0x28] sm:$0xf]
          %v4471 = vld [vmem:[#allocation18 + $0x2c] sm:$0xf]
          %v4472 = vld [vmem:[#allocation18 + $0x30] sm:$0xf]
          %v4473 = vld [vmem:[#allocation18 + $0x34] sm:$0xf]
          %v4474 = vld [vmem:[#allocation18 + $0x38] sm:$0xf]
          %v4475 = vld [vmem:[#allocation18 + $0x3c] sm:$0xf]
          %v4476 = vld [vmem:[%s13] sm:$0x1]
          %v4478 = vlaneseq
          %v4479 = vshrl.u32 %v4478, 7
          %v4480 = vsub.s32 0, %v4479
          %v4481 = vrot.slane %v4476, %v4480
          %v4499 = vunpack.c.l.b16 %v4460
          %v4500 = vunpack.c.l.b16 %v4461
          %v4501 = vunpack.c.l.b16 %v4462
          %v4502 = vunpack.c.l.b16 %v4463
          %v4503 = vunpack.c.l.b16 %v4464
          %v4504 = vunpack.c.l.b16 %v4465
          %v4505 = vunpack.c.l.b16 %v4466
          %v4506 = vunpack.c.l.b16 %v4467
          %v4507 = vunpack.c.l.b16 %v4468
          %v4508 = vunpack.c.l.b16 %v4469
          %v4509 = vunpack.c.l.b16 %v4470
          %v4510 = vunpack.c.l.b16 %v4471
          %v4511 = vunpack.c.l.b16 %v4472
          %v4512 = vunpack.c.l.b16 %v4473
          %v4513 = vunpack.c.l.b16 %v4474
          %v4514 = vunpack.c.l.b16 %v4475
          %v4515 = vpack.c.b16 %v4500, %v4499
          %v4516 = vpack.c.b16 %v4502, %v4501
          %v4517 = vpack.c.b16 %v4504, %v4503
          %v4518 = vpack.c.b16 %v4506, %v4505
          %v4519 = vpack.c.b16 %v4508, %v4507
          %v4520 = vpack.c.b16 %v4510, %v4509
          %v4521 = vpack.c.b16 %v4512, %v4511
          %v4522 = vpack.c.b16 %v4514, %v4513
          %4531 = vmatprep.subr.bf16.mxu0 0
          %4532 = vmatpush1.bf16.msra.mxu0 %v4515
          %4533 = vmatprep.subr.bf16.mxu0 0
          %4534 = vmatpush1.bf16.msra.mxu0 %v4516
          %4535 = vmatprep.subr.bf16.mxu0 0
          %4536 = vmatpush1.bf16.msra.mxu0 %v4517
          %4537 = vmatprep.subr.bf16.mxu0 0
          %4538 = vmatpush1.bf16.msra.mxu0 %v4518
          %4539 = vmatprep.subr.bf16.mxu0 0
          %4540 = vmatpush1.bf16.msra.mxu0 %v4519
          %4541 = vmatprep.subr.bf16.mxu0 0
          %4542 = vmatpush1.bf16.msra.mxu0 %v4520
          %4543 = vmatprep.subr.bf16.mxu0 0
          %4544 = vmatpush1.bf16.msra.mxu0 %v4521
          %4545 = vmatprep.subr.bf16.mxu0 0
          %4546 = vmatpush1.bf16.msra.mxu0 %v4522
          %4547 = vmatprep.subr.bf16.mxu0 0
          %4548 = vmatpush1.bf16.msra.mxu0 0
          %4549 = vmatprep.subr.bf16.mxu0 0
          %4550 = vmatpush1.bf16.msra.mxu0 0
          %4551 = vmatprep.subr.bf16.mxu0 0
          %4552 = vmatpush1.bf16.msra.mxu0 0
          %4553 = vmatprep.subr.bf16.mxu0 0
          %4554 = vmatpush1.bf16.msra.mxu0 0
          %4555 = vmatprep.subr.bf16.mxu0 0
          %4556 = vmatpush1.bf16.msra.mxu0 0
          %4557 = vmatprep.subr.bf16.mxu0 0
          %4558 = vmatpush1.bf16.msra.mxu0 0
          %4559 = vmatprep.subr.bf16.mxu0 0
          %4560 = vmatpush1.bf16.msra.mxu0 0
          %4561 = vmatprep.subr.bf16.mxu0 0
          %4562 = vmatpush1.bf16.msra.mxu0 0
          %4563 = vmatprep.mubr.bf16.mxu0 0
          %4564 = vmatmul.mubr.bf16.gmra.mrb[0].mxu0 %v4452
          %v4565 = vpop.f32.mrb[0].mxu0
          %v4566 = vadd.f32 %v4481, %v4565
          %v4567 = vpop.f32.mrb[0].mxu0
          %v4568 = vpop.f32.mrb[0].mxu0
          %v4569 = vadd.f32 %v4481, %v4568
          %v4570 = vpop.f32.mrb[0].mxu0
          %4571 = vmatprep.mubr.bf16.mxu0 0
          %4572 = vmatmul.mubr.bf16.gmra.mrb[0].mxu0 %v4453
          %v4573 = vpop.f32.mrb[0].mxu0
          %v4574 = vadd.f32 %v4481, %v4573
          %v4575 = vpop.f32.mrb[0].mxu0
          %v4576 = vpop.f32.mrb[0].mxu0
          %v4577 = vadd.f32 %v4481, %v4576
          %v4578 = vpop.f32.mrb[0].mxu0
          %4579 = vmatprep.mubr.bf16.mxu0 0
          %4580 = vmatmul.mubr.bf16.gmra.mrb[0].mxu0 %v4454
          %v4581 = vpop.f32.mrb[0].mxu0
          %v4582 = vadd.f32 %v4481, %v4581
          %v4583 = vpop.f32.mrb[0].mxu0
          %v4584 = vpop.f32.mrb[0].mxu0
          %v4585 = vadd.f32 %v4481, %v4584
          %v4586 = vpop.f32.mrb[0].mxu0
          %4587 = vmatprep.mubr.bf16.mxu0 0
          %4588 = vmatmul.mubr.bf16.gmra.mrb[0].mxu0 %v4455
          %v4589 = vpop.f32.mrb[0].mxu0
          %v4590 = vadd.f32 %v4481, %v4589
          %v4591 = vpop.f32.mrb[0].mxu0
          %v4592 = vpop.f32.mrb[0].mxu0
          %v4593 = vadd.f32 %v4481, %v4592
          %v4594 = vpop.f32.mrb[0].mxu0
          %4595 = vmatprep.mubr.bf16.mxu0 0
          %4596 = vmatmul.mubr.bf16.gmra.mrb[0].mxu0 %v4456
          %v4597 = vpop.f32.mrb[0].mxu0
          %v4598 = vadd.f32 %v4481, %v4597
          %v4599 = vpop.f32.mrb[0].mxu0
          %v4600 = vpop.f32.mrb[0].mxu0
          %v4601 = vadd.f32 %v4481, %v4600
          %v4602 = vpop.f32.mrb[0].mxu0
          %4603 = vmatprep.mubr.bf16.mxu0 0
          %4604 = vmatmul.mubr.bf16.gmra.mrb[0].mxu0 %v4457
          %v4605 = vpop.f32.mrb[0].mxu0
          %v4606 = vadd.f32 %v4481, %v4605
          %v4607 = vpop.f32.mrb[0].mxu0
          %v4608 = vpop.f32.mrb[0].mxu0
          %v4609 = vadd.f32 %v4481, %v4608
          %v4610 = vpop.f32.mrb[0].mxu0
          %4611 = vmatprep.mubr.bf16.mxu0 0
          %4612 = vmatmul.mubr.bf16.gmra.mrb[0].mxu0 %v4458
          %v4613 = vpop.f32.mrb[0].mxu0
          %v4614 = vadd.f32 %v4481, %v4613
          %v4615 = vpop.f32.mrb[0].mxu0
          %v4616 = vpop.f32.mrb[0].mxu0
          %v4617 = vadd.f32 %v4481, %v4616
          %v4618 = vpop.f32.mrb[0].mxu0
          %4619 = vmatprep.mubr.bf16.mxu0 0
          %4620 = vmatmul.mubr.bf16.gmra.mrb[0].mxu0 %v4459
          %v4621 = vpop.f32.mrb[0].mxu0
          %v4622 = vadd.f32 %v4481, %v4621
          %v4623 = vpop.f32.mrb[0].mxu0
          %v4624 = vpop.f32.mrb[0].mxu0
          %v4625 = vadd.f32 %v4481, %v4624
          %v4626 = vpop.f32.mrb[0].mxu0
          %4627 = vdwg.mxu0
          %v4628 = vadd.f32 %v4566, %v3893
          %v4629 = vadd.f32 %v4569, %v3894
          %v4630 = vadd.f32 %v4574, %v3895
          %v4631 = vadd.f32 %v4577, %v3896
          %v4632 = vadd.f32 %v4582, %v3897
          %v4633 = vadd.f32 %v4585, %v3898
          %v4634 = vadd.f32 %v4590, %v3899
          %v4635 = vadd.f32 %v4593, %v3900
          %v4636 = vadd.f32 %v4598, %v3901
          %v4637 = vadd.f32 %v4601, %v3902
          %v4638 = vadd.f32 %v4606, %v3903
          %v4639 = vadd.f32 %v4609, %v3904
          %v4640 = vadd.f32 %v4614, %v3905
          %v4641 = vadd.f32 %v4617, %v3906
          %v4642 = vadd.f32 %v4622, %v3907
          %v4643 = vadd.f32 %v4625, %v3908
          %4644 = vst [vmem:[%s618] sm:$0xff] %v4628
          %4645 = vst [vmem:[%s618 + $0x8] sm:$0xff] %v4629
          %4646 = vst [vmem:[%s618 + $0x10] sm:$0xff] %v4630
          %4647 = vst [vmem:[%s618 + $0x18] sm:$0xff] %v4631
          %4648 = vst [vmem:[%s618 + $0x20] sm:$0xff] %v4632
          %4649 = vst [vmem:[%s618 + $0x28] sm:$0xff] %v4633
          %4650 = vst [vmem:[%s618 + $0x30] sm:$0xff] %v4634
          %4651 = vst [vmem:[%s618 + $0x38] sm:$0xff] %v4635
          %4652 = vst [vmem:[%s618 + $0x40] sm:$0xff] %v4636
          %4653 = vst [vmem:[%s618 + $0x48] sm:$0xff] %v4637
          %4654 = vst [vmem:[%s618 + $0x50] sm:$0xff] %v4638
          %4655 = vst [vmem:[%s618 + $0x58] sm:$0xff] %v4639
          %4656 = vst [vmem:[%s618 + $0x60] sm:$0xff] %v4640
          %4657 = vst [vmem:[%s618 + $0x68] sm:$0xff] %v4641
          %4658 = vst [vmem:[%s618 + $0x70] sm:$0xff] %v4642
          %4659 = vst [vmem:[%s618 + $0x78] sm:$0xff] %v4643
        $region119: #{tpu_custom_call.1} parent=75 // pred_fallthru
          _
        %s4660 = sand.u32 %s377, 1
        %s4661 = scalar_lea.sflag [#allocation11], %s4660
        %s4662 = sand.u32 %s377, 1
        %s4663 = smul.addr %s4662, 128
        %s4664 = scalar_lea.vmem [#allocation20], %s4663
        // Predicated region
        $region120: #{tpu_custom_call.1} parent=75 // pred_check
          %p4665 = pneg %p387
        $region121: #{tpu_custom_call.1} parent=75 // pred_check_branch
          %4667 = sbr.rel (%p4665) target = $region123
        $region122: #{tpu_custom_call.1} parent=75 // pred_region
          %s4668 = smul.u32 16, %s42
          %s4670 = ssub.s32 2048, 2048
          %4671 = vsyncadd %s4661, %s4670
          %s4672 = smul.addr %s41, 32
          %s4673 = sadd.s32 %s4668, %s4672
          %s4674 = smul.addr %s4673, 128
          %s4675 = scalar_lea.hbm %s14, %s4674
          %s4676 = sshll.u32 %s4664, 4
          %s4677 = int_to_ptr.vmem [resolvable:$true] %s4676
          %4682 = dma.vmem_to_hbm [thread:$0]  %s4677, 2048, %s4675, %s4661, 128, 128, 8
        $region123: #{tpu_custom_call.1} parent=75 // pred_fallthru
          _
      $region76: #{tpu_custom_call.1} parent=5 // pred_fallthru
        _
      %p4683 = scmp.le.s32.totalorder 2, %s31
      // Predicated region
      $region124: #{tpu_custom_call.1} parent=5 // pred_check
        %p4684 = pneg %p4683
      $region125: #{tpu_custom_call.1} parent=5 // pred_check_branch
        %4686 = sbr.rel (%p4684) target = $region127
      $region126: #{tpu_custom_call.1} parent=5 // pred_region
        %s4687 = ssub.s32 %s31, 2
        // Predicated region
        $region128: #{tpu_custom_call.1} parent=126 // pred_check
          %p4688 = pneg %p393
        $region129: #{tpu_custom_call.1} parent=126 // pred_check_branch
          %4690 = sbr.rel (%p4688) target = $region131
        $region130: #{tpu_custom_call.1} parent=126 // pred_region
          %s4691 = sand.u32 %s378, 1
          %s4692 = scalar_lea.sflag [#allocation11], %s4691
          %s4693 = sand.u32 %s378, 1
          %s4694 = smul.addr %s4693, 128
          %s4695 = scalar_lea.vmem [#allocation20], %s4694
          %4696 = dma.done %s4692, 2048
        $region131: #{tpu_custom_call.1} parent=126 // pred_fallthru
          _
      $region127: #{tpu_custom_call.1} parent=5 // pred_fallthru
        _
    $region6: #{tpu_custom_call.1} parent=1 // loop_footer
      %s35 = sadd.s32 1, %s31
    $region7: #{tpu_custom_call.1} parent=1 // loop_footer_branch
      %30 = sbr.rel target = $region3
    $region8: #{tpu_custom_call.1} parent=1 // loop_exit
      _
    %4697 = vsyncpa [#allocation10], 1
    %s4698 = scalar_lea.sflag [#allocation10], 1
    %4699 = vsyncpa %s4698, 1
    %4700 = vsyncpa [#allocation13], 1
    %s4701 = scalar_lea.sflag [#allocation13], 1
    %4702 = vsyncpa %s4701, 1
    %4703 = vsyncpa [#allocation16], 1
    %4704 = vsyncpa [#allocation19], 1
    %4705 = vsyncpa [#allocation11], 1
    %s4706 = scalar_lea.sflag [#allocation11], 1
    %4707 = vsyncpa %s4706, 1

</llo_original>
